<compile_context>
chip_gen: v7x
topology: tpu7x:2x2x1
jax: 0.10.0
libtpu: 0.0.40
codegen_flags: <defaults>
</compile_context>

<pallas_src>
import jax
import jax.numpy as jnp
import numpy as np
from jax import lax
from jax.experimental import pallas as pl

HIDDEN = 128


def _round_up(n, m):
    return ((n + m - 1) // m) * m


def _reorder_gates(w):
    """Permute the last (4H) axis from PyTorch [i|f|g|o] to [i|f|o|g]."""
    h4 = w.shape[-1]
    h = h4 // 4
    return jnp.concatenate(
        [w[..., : 2 * h], w[..., 3 * h : 4 * h], w[..., 2 * h : 3 * h]], axis=-1
    )


# ----------------------------------------------------------------------------
# Fused Pallas kernel: wavefront L-layer LSTM + linear head
# ----------------------------------------------------------------------------
def _make_fused_kernel(T, Bp, Dp, H, L, Ap):
    """Build the fused kernel for static (T, Bp, Dp, H, L, Ap).

    Ref order: x, wih0, wrec, bias, wmu, bmu, mu_out
      x    : (T, Bp, Dp)   time-major padded input
      wih0 : (Dp, 4H)      layer-0 input projection (gate order [i|f|o|g])
      wrec : (L*H, L*4H)   block matrix: diag W_hh_l^T, superdiag W_ih_{l+1}^T
      bias : (L, 4H)       combined b_ih+b_hh per layer (gate order [i|f|o|g])
      wmu  : (H, Ap), bmu : (1, Ap)
    """
    G = 4 * H

    def kernel(x_ref, wih0_ref, wrec_ref, bias_ref, wmu_ref, bmu_ref, mu_out):
        # Hoisted layer-0 input projection: one big matmul, b0 folded in.
        x_flat = x_ref[...].reshape(T * Bp, Dp)
        gates_ih0 = (
            jnp.dot(x_flat, wih0_ref[...], preferred_element_type=jnp.float32)
            + bias_ref[0:1, :]
        ).reshape(T, Bp, G)

        wrec = wrec_ref[...]  # (L*H, L*4H), stays VMEM-resident

        h = [jnp.zeros((Bp, H), jnp.float32) for _ in range(L)]
        c = [jnp.zeros((Bp, H), jnp.float32) for _ in range(L)]

        def lstm_cell(g, c_prev):
            # Gate order [i | f | o | g]: one contiguous sigmoid pass + one tanh.
            sig = jax.nn.sigmoid(g[:, 0 : 3 * H])
            i_g = sig[:, 0:H]
            f_g = sig[:, H : 2 * H]
            o_g = sig[:, 2 * H : 3 * H]
            g_g = jnp.tanh(g[:, 3 * H : 4 * H])
            c_new = f_g * c_prev + i_g * g_g
            h_new = o_g * jnp.tanh(c_new)
            return h_new, c_new

        # Wavefront (diagonal) schedule over T + L - 1 steps (Python-unrolled).
        for s in range(T + L - 1):
            if s == 0:
                # All recurrent carries are zero: gates0 = gates_ih0[0] exactly.
                h[0], c[0] = lstm_cell(gates_ih0[0], c[0])
                continue

            lhs = jnp.concatenate(h, axis=1) if L > 1 else h[0]  # (Bp, L*H)
            fused = jnp.dot(lhs, wrec, preferred_element_type=jnp.float32)

            new_h = list(h)
            new_c = list(c)
            for l in range(L):
                t = s - l
                if not (0 <= t < T):
                    continue  # layer l not active at this wavefront step
                g = fused[:, l * G : (l + 1) * G]
                if l == 0:
                    g = g + gates_ih0[t]          # includes b0 already
                else:
                    g = g + bias_ref[l : l + 1, :]
                new_h[l], new_c[l] = lstm_cell(g, c[l])
            h, c = new_h, new_c

        # Head: mu = h_last @ W_mu^T + b_mu  (lane-dense (Bp, Ap) store).
        mu_out[...] = (
            jnp.dot(h[L - 1], wmu_ref[...], preferred_element_type=jnp.float32)
            + bmu_ref[...]
        )

    return kernel


def _fused_call(x, wih0, wrec, bias, wmu, bmu):
    """x: (T, Bp, Dp) f32; packed weights; returns padded mu (Bp, Ap)."""
    T, Bp, Dp = x.shape
    L = bias.shape[0]
    H = wmu.shape[0]
    Ap = wmu.shape[1]

    kernel = _make_fused_kernel(T, Bp, Dp, H, L, Ap)

    def full(shape):
        return pl.BlockSpec(shape, lambda: (0,) * len(shape))

    return pl.pallas_call(
        kernel,
        out_shape=jax.ShapeDtypeStruct((Bp, Ap), jnp.float32),
        in_specs=[
            full(x.shape),
            full(wih0.shape),
            full(wrec.shape),
            full(bias.shape),
            full(wmu.shape),
            full(bmu.shape),
        ],
        out_specs=full((Bp, Ap)),
    )(x, wih0, wrec, bias, wmu, bmu)


# ----------------------------------------------------------------------------
# Parameters (PyTorch-layout source of truth) + one-time kernel packing
# ----------------------------------------------------------------------------
def init_params(key, layer_num, state_dim, action_dim, hidden=HIDDEN):
    """Deterministic parameter init mirroring the module's shapes (unpadded)."""
    params = {"lstm": []}
    bound = 1.0 / np.sqrt(hidden)
    for layer in range(layer_num):
        din = state_dim if layer == 0 else hidden
        key, k1, k2, k3, k4 = jax.random.split(key, 5)
        w_ih = jax.random.uniform(k1, (4 * hidden, din), jnp.float32, -bound, bound)
        w_hh = jax.random.uniform(k2, (4 * hidden, hidden), jnp.float32, -bound, bound)
        b_ih = jax.random.uniform(k3, (4 * hidden,), jnp.float32, -bound, bound)
        b_hh = jax.random.uniform(k4, (4 * hidden,), jnp.float32, -bound, bound)
        params["lstm"].append(
            {
                "wih_t": w_ih.T,                    # (Din, 4H), gates [i|f|g|o]
                "whh_t": w_hh.T,                    # (H, 4H)
                "b": (b_ih + b_hh).reshape(1, -1),  # (1, 4H)
            }
        )
    key, k5, k6 = jax.random.split(key, 3)
    lb = 1.0 / np.sqrt(hidden)
    w_mu = jax.random.uniform(k5, (action_dim, hidden), jnp.float32, -lb, lb)
    b_mu = jax.random.uniform(k6, (action_dim,), jnp.float32, -lb, lb)
    params["wmu_t"] = w_mu.T                        # (H, A)
    params["bmu"] = b_mu.reshape(1, -1)             # (1, A)
    # nn.Parameter(zeros(A, 1)).view(1, -1) -> (1, A)
    params["sigma"] = jnp.zeros((1, action_dim), jnp.float32)
    return params


def prepare_packed_params(params, hidden=HIDDEN):
    """One-time gate reorder + pad + pack of parameters for the fused kernel."""
    lstm = params["lstm"]
    L = len(lstm)
    H = hidden
    G = 4 * H
    A = params["wmu_t"].shape[1]
    din0 = lstm[0]["wih_t"].shape[0]
    Dp = _round_up(din0, 128)
    Ap = _round_up(A, 128)

    wih_t = [_reorder_gates(lp["wih_t"]) for lp in lstm]
    whh_t = [_reorder_gates(lp["whh_t"]) for lp in lstm]
    bias = jnp.concatenate([_reorder_gates(lp["b"]) for lp in lstm], axis=0)  # (L,4H)

    wih0 = jnp.pad(wih_t[0], ((0, Dp - din0), (0, 0)))                        # (Dp,4H)

    # Fused recurrence block matrix (L*H, L*4H):
    #   block (l, l)   = W_hh_l^T        (recurrent)
    #   block (l, l+1) = W_ih_{l+1}^T    (input to next layer)
    wrec = jnp.zeros((L * H, L * G), jnp.float32)
    for l in range(L):
        wrec = wrec.at[l * H : (l + 1) * H, l * G : (l + 1) * G].set(whh_t[l])
        if l + 1 < L:
            wrec = wrec.at[l * H : (l + 1) * H, (l + 1) * G : (l + 2) * G].set(
                wih_t[l + 1]
            )

    wmu = jnp.pad(params["wmu_t"], ((0, 0), (0, Ap - A)))   # (H, Ap)
    bmu = jnp.pad(params["bmu"], ((0, 0), (0, Ap - A)))     # (1, Ap)
    sig_exp = jnp.exp(params["sigma"])                      # (1, A) precomputed exp

    return {
        "wih0": wih0,
        "wrec": wrec,
        "bias": bias,
        "wmu": wmu,
        "bmu": bmu,
        "sig_exp": sig_exp,
    }


# ----------------------------------------------------------------------------
# Forward
# ----------------------------------------------------------------------------
@jax.jit
def recurrent_actor_prob_forward(s, packed):
    """s: (B, D) or (B, T, D) float32. Returns ((mu, sigma), None)."""
    s = s.astype(jnp.float32)
    if s.ndim == 2:
        s = s[:, None, :]
    B, T, D = s.shape

    wih0 = packed["wih0"]
    Dp = wih0.shape[0]
    A = packed["sig_exp"].shape[1]

    Bp = _round_up(B, 8)      # f32 sublane multiple

    # Time-major, padded input (only per-call data prep; weights pre-packed).
    x = jnp.transpose(s, (1, 0, 2))                             # (T, B, D)
    x = jnp.pad(x, ((0, 0), (0, Bp - B), (0, Dp - D)))          # (T, Bp, Dp)

    mu_p = _fused_call(x, wih0, packed["wrec"], packed["bias"],
                       packed["wmu"], packed["bmu"])
    mu = mu_p[:B, :A]
    sigma = jnp.broadcast_to(packed["sig_exp"], (B, A))
    return (mu, sigma), None


# ----------------------------------------------------------------------------
# Pure-JAX reference (correctness sanity check, PyTorch gate order / layout)
# ----------------------------------------------------------------------------
def _reference_forward(s, params):
    s = s.astype(jnp.float32)
    if s.ndim == 2:
        s = s[:, None, :]
    B, T, D = s.shape
    x = jnp.transpose(s, (1, 0, 2))
    H = HIDDEN
    for lp in params["lstm"]:
        def step(carry, x_t, lp=lp):
            h, c = carry
            gates = x_t @ lp["wih_t"] + h @ lp["whh_t"] + lp["b"]
            i = jax.nn.sigmoid(gates[:, 0:H])
            f = jax.nn.sigmoid(gates[:, H:2 * H])
            g = jnp.tanh(gates[:, 2 * H:3 * H])
            o = jax.nn.sigmoid(gates[:, 3 * H:4 * H])
            c = f * c + i * g
            h = o * jnp.tanh(c)
            return (h, c), h
        init = (jnp.zeros((B, H), jnp.float32), jnp.zeros((B, H), jnp.float32))
        _, x = lax.scan(step, init, x)
    h_last = x[-1]
    mu = h_last @ params["wmu_t"] + params["bmu"]
    sigma = jnp.exp(params["sigma"] + jnp.zeros_like(mu))
    return (mu, sigma), None


if __name__ == "__main__":
    # module config: layer_num=2, state_shape=(16,), action_shape=(4,), max_action=1.0
    layer_num = 2
    state_dim = 16
    action_dim = 4
    batch, seq = 2, 8

    key = jax.random.PRNGKey(0)
    key, pk, sk = jax.random.split(key, 3)
    params = init_params(pk, layer_num, state_dim, action_dim)
    packed = prepare_packed_params(params)
    s = jax.random.normal(sk, (batch, seq, state_dim), jnp.float32)

    (mu, sigma), state = recurrent_actor_prob_forward(s, packed)
    mu = jax.block_until_ready(mu)
    sigma = jax.block_until_ready(sigma)

    (mu_ref, sigma_ref), _ = _reference_forward(s, params)
    np.testing.assert_allclose(np.asarray(mu), np.asarray(mu_ref), rtol=1e-5, atol=1e-5)
    np.testing.assert_allclose(np.asarray(sigma), np.asarray(sigma_ref), rtol=1e-5, atol=1e-5)

    # Also exercise the (B, D) input path (length-1 sequence).
    s2 = jax.random.normal(key, (batch, state_dim), jnp.float32)
    (mu2, sigma2), _ = recurrent_actor_prob_forward(s2, packed)
    mu2 = jax.block_until_ready(mu2)
    (mu2_ref, sigma2_ref), _ = _reference_forward(s2, params)
    np.testing.assert_allclose(np.asarray(mu2), np.asarray(mu2_ref), rtol=1e-5, atol=1e-5)
    np.testing.assert_allclose(np.asarray(sigma2), np.asarray(sigma2_ref), rtol=1e-5, atol=1e-5)

    assert mu.shape == (batch, action_dim) and sigma.shape == (batch, action_dim)
    print("KERNEL_OK")
</pallas_src>

<mosaic_0001>
module attributes {stable_mosaic.version = 11 : i64} {
  func.func @kernel(%arg0: memref<8x8x128xf32, #tpu.memory_space<vmem>>, %arg1: memref<128x512xf32, #tpu.memory_space<vmem>>, %arg2: memref<256x1024xf32, #tpu.memory_space<vmem>>, %arg3: memref<2x512xf32, #tpu.memory_space<vmem>>, %arg4: memref<128x128xf32, #tpu.memory_space<vmem>>, %arg5: memref<1x128xf32, #tpu.memory_space<vmem>>, %arg6: memref<8x128xf32, #tpu.memory_space<vmem>>) attributes {dimension_semantics = [], scalar_prefetch = 0 : i64, scratch_operands = 0 : i64, tpu.core_type = #tpu.core_type<tc>} {
    %c0 = arith.constant 0 : index
    %c0_0 = arith.constant 0 : index
    %c0_1 = arith.constant 0 : index
    %0 = vector.load %arg0[%c0, %c0_0, %c0_1] : memref<8x8x128xf32, #tpu.memory_space<vmem>>, vector<8x8x128xf32>
    %1 = vector.shape_cast %0 : vector<8x8x128xf32> to vector<64x128xf32>
    %c0_2 = arith.constant 0 : index
    %c0_3 = arith.constant 0 : index
    %2 = vector.load %arg1[%c0_2, %c0_3] : memref<128x512xf32, #tpu.memory_space<vmem>>, vector<128x512xf32>
    %cst = arith.constant dense<0.000000e+00> : vector<64x512xf32>
    %3 = tpu.matmul %1, %2, %cst {dimension_numbers = #tpu.dot_dimension_numbers<[1], [0], [0], [1], [0, 0, 1, 1], [], []>} : vector<64x128xf32>, vector<128x512xf32>, vector<64x512xf32> -> vector<64x512xf32>
    %c0_4 = arith.constant 0 : index
    %c0_5 = arith.constant 0 : index
    %4 = vector.load %arg3[%c0_4, %c0_5] : memref<2x512xf32, #tpu.memory_space<vmem>>, vector<1x512xf32>
    %5 = vector.broadcast %4 : vector<1x512xf32> to vector<64x512xf32>
    %6 = arith.addf %3, %5 : vector<64x512xf32>
    %7 = vector.shape_cast %6 : vector<64x512xf32> to vector<8x8x512xf32>
    %c0_6 = arith.constant 0 : index
    %c0_7 = arith.constant 0 : index
    %8 = vector.load %arg2[%c0_6, %c0_7] : memref<256x1024xf32, #tpu.memory_space<vmem>>, vector<256x1024xf32>
    %cst_8 = arith.constant 0.000000e+00 : f32
    %9 = vector.broadcast %cst_8 : f32 to vector<8x128xf32>
    %cst_9 = arith.constant 0.000000e+00 : f32
    %10 = vector.broadcast %cst_9 : f32 to vector<8x128xf32>
    %cst_10 = arith.constant 0.000000e+00 : f32
    %11 = vector.broadcast %cst_10 : f32 to vector<8x128xf32>
    %12 = vector.extract_strided_slice %7 {offsets = [0, 0, 0], sizes = [1, 8, 512], strides = [1, 1, 1]} : vector<8x8x512xf32> to vector<1x8x512xf32>
    %13 = vector.shape_cast %12 : vector<1x8x512xf32> to vector<8x512xf32>
    %14 = vector.extract_strided_slice %13 {offsets = [0, 0], sizes = [8, 384], strides = [1, 1]} : vector<8x512xf32> to vector<8x384xf32>
    %15 = arith.negf %14 : vector<8x384xf32>
    %16 = math.exp %15 : vector<8x384xf32>
    %cst_11 = arith.constant 1.000000e+00 : f32
    %17 = vector.broadcast %cst_11 : f32 to vector<8x384xf32>
    %18 = arith.addf %17, %16 : vector<8x384xf32>
    %19 = arith.divf %17, %18 : vector<8x384xf32>
    %20 = vector.extract_strided_slice %19 {offsets = [0, 0], sizes = [8, 128], strides = [1, 1]} : vector<8x384xf32> to vector<8x128xf32>
    %21 = vector.extract_strided_slice %19 {offsets = [0, 128], sizes = [8, 128], strides = [1, 1]} : vector<8x384xf32> to vector<8x128xf32>
    %22 = vector.extract_strided_slice %19 {offsets = [0, 256], sizes = [8, 128], strides = [1, 1]} : vector<8x384xf32> to vector<8x128xf32>
    %23 = vector.extract_strided_slice %13 {offsets = [0, 384], sizes = [8, 128], strides = [1, 1]} : vector<8x512xf32> to vector<8x128xf32>
    %24 = math.tanh %23 : vector<8x128xf32>
    %25 = arith.mulf %21, %10 : vector<8x128xf32>
    %26 = arith.mulf %20, %24 : vector<8x128xf32>
    %27 = arith.addf %25, %26 : vector<8x128xf32>
    %28 = math.tanh %27 : vector<8x128xf32>
    %29 = arith.mulf %22, %28 : vector<8x128xf32>
    %30 = tpu.concatenate %29, %9 in 1 : vector<8x128xf32>, vector<8x128xf32> -> vector<8x256xf32>
    %cst_12 = arith.constant dense<0.000000e+00> : vector<8x1024xf32>
    %31 = tpu.matmul %30, %8, %cst_12 {dimension_numbers = #tpu.dot_dimension_numbers<[1], [0], [0], [1], [0, 0, 1, 1], [], []>} : vector<8x256xf32>, vector<256x1024xf32>, vector<8x1024xf32> -> vector<8x1024xf32>
    %32 = vector.extract_strided_slice %31 {offsets = [0, 0], sizes = [8, 512], strides = [1, 1]} : vector<8x1024xf32> to vector<8x512xf32>
    %33 = vector.extract_strided_slice %7 {offsets = [1, 0, 0], sizes = [1, 8, 512], strides = [1, 1, 1]} : vector<8x8x512xf32> to vector<1x8x512xf32>
    %34 = vector.shape_cast %33 : vector<1x8x512xf32> to vector<8x512xf32>
    %35 = arith.addf %32, %34 : vector<8x512xf32>
    %36 = vector.extract_strided_slice %35 {offsets = [0, 0], sizes = [8, 384], strides = [1, 1]} : vector<8x512xf32> to vector<8x384xf32>
    %37 = arith.negf %36 : vector<8x384xf32>
    %38 = math.exp %37 : vector<8x384xf32>
    %cst_13 = arith.constant 1.000000e+00 : f32
    %39 = vector.broadcast %cst_13 : f32 to vector<8x384xf32>
    %40 = arith.addf %39, %38 : vector<8x384xf32>
    %41 = arith.divf %39, %40 : vector<8x384xf32>
    %42 = vector.extract_strided_slice %41 {offsets = [0, 0], sizes = [8, 128], strides = [1, 1]} : vector<8x384xf32> to vector<8x128xf32>
    %43 = vector.extract_strided_slice %41 {offsets = [0, 128], sizes = [8, 128], strides = [1, 1]} : vector<8x384xf32> to vector<8x128xf32>
    %44 = vector.extract_strided_slice %41 {offsets = [0, 256], sizes = [8, 128], strides = [1, 1]} : vector<8x384xf32> to vector<8x128xf32>
    %45 = vector.extract_strided_slice %35 {offsets = [0, 384], sizes = [8, 128], strides = [1, 1]} : vector<8x512xf32> to vector<8x128xf32>
    %46 = math.tanh %45 : vector<8x128xf32>
    %47 = arith.mulf %43, %27 : vector<8x128xf32>
    %48 = arith.mulf %42, %46 : vector<8x128xf32>
    %49 = arith.addf %47, %48 : vector<8x128xf32>
    %50 = math.tanh %49 : vector<8x128xf32>
    %51 = arith.mulf %44, %50 : vector<8x128xf32>
    %52 = vector.extract_strided_slice %31 {offsets = [0, 512], sizes = [8, 512], strides = [1, 1]} : vector<8x1024xf32> to vector<8x512xf32>
    %c1 = arith.constant 1 : index
    %c0_14 = arith.constant 0 : index
    %53 = vector.load %arg3[%c1, %c0_14] : memref<2x512xf32, #tpu.memory_space<vmem>>, vector<1x512xf32>
    %54 = vector.broadcast %53 : vector<1x512xf32> to vector<8x512xf32>
    %55 = arith.addf %52, %54 : vector<8x512xf32>
    %56 = vector.extract_strided_slice %55 {offsets = [0, 0], sizes = [8, 384], strides = [1, 1]} : vector<8x512xf32> to vector<8x384xf32>
    %57 = arith.negf %56 : vector<8x384xf32>
    %58 = math.exp %57 : vector<8x384xf32>
    %cst_15 = arith.constant 1.000000e+00 : f32
    %59 = vector.broadcast %cst_15 : f32 to vector<8x384xf32>
    %60 = arith.addf %59, %58 : vector<8x384xf32>
    %61 = arith.divf %59, %60 : vector<8x384xf32>
    %62 = vector.extract_strided_slice %61 {offsets = [0, 0], sizes = [8, 128], strides = [1, 1]} : vector<8x384xf32> to vector<8x128xf32>
    %63 = vector.extract_strided_slice %61 {offsets = [0, 128], sizes = [8, 128], strides = [1, 1]} : vector<8x384xf32> to vector<8x128xf32>
    %64 = vector.extract_strided_slice %61 {offsets = [0, 256], sizes = [8, 128], strides = [1, 1]} : vector<8x384xf32> to vector<8x128xf32>
    %65 = vector.extract_strided_slice %55 {offsets = [0, 384], sizes = [8, 128], strides = [1, 1]} : vector<8x512xf32> to vector<8x128xf32>
    %66 = math.tanh %65 : vector<8x128xf32>
    %67 = arith.mulf %63, %11 : vector<8x128xf32>
    %68 = arith.mulf %62, %66 : vector<8x128xf32>
    %69 = arith.addf %67, %68 : vector<8x128xf32>
    %70 = math.tanh %69 : vector<8x128xf32>
    %71 = arith.mulf %64, %70 : vector<8x128xf32>
    %72 = tpu.concatenate %51, %71 in 1 : vector<8x128xf32>, vector<8x128xf32> -> vector<8x256xf32>
    %cst_16 = arith.constant dense<0.000000e+00> : vector<8x1024xf32>
    %73 = tpu.matmul %72, %8, %cst_16 {dimension_numbers = #tpu.dot_dimension_numbers<[1], [0], [0], [1], [0, 0, 1, 1], [], []>} : vector<8x256xf32>, vector<256x1024xf32>, vector<8x1024xf32> -> vector<8x1024xf32>
    %74 = vector.extract_strided_slice %73 {offsets = [0, 0], sizes = [8, 512], strides = [1, 1]} : vector<8x1024xf32> to vector<8x512xf32>
    %75 = vector.extract_strided_slice %7 {offsets = [2, 0, 0], sizes = [1, 8, 512], strides = [1, 1, 1]} : vector<8x8x512xf32> to vector<1x8x512xf32>
    %76 = vector.shape_cast %75 : vector<1x8x512xf32> to vector<8x512xf32>
    %77 = arith.addf %74, %76 : vector<8x512xf32>
    %78 = vector.extract_strided_slice %77 {offsets = [0, 0], sizes = [8, 384], strides = [1, 1]} : vector<8x512xf32> to vector<8x384xf32>
    %79 = arith.negf %78 : vector<8x384xf32>
    %80 = math.exp %79 : vector<8x384xf32>
    %cst_17 = arith.constant 1.000000e+00 : f32
    %81 = vector.broadcast %cst_17 : f32 to vector<8x384xf32>
    %82 = arith.addf %81, %80 : vector<8x384xf32>
    %83 = arith.divf %81, %82 : vector<8x384xf32>
    %84 = vector.extract_strided_slice %83 {offsets = [0, 0], sizes = [8, 128], strides = [1, 1]} : vector<8x384xf32> to vector<8x128xf32>
    %85 = vector.extract_strided_slice %83 {offsets = [0, 128], sizes = [8, 128], strides = [1, 1]} : vector<8x384xf32> to vector<8x128xf32>
    %86 = vector.extract_strided_slice %83 {offsets = [0, 256], sizes = [8, 128], strides = [1, 1]} : vector<8x384xf32> to vector<8x128xf32>
    %87 = vector.extract_strided_slice %77 {offsets = [0, 384], sizes = [8, 128], strides = [1, 1]} : vector<8x512xf32> to vector<8x128xf32>
    %88 = math.tanh %87 : vector<8x128xf32>
    %89 = arith.mulf %85, %49 : vector<8x128xf32>
    %90 = arith.mulf %84, %88 : vector<8x128xf32>
    %91 = arith.addf %89, %90 : vector<8x128xf32>
    %92 = math.tanh %91 : vector<8x128xf32>
    %93 = arith.mulf %86, %92 : vector<8x128xf32>
    %94 = vector.extract_strided_slice %73 {offsets = [0, 512], sizes = [8, 512], strides = [1, 1]} : vector<8x1024xf32> to vector<8x512xf32>
    %c1_18 = arith.constant 1 : index
    %c0_19 = arith.constant 0 : index
    %95 = vector.load %arg3[%c1_18, %c0_19] : memref<2x512xf32, #tpu.memory_space<vmem>>, vector<1x512xf32>
    %96 = vector.broadcast %95 : vector<1x512xf32> to vector<8x512xf32>
    %97 = arith.addf %94, %96 : vector<8x512xf32>
    %98 = vector.extract_strided_slice %97 {offsets = [0, 0], sizes = [8, 384], strides = [1, 1]} : vector<8x512xf32> to vector<8x384xf32>
    %99 = arith.negf %98 : vector<8x384xf32>
    %100 = math.exp %99 : vector<8x384xf32>
    %cst_20 = arith.constant 1.000000e+00 : f32
    %101 = vector.broadcast %cst_20 : f32 to vector<8x384xf32>
    %102 = arith.addf %101, %100 : vector<8x384xf32>
    %103 = arith.divf %101, %102 : vector<8x384xf32>
    %104 = vector.extract_strided_slice %103 {offsets = [0, 0], sizes = [8, 128], strides = [1, 1]} : vector<8x384xf32> to vector<8x128xf32>
    %105 = vector.extract_strided_slice %103 {offsets = [0, 128], sizes = [8, 128], strides = [1, 1]} : vector<8x384xf32> to vector<8x128xf32>
    %106 = vector.extract_strided_slice %103 {offsets = [0, 256], sizes = [8, 128], strides = [1, 1]} : vector<8x384xf32> to vector<8x128xf32>
    %107 = vector.extract_strided_slice %97 {offsets = [0, 384], sizes = [8, 128], strides = [1, 1]} : vector<8x512xf32> to vector<8x128xf32>
    %108 = math.tanh %107 : vector<8x128xf32>
    %109 = arith.mulf %105, %69 : vector<8x128xf32>
    %110 = arith.mulf %104, %108 : vector<8x128xf32>
    %111 = arith.addf %109, %110 : vector<8x128xf32>
    %112 = math.tanh %111 : vector<8x128xf32>
    %113 = arith.mulf %106, %112 : vector<8x128xf32>
    %114 = tpu.concatenate %93, %113 in 1 : vector<8x128xf32>, vector<8x128xf32> -> vector<8x256xf32>
    %cst_21 = arith.constant dense<0.000000e+00> : vector<8x1024xf32>
    %115 = tpu.matmul %114, %8, %cst_21 {dimension_numbers = #tpu.dot_dimension_numbers<[1], [0], [0], [1], [0, 0, 1, 1], [], []>} : vector<8x256xf32>, vector<256x1024xf32>, vector<8x1024xf32> -> vector<8x1024xf32>
    %116 = vector.extract_strided_slice %115 {offsets = [0, 0], sizes = [8, 512], strides = [1, 1]} : vector<8x1024xf32> to vector<8x512xf32>
    %117 = vector.extract_strided_slice %7 {offsets = [3, 0, 0], sizes = [1, 8, 512], strides = [1, 1, 1]} : vector<8x8x512xf32> to vector<1x8x512xf32>
    %118 = vector.shape_cast %117 : vector<1x8x512xf32> to vector<8x512xf32>
    %119 = arith.addf %116, %118 : vector<8x512xf32>
    %120 = vector.extract_strided_slice %119 {offsets = [0, 0], sizes = [8, 384], strides = [1, 1]} : vector<8x512xf32> to vector<8x384xf32>
    %121 = arith.negf %120 : vector<8x384xf32>
    %122 = math.exp %121 : vector<8x384xf32>
    %cst_22 = arith.constant 1.000000e+00 : f32
    %123 = vector.broadcast %cst_22 : f32 to vector<8x384xf32>
    %124 = arith.addf %123, %122 : vector<8x384xf32>
    %125 = arith.divf %123, %124 : vector<8x384xf32>
    %126 = vector.extract_strided_slice %125 {offsets = [0, 0], sizes = [8, 128], strides = [1, 1]} : vector<8x384xf32> to vector<8x128xf32>
    %127 = vector.extract_strided_slice %125 {offsets = [0, 128], sizes = [8, 128], strides = [1, 1]} : vector<8x384xf32> to vector<8x128xf32>
    %128 = vector.extract_strided_slice %125 {offsets = [0, 256], sizes = [8, 128], strides = [1, 1]} : vector<8x384xf32> to vector<8x128xf32>
    %129 = vector.extract_strided_slice %119 {offsets = [0, 384], sizes = [8, 128], strides = [1, 1]} : vector<8x512xf32> to vector<8x128xf32>
    %130 = math.tanh %129 : vector<8x128xf32>
    %131 = arith.mulf %127, %91 : vector<8x128xf32>
    %132 = arith.mulf %126, %130 : vector<8x128xf32>
    %133 = arith.addf %131, %132 : vector<8x128xf32>
    %134 = math.tanh %133 : vector<8x128xf32>
    %135 = arith.mulf %128, %134 : vector<8x128xf32>
    %136 = vector.extract_strided_slice %115 {offsets = [0, 512], sizes = [8, 512], strides = [1, 1]} : vector<8x1024xf32> to vector<8x512xf32>
    %c1_23 = arith.constant 1 : index
    %c0_24 = arith.constant 0 : index
    %137 = vector.load %arg3[%c1_23, %c0_24] : memref<2x512xf32, #tpu.memory_space<vmem>>, vector<1x512xf32>
    %138 = vector.broadcast %137 : vector<1x512xf32> to vector<8x512xf32>
    %139 = arith.addf %136, %138 : vector<8x512xf32>
    %140 = vector.extract_strided_slice %139 {offsets = [0, 0], sizes = [8, 384], strides = [1, 1]} : vector<8x512xf32> to vector<8x384xf32>
    %141 = arith.negf %140 : vector<8x384xf32>
    %142 = math.exp %141 : vector<8x384xf32>
    %cst_25 = arith.constant 1.000000e+00 : f32
    %143 = vector.broadcast %cst_25 : f32 to vector<8x384xf32>
    %144 = arith.addf %143, %142 : vector<8x384xf32>
    %145 = arith.divf %143, %144 : vector<8x384xf32>
    %146 = vector.extract_strided_slice %145 {offsets = [0, 0], sizes = [8, 128], strides = [1, 1]} : vector<8x384xf32> to vector<8x128xf32>
    %147 = vector.extract_strided_slice %145 {offsets = [0, 128], sizes = [8, 128], strides = [1, 1]} : vector<8x384xf32> to vector<8x128xf32>
    %148 = vector.extract_strided_slice %145 {offsets = [0, 256], sizes = [8, 128], strides = [1, 1]} : vector<8x384xf32> to vector<8x128xf32>
    %149 = vector.extract_strided_slice %139 {offsets = [0, 384], sizes = [8, 128], strides = [1, 1]} : vector<8x512xf32> to vector<8x128xf32>
    %150 = math.tanh %149 : vector<8x128xf32>
    %151 = arith.mulf %147, %111 : vector<8x128xf32>
    %152 = arith.mulf %146, %150 : vector<8x128xf32>
    %153 = arith.addf %151, %152 : vector<8x128xf32>
    %154 = math.tanh %153 : vector<8x128xf32>
    %155 = arith.mulf %148, %154 : vector<8x128xf32>
    %156 = tpu.concatenate %135, %155 in 1 : vector<8x128xf32>, vector<8x128xf32> -> vector<8x256xf32>
    %cst_26 = arith.constant dense<0.000000e+00> : vector<8x1024xf32>
    %157 = tpu.matmul %156, %8, %cst_26 {dimension_numbers = #tpu.dot_dimension_numbers<[1], [0], [0], [1], [0, 0, 1, 1], [], []>} : vector<8x256xf32>, vector<256x1024xf32>, vector<8x1024xf32> -> vector<8x1024xf32>
    %158 = vector.extract_strided_slice %157 {offsets = [0, 0], sizes = [8, 512], strides = [1, 1]} : vector<8x1024xf32> to vector<8x512xf32>
    %159 = vector.extract_strided_slice %7 {offsets = [4, 0, 0], sizes = [1, 8, 512], strides = [1, 1, 1]} : vector<8x8x512xf32> to vector<1x8x512xf32>
    %160 = vector.shape_cast %159 : vector<1x8x512xf32> to vector<8x512xf32>
    %161 = arith.addf %158, %160 : vector<8x512xf32>
    %162 = vector.extract_strided_slice %161 {offsets = [0, 0], sizes = [8, 384], strides = [1, 1]} : vector<8x512xf32> to vector<8x384xf32>
    %163 = arith.negf %162 : vector<8x384xf32>
    %164 = math.exp %163 : vector<8x384xf32>
    %cst_27 = arith.constant 1.000000e+00 : f32
    %165 = vector.broadcast %cst_27 : f32 to vector<8x384xf32>
    %166 = arith.addf %165, %164 : vector<8x384xf32>
    %167 = arith.divf %165, %166 : vector<8x384xf32>
    %168 = vector.extract_strided_slice %167 {offsets = [0, 0], sizes = [8, 128], strides = [1, 1]} : vector<8x384xf32> to vector<8x128xf32>
    %169 = vector.extract_strided_slice %167 {offsets = [0, 128], sizes = [8, 128], strides = [1, 1]} : vector<8x384xf32> to vector<8x128xf32>
    %170 = vector.extract_strided_slice %167 {offsets = [0, 256], sizes = [8, 128], strides = [1, 1]} : vector<8x384xf32> to vector<8x128xf32>
    %171 = vector.extract_strided_slice %161 {offsets = [0, 384], sizes = [8, 128], strides = [1, 1]} : vector<8x512xf32> to vector<8x128xf32>
    %172 = math.tanh %171 : vector<8x128xf32>
    %173 = arith.mulf %169, %133 : vector<8x128xf32>
    %174 = arith.mulf %168, %172 : vector<8x128xf32>
    %175 = arith.addf %173, %174 : vector<8x128xf32>
    %176 = math.tanh %175 : vector<8x128xf32>
    %177 = arith.mulf %170, %176 : vector<8x128xf32>
    %178 = vector.extract_strided_slice %157 {offsets = [0, 512], sizes = [8, 512], strides = [1, 1]} : vector<8x1024xf32> to vector<8x512xf32>
    %c1_28 = arith.constant 1 : index
    %c0_29 = arith.constant 0 : index
    %179 = vector.load %arg3[%c1_28, %c0_29] : memref<2x512xf32, #tpu.memory_space<vmem>>, vector<1x512xf32>
    %180 = vector.broadcast %179 : vector<1x512xf32> to vector<8x512xf32>
    %181 = arith.addf %178, %180 : vector<8x512xf32>
    %182 = vector.extract_strided_slice %181 {offsets = [0, 0], sizes = [8, 384], strides = [1, 1]} : vector<8x512xf32> to vector<8x384xf32>
    %183 = arith.negf %182 : vector<8x384xf32>
    %184 = math.exp %183 : vector<8x384xf32>
    %cst_30 = arith.constant 1.000000e+00 : f32
    %185 = vector.broadcast %cst_30 : f32 to vector<8x384xf32>
    %186 = arith.addf %185, %184 : vector<8x384xf32>
    %187 = arith.divf %185, %186 : vector<8x384xf32>
    %188 = vector.extract_strided_slice %187 {offsets = [0, 0], sizes = [8, 128], strides = [1, 1]} : vector<8x384xf32> to vector<8x128xf32>
    %189 = vector.extract_strided_slice %187 {offsets = [0, 128], sizes = [8, 128], strides = [1, 1]} : vector<8x384xf32> to vector<8x128xf32>
    %190 = vector.extract_strided_slice %187 {offsets = [0, 256], sizes = [8, 128], strides = [1, 1]} : vector<8x384xf32> to vector<8x128xf32>
    %191 = vector.extract_strided_slice %181 {offsets = [0, 384], sizes = [8, 128], strides = [1, 1]} : vector<8x512xf32> to vector<8x128xf32>
    %192 = math.tanh %191 : vector<8x128xf32>
    %193 = arith.mulf %189, %153 : vector<8x128xf32>
    %194 = arith.mulf %188, %192 : vector<8x128xf32>
    %195 = arith.addf %193, %194 : vector<8x128xf32>
    %196 = math.tanh %195 : vector<8x128xf32>
    %197 = arith.mulf %190, %196 : vector<8x128xf32>
    %198 = tpu.concatenate %177, %197 in 1 : vector<8x128xf32>, vector<8x128xf32> -> vector<8x256xf32>
    %cst_31 = arith.constant dense<0.000000e+00> : vector<8x1024xf32>
    %199 = tpu.matmul %198, %8, %cst_31 {dimension_numbers = #tpu.dot_dimension_numbers<[1], [0], [0], [1], [0, 0, 1, 1], [], []>} : vector<8x256xf32>, vector<256x1024xf32>, vector<8x1024xf32> -> vector<8x1024xf32>
    %200 = vector.extract_strided_slice %199 {offsets = [0, 0], sizes = [8, 512], strides = [1, 1]} : vector<8x1024xf32> to vector<8x512xf32>
    %201 = vector.extract_strided_slice %7 {offsets = [5, 0, 0], sizes = [1, 8, 512], strides = [1, 1, 1]} : vector<8x8x512xf32> to vector<1x8x512xf32>
    %202 = vector.shape_cast %201 : vector<1x8x512xf32> to vector<8x512xf32>
    %203 = arith.addf %200, %202 : vector<8x512xf32>
    %204 = vector.extract_strided_slice %203 {offsets = [0, 0], sizes = [8, 384], strides = [1, 1]} : vector<8x512xf32> to vector<8x384xf32>
    %205 = arith.negf %204 : vector<8x384xf32>
    %206 = math.exp %205 : vector<8x384xf32>
    %cst_32 = arith.constant 1.000000e+00 : f32
    %207 = vector.broadcast %cst_32 : f32 to vector<8x384xf32>
    %208 = arith.addf %207, %206 : vector<8x384xf32>
    %209 = arith.divf %207, %208 : vector<8x384xf32>
    %210 = vector.extract_strided_slice %209 {offsets = [0, 0], sizes = [8, 128], strides = [1, 1]} : vector<8x384xf32> to vector<8x128xf32>
    %211 = vector.extract_strided_slice %209 {offsets = [0, 128], sizes = [8, 128], strides = [1, 1]} : vector<8x384xf32> to vector<8x128xf32>
    %212 = vector.extract_strided_slice %209 {offsets = [0, 256], sizes = [8, 128], strides = [1, 1]} : vector<8x384xf32> to vector<8x128xf32>
    %213 = vector.extract_strided_slice %203 {offsets = [0, 384], sizes = [8, 128], strides = [1, 1]} : vector<8x512xf32> to vector<8x128xf32>
    %214 = math.tanh %213 : vector<8x128xf32>
    %215 = arith.mulf %211, %175 : vector<8x128xf32>
    %216 = arith.mulf %210, %214 : vector<8x128xf32>
    %217 = arith.addf %215, %216 : vector<8x128xf32>
    %218 = math.tanh %217 : vector<8x128xf32>
    %219 = arith.mulf %212, %218 : vector<8x128xf32>
    %220 = vector.extract_strided_slice %199 {offsets = [0, 512], sizes = [8, 512], strides = [1, 1]} : vector<8x1024xf32> to vector<8x512xf32>
    %c1_33 = arith.constant 1 : index
    %c0_34 = arith.constant 0 : index
    %221 = vector.load %arg3[%c1_33, %c0_34] : memref<2x512xf32, #tpu.memory_space<vmem>>, vector<1x512xf32>
    %222 = vector.broadcast %221 : vector<1x512xf32> to vector<8x512xf32>
    %223 = arith.addf %220, %222 : vector<8x512xf32>
    %224 = vector.extract_strided_slice %223 {offsets = [0, 0], sizes = [8, 384], strides = [1, 1]} : vector<8x512xf32> to vector<8x384xf32>
    %225 = arith.negf %224 : vector<8x384xf32>
    %226 = math.exp %225 : vector<8x384xf32>
    %cst_35 = arith.constant 1.000000e+00 : f32
    %227 = vector.broadcast %cst_35 : f32 to vector<8x384xf32>
    %228 = arith.addf %227, %226 : vector<8x384xf32>
    %229 = arith.divf %227, %228 : vector<8x384xf32>
    %230 = vector.extract_strided_slice %229 {offsets = [0, 0], sizes = [8, 128], strides = [1, 1]} : vector<8x384xf32> to vector<8x128xf32>
    %231 = vector.extract_strided_slice %229 {offsets = [0, 128], sizes = [8, 128], strides = [1, 1]} : vector<8x384xf32> to vector<8x128xf32>
    %232 = vector.extract_strided_slice %229 {offsets = [0, 256], sizes = [8, 128], strides = [1, 1]} : vector<8x384xf32> to vector<8x128xf32>
    %233 = vector.extract_strided_slice %223 {offsets = [0, 384], sizes = [8, 128], strides = [1, 1]} : vector<8x512xf32> to vector<8x128xf32>
    %234 = math.tanh %233 : vector<8x128xf32>
    %235 = arith.mulf %231, %195 : vector<8x128xf32>
    %236 = arith.mulf %230, %234 : vector<8x128xf32>
    %237 = arith.addf %235, %236 : vector<8x128xf32>
    %238 = math.tanh %237 : vector<8x128xf32>
    %239 = arith.mulf %232, %238 : vector<8x128xf32>
    %240 = tpu.concatenate %219, %239 in 1 : vector<8x128xf32>, vector<8x128xf32> -> vector<8x256xf32>
    %cst_36 = arith.constant dense<0.000000e+00> : vector<8x1024xf32>
    %241 = tpu.matmul %240, %8, %cst_36 {dimension_numbers = #tpu.dot_dimension_numbers<[1], [0], [0], [1], [0, 0, 1, 1], [], []>} : vector<8x256xf32>, vector<256x1024xf32>, vector<8x1024xf32> -> vector<8x1024xf32>
    %242 = vector.extract_strided_slice %241 {offsets = [0, 0], sizes = [8, 512], strides = [1, 1]} : vector<8x1024xf32> to vector<8x512xf32>
    %243 = vector.extract_strided_slice %7 {offsets = [6, 0, 0], sizes = [1, 8, 512], strides = [1, 1, 1]} : vector<8x8x512xf32> to vector<1x8x512xf32>
    %244 = vector.shape_cast %243 : vector<1x8x512xf32> to vector<8x512xf32>
    %245 = arith.addf %242, %244 : vector<8x512xf32>
    %246 = vector.extract_strided_slice %245 {offsets = [0, 0], sizes = [8, 384], strides = [1, 1]} : vector<8x512xf32> to vector<8x384xf32>
    %247 = arith.negf %246 : vector<8x384xf32>
    %248 = math.exp %247 : vector<8x384xf32>
    %cst_37 = arith.constant 1.000000e+00 : f32
    %249 = vector.broadcast %cst_37 : f32 to vector<8x384xf32>
    %250 = arith.addf %249, %248 : vector<8x384xf32>
    %251 = arith.divf %249, %250 : vector<8x384xf32>
    %252 = vector.extract_strided_slice %251 {offsets = [0, 0], sizes = [8, 128], strides = [1, 1]} : vector<8x384xf32> to vector<8x128xf32>
    %253 = vector.extract_strided_slice %251 {offsets = [0, 128], sizes = [8, 128], strides = [1, 1]} : vector<8x384xf32> to vector<8x128xf32>
    %254 = vector.extract_strided_slice %251 {offsets = [0, 256], sizes = [8, 128], strides = [1, 1]} : vector<8x384xf32> to vector<8x128xf32>
    %255 = vector.extract_strided_slice %245 {offsets = [0, 384], sizes = [8, 128], strides = [1, 1]} : vector<8x512xf32> to vector<8x128xf32>
    %256 = math.tanh %255 : vector<8x128xf32>
    %257 = arith.mulf %253, %217 : vector<8x128xf32>
    %258 = arith.mulf %252, %256 : vector<8x128xf32>
    %259 = arith.addf %257, %258 : vector<8x128xf32>
    %260 = math.tanh %259 : vector<8x128xf32>
    %261 = arith.mulf %254, %260 : vector<8x128xf32>
    %262 = vector.extract_strided_slice %241 {offsets = [0, 512], sizes = [8, 512], strides = [1, 1]} : vector<8x1024xf32> to vector<8x512xf32>
    %c1_38 = arith.constant 1 : index
    %c0_39 = arith.constant 0 : index
    %263 = vector.load %arg3[%c1_38, %c0_39] : memref<2x512xf32, #tpu.memory_space<vmem>>, vector<1x512xf32>
    %264 = vector.broadcast %263 : vector<1x512xf32> to vector<8x512xf32>
    %265 = arith.addf %262, %264 : vector<8x512xf32>
    %266 = vector.extract_strided_slice %265 {offsets = [0, 0], sizes = [8, 384], strides = [1, 1]} : vector<8x512xf32> to vector<8x384xf32>
    %267 = arith.negf %266 : vector<8x384xf32>
    %268 = math.exp %267 : vector<8x384xf32>
    %cst_40 = arith.constant 1.000000e+00 : f32
    %269 = vector.broadcast %cst_40 : f32 to vector<8x384xf32>
    %270 = arith.addf %269, %268 : vector<8x384xf32>
    %271 = arith.divf %269, %270 : vector<8x384xf32>
    %272 = vector.extract_strided_slice %271 {offsets = [0, 0], sizes = [8, 128], strides = [1, 1]} : vector<8x384xf32> to vector<8x128xf32>
    %273 = vector.extract_strided_slice %271 {offsets = [0, 128], sizes = [8, 128], strides = [1, 1]} : vector<8x384xf32> to vector<8x128xf32>
    %274 = vector.extract_strided_slice %271 {offsets = [0, 256], sizes = [8, 128], strides = [1, 1]} : vector<8x384xf32> to vector<8x128xf32>
    %275 = vector.extract_strided_slice %265 {offsets = [0, 384], sizes = [8, 128], strides = [1, 1]} : vector<8x512xf32> to vector<8x128xf32>
    %276 = math.tanh %275 : vector<8x128xf32>
    %277 = arith.mulf %273, %237 : vector<8x128xf32>
    %278 = arith.mulf %272, %276 : vector<8x128xf32>
    %279 = arith.addf %277, %278 : vector<8x128xf32>
    %280 = math.tanh %279 : vector<8x128xf32>
    %281 = arith.mulf %274, %280 : vector<8x128xf32>
    %282 = tpu.concatenate %261, %281 in 1 : vector<8x128xf32>, vector<8x128xf32> -> vector<8x256xf32>
    %cst_41 = arith.constant dense<0.000000e+00> : vector<8x1024xf32>
    %283 = tpu.matmul %282, %8, %cst_41 {dimension_numbers = #tpu.dot_dimension_numbers<[1], [0], [0], [1], [0, 0, 1, 1], [], []>} : vector<8x256xf32>, vector<256x1024xf32>, vector<8x1024xf32> -> vector<8x1024xf32>
    %284 = vector.extract_strided_slice %283 {offsets = [0, 0], sizes = [8, 512], strides = [1, 1]} : vector<8x1024xf32> to vector<8x512xf32>
    %285 = vector.extract_strided_slice %7 {offsets = [7, 0, 0], sizes = [1, 8, 512], strides = [1, 1, 1]} : vector<8x8x512xf32> to vector<1x8x512xf32>
    %286 = vector.shape_cast %285 : vector<1x8x512xf32> to vector<8x512xf32>
    %287 = arith.addf %284, %286 : vector<8x512xf32>
    %288 = vector.extract_strided_slice %287 {offsets = [0, 0], sizes = [8, 384], strides = [1, 1]} : vector<8x512xf32> to vector<8x384xf32>
    %289 = arith.negf %288 : vector<8x384xf32>
    %290 = math.exp %289 : vector<8x384xf32>
    %cst_42 = arith.constant 1.000000e+00 : f32
    %291 = vector.broadcast %cst_42 : f32 to vector<8x384xf32>
    %292 = arith.addf %291, %290 : vector<8x384xf32>
    %293 = arith.divf %291, %292 : vector<8x384xf32>
    %294 = vector.extract_strided_slice %293 {offsets = [0, 0], sizes = [8, 128], strides = [1, 1]} : vector<8x384xf32> to vector<8x128xf32>
    %295 = vector.extract_strided_slice %293 {offsets = [0, 128], sizes = [8, 128], strides = [1, 1]} : vector<8x384xf32> to vector<8x128xf32>
    %296 = vector.extract_strided_slice %293 {offsets = [0, 256], sizes = [8, 128], strides = [1, 1]} : vector<8x384xf32> to vector<8x128xf32>
    %297 = vector.extract_strided_slice %287 {offsets = [0, 384], sizes = [8, 128], strides = [1, 1]} : vector<8x512xf32> to vector<8x128xf32>
    %298 = math.tanh %297 : vector<8x128xf32>
    %299 = arith.mulf %295, %259 : vector<8x128xf32>
    %300 = arith.mulf %294, %298 : vector<8x128xf32>
    %301 = arith.addf %299, %300 : vector<8x128xf32>
    %302 = math.tanh %301 : vector<8x128xf32>
    %303 = arith.mulf %296, %302 : vector<8x128xf32>
    %304 = vector.extract_strided_slice %283 {offsets = [0, 512], sizes = [8, 512], strides = [1, 1]} : vector<8x1024xf32> to vector<8x512xf32>
    %c1_43 = arith.constant 1 : index
    %c0_44 = arith.constant 0 : index
    %305 = vector.load %arg3[%c1_43, %c0_44] : memref<2x512xf32, #tpu.memory_space<vmem>>, vector<1x512xf32>
    %306 = vector.broadcast %305 : vector<1x512xf32> to vector<8x512xf32>
    %307 = arith.addf %304, %306 : vector<8x512xf32>
    %308 = vector.extract_strided_slice %307 {offsets = [0, 0], sizes = [8, 384], strides = [1, 1]} : vector<8x512xf32> to vector<8x384xf32>
    %309 = arith.negf %308 : vector<8x384xf32>
    %310 = math.exp %309 : vector<8x384xf32>
    %cst_45 = arith.constant 1.000000e+00 : f32
    %311 = vector.broadcast %cst_45 : f32 to vector<8x384xf32>
    %312 = arith.addf %311, %310 : vector<8x384xf32>
    %313 = arith.divf %311, %312 : vector<8x384xf32>
    %314 = vector.extract_strided_slice %313 {offsets = [0, 0], sizes = [8, 128], strides = [1, 1]} : vector<8x384xf32> to vector<8x128xf32>
    %315 = vector.extract_strided_slice %313 {offsets = [0, 128], sizes = [8, 128], strides = [1, 1]} : vector<8x384xf32> to vector<8x128xf32>
    %316 = vector.extract_strided_slice %313 {offsets = [0, 256], sizes = [8, 128], strides = [1, 1]} : vector<8x384xf32> to vector<8x128xf32>
    %317 = vector.extract_strided_slice %307 {offsets = [0, 384], sizes = [8, 128], strides = [1, 1]} : vector<8x512xf32> to vector<8x128xf32>
    %318 = math.tanh %317 : vector<8x128xf32>
    %319 = arith.mulf %315, %279 : vector<8x128xf32>
    %320 = arith.mulf %314, %318 : vector<8x128xf32>
    %321 = arith.addf %319, %320 : vector<8x128xf32>
    %322 = math.tanh %321 : vector<8x128xf32>
    %323 = arith.mulf %316, %322 : vector<8x128xf32>
    %324 = tpu.concatenate %303, %323 in 1 : vector<8x128xf32>, vector<8x128xf32> -> vector<8x256xf32>
    %cst_46 = arith.constant dense<0.000000e+00> : vector<8x1024xf32>
    %325 = tpu.matmul %324, %8, %cst_46 {dimension_numbers = #tpu.dot_dimension_numbers<[1], [0], [0], [1], [0, 0, 1, 1], [], []>} : vector<8x256xf32>, vector<256x1024xf32>, vector<8x1024xf32> -> vector<8x1024xf32>
    %326 = vector.extract_strided_slice %325 {offsets = [0, 512], sizes = [8, 512], strides = [1, 1]} : vector<8x1024xf32> to vector<8x512xf32>
    %c1_47 = arith.constant 1 : index
    %c0_48 = arith.constant 0 : index
    %327 = vector.load %arg3[%c1_47, %c0_48] : memref<2x512xf32, #tpu.memory_space<vmem>>, vector<1x512xf32>
    %328 = vector.broadcast %327 : vector<1x512xf32> to vector<8x512xf32>
    %329 = arith.addf %326, %328 : vector<8x512xf32>
    %330 = vector.extract_strided_slice %329 {offsets = [0, 0], sizes = [8, 384], strides = [1, 1]} : vector<8x512xf32> to vector<8x384xf32>
    %331 = arith.negf %330 : vector<8x384xf32>
    %332 = math.exp %331 : vector<8x384xf32>
    %cst_49 = arith.constant 1.000000e+00 : f32
    %333 = vector.broadcast %cst_49 : f32 to vector<8x384xf32>
    %334 = arith.addf %333, %332 : vector<8x384xf32>
    %335 = arith.divf %333, %334 : vector<8x384xf32>
    %336 = vector.extract_strided_slice %335 {offsets = [0, 0], sizes = [8, 128], strides = [1, 1]} : vector<8x384xf32> to vector<8x128xf32>
    %337 = vector.extract_strided_slice %335 {offsets = [0, 128], sizes = [8, 128], strides = [1, 1]} : vector<8x384xf32> to vector<8x128xf32>
    %338 = vector.extract_strided_slice %335 {offsets = [0, 256], sizes = [8, 128], strides = [1, 1]} : vector<8x384xf32> to vector<8x128xf32>
    %339 = vector.extract_strided_slice %329 {offsets = [0, 384], sizes = [8, 128], strides = [1, 1]} : vector<8x512xf32> to vector<8x128xf32>
    %340 = math.tanh %339 : vector<8x128xf32>
    %341 = arith.mulf %337, %321 : vector<8x128xf32>
    %342 = arith.mulf %336, %340 : vector<8x128xf32>
    %343 = arith.addf %341, %342 : vector<8x128xf32>
    %344 = math.tanh %343 : vector<8x128xf32>
    %345 = arith.mulf %338, %344 : vector<8x128xf32>
    %c0_50 = arith.constant 0 : index
    %c0_51 = arith.constant 0 : index
    %346 = vector.load %arg4[%c0_50, %c0_51] : memref<128x128xf32, #tpu.memory_space<vmem>>, vector<128x128xf32>
    %cst_52 = arith.constant dense<0.000000e+00> : vector<8x128xf32>
    %347 = tpu.matmul %345, %346, %cst_52 {dimension_numbers = #tpu.dot_dimension_numbers<[1], [0], [0], [1], [0, 0, 1, 1], [], []>} : vector<8x128xf32>, vector<128x128xf32>, vector<8x128xf32> -> vector<8x128xf32>
    %c0_53 = arith.constant 0 : index
    %c0_54 = arith.constant 0 : index
    %348 = vector.load %arg5[%c0_53, %c0_54] : memref<1x128xf32, #tpu.memory_space<vmem>>, vector<1x128xf32>
    %349 = vector.broadcast %348 : vector<1x128xf32> to vector<8x128xf32>
    %350 = arith.addf %347, %349 : vector<8x128xf32>
    %c0_55 = arith.constant 0 : index
    %c0_56 = arith.constant 0 : index
    %351 = vector.load %arg6[%c0_55, %c0_56] : memref<8x128xf32, #tpu.memory_space<vmem>>, vector<8x128xf32>
    tpu.vector_store %arg6[%c0_55, %c0_56], %350 {strides = array<i32>} : memref<8x128xf32, #tpu.memory_space<vmem>>, vector<8x128xf32>,
    return
  }
}

</mosaic_0001>

<llo_original>
// kernel: recurrent_actor_prob_forward.1
$region0: #{recurrent_actor_prob_forward.1}
  #allocation0 [shape = 'u32[]', space=smem, size = 0x4, offset = 0x4, fixed_abs, tag = 'smem constant byte address 0x4 - core index']
  #allocation1 [shape = 'u32[144,128]{1,0:T(1,128)}', space=vmem, size = 0x12000, scoped, tag = 'internal scratch']
  %s0 = inlined_call_operand.vmem [shape: f32[8,8,128], index: 0, kind: input, shape index: {}]
  %s1 = inlined_call_operand.hbm [shape: f32[128,512], index: 1, kind: input, shape index: {}]
  %s2 = inlined_call_operand.hbm [shape: f32[256,1024], index: 2, kind: input, shape index: {}]
  %s3 = inlined_call_operand.vmem [shape: f32[2,512], index: 3, kind: input, shape index: {}]
  %s4 = inlined_call_operand.hbm [shape: f32[128,128], index: 4, kind: input, shape index: {}]
  %s5 = inlined_call_operand.vmem [shape: f32[1,128], index: 5, kind: input, shape index: {}]
  %s6 = inlined_call_operand.vmem [shape: f32[8,128], index: 6, kind: output, shape index: {}]
  %s7 = sld [smem:[#allocation0]]
  $region46: #{recurrent_actor_prob_forward.1} parent=0
    _
  %s9 = ssub.s32 1, %s7
  %s10 = scalar_select 0, %s9, %s7
  $region1: #{recurrent_actor_prob_forward.1} parent=0
    #allocation2 [shape = 'u8[262144]{0}', space=vmem, size = 0x40000, scoped, tag = 'input window, operand 1, single buffered']
    #allocation3 [shape = 's32[1]{0}', space=sflag, size = 0x4, scoped, tag = 'scoped memory for recurrent_actor_prob_forward.1']
    #allocation4 [shape = 'u8[1048576]{0}', space=vmem, size = 0x100000, scoped, tag = 'input window, operand 2, single buffered']
    #allocation5 [shape = 's32[1]{0}', space=sflag, size = 0x4, scoped, tag = 'scoped memory for recurrent_actor_prob_forward.1']
    #allocation6 [shape = 'u8[65536]{0}', space=vmem, size = 0x10000, scoped, tag = 'input window, operand 4, single buffered']
    %11 = vsyncpa [#allocation3], 0
    %12 = vsyncpa [#allocation5], 0
    // Predicated region
    $region2: #{recurrent_actor_prob_forward.1} parent=1 // pred_check
      _
    $region3: #{recurrent_actor_prob_forward.1} parent=1 // pred_check_branch
      %14 = sbr.rel (0) target = $region5
    $region4: #{recurrent_actor_prob_forward.1} parent=1 // pred_region
      _
    $region5: #{recurrent_actor_prob_forward.1} parent=1 // pred_fallthru
      _
    // Predicated region
    $region6: #{recurrent_actor_prob_forward.1} parent=1 // pred_check
      _
    $region7: #{recurrent_actor_prob_forward.1} parent=1 // pred_check_branch
      %16 = sbr.rel (0) target = $region9
    $region8: #{recurrent_actor_prob_forward.1} parent=1 // pred_region
      %s18 = ssub.s32 8192, 8192
      %19 = vsyncadd [#allocation3], %s18
      %s20 = sshll.u32 [#allocation2], 4
      %s21 = int_to_ptr.vmem [resolvable:$true] %s20
      %26 = dma.hbm_to_vmem [thread:$0]  %s1, 8192, %s21, [#allocation3], 512, 512, 32
    $region9: #{recurrent_actor_prob_forward.1} parent=1 // pred_fallthru
      _
    // Predicated region
    $region10: #{recurrent_actor_prob_forward.1} parent=1 // pred_check
      _
    $region11: #{recurrent_actor_prob_forward.1} parent=1 // pred_check_branch
      %28 = sbr.rel (0) target = $region13
    $region12: #{recurrent_actor_prob_forward.1} parent=1 // pred_region
      %s30 = ssub.s32 32768, 32768
      %31 = vsyncadd [#allocation5], %s30
      %s32 = sshll.u32 [#allocation4], 4
      %s33 = int_to_ptr.vmem [resolvable:$true] %s32
      %38 = dma.hbm_to_vmem [thread:$0]  %s2, 32768, %s33, [#allocation5], 1024, 1024, 64
    $region13: #{recurrent_actor_prob_forward.1} parent=1 // pred_fallthru
      _
    // Predicated region
    $region14: #{recurrent_actor_prob_forward.1} parent=1 // pred_check
      _
    $region15: #{recurrent_actor_prob_forward.1} parent=1 // pred_check_branch
      %40 = sbr.rel (0) target = $region17
    $region16: #{recurrent_actor_prob_forward.1} parent=1 // pred_region
      _
    $region17: #{recurrent_actor_prob_forward.1} parent=1 // pred_fallthru
      _
    // Predicated region
    $region18: #{recurrent_actor_prob_forward.1} parent=1 // pred_check
      _
    $region19: #{recurrent_actor_prob_forward.1} parent=1 // pred_check_branch
      %42 = sbr.rel (0) target = $region21
    $region20: #{recurrent_actor_prob_forward.1} parent=1 // pred_region
      %s44 = ssub.s32 2048, 2048
      %45 = vsyncadd [#allocation5], %s44
      %s46 = sshll.u32 [#allocation6], 4
      %s47 = int_to_ptr.vmem [resolvable:$true] %s46
      %52 = dma.hbm_to_vmem [thread:$0]  %s4, 2048, %s47, [#allocation5], 128, 128, 8
    $region21: #{recurrent_actor_prob_forward.1} parent=1 // pred_fallthru
      _
    // Predicated region
    $region22: #{recurrent_actor_prob_forward.1} parent=1 // pred_check
      _
    $region23: #{recurrent_actor_prob_forward.1} parent=1 // pred_check_branch
      %54 = sbr.rel (0) target = $region25
    $region24: #{recurrent_actor_prob_forward.1} parent=1 // pred_region
      _
    $region25: #{recurrent_actor_prob_forward.1} parent=1 // pred_fallthru
      _
    // Predicated region
    $region26: #{recurrent_actor_prob_forward.1} parent=1 // pred_check
      _
    $region27: #{recurrent_actor_prob_forward.1} parent=1 // pred_check_branch
      %56 = sbr.rel (0) target = $region29
    $region28: #{recurrent_actor_prob_forward.1} parent=1 // pred_region
      %57 = dma.done [#allocation3], 8192
    $region29: #{recurrent_actor_prob_forward.1} parent=1 // pred_fallthru
      _
    // Predicated region
    $region30: #{recurrent_actor_prob_forward.1} parent=1 // pred_check
      _
    $region31: #{recurrent_actor_prob_forward.1} parent=1 // pred_check_branch
      %59 = sbr.rel (0) target = $region33
    $region32: #{recurrent_actor_prob_forward.1} parent=1 // pred_region
      %60 = dma.done [#allocation5], 32768
    $region33: #{recurrent_actor_prob_forward.1} parent=1 // pred_fallthru
      _
    // Predicated region
    $region34: #{recurrent_actor_prob_forward.1} parent=1 // pred_check
      _
    $region35: #{recurrent_actor_prob_forward.1} parent=1 // pred_check_branch
      %62 = sbr.rel (0) target = $region37
    $region36: #{recurrent_actor_prob_forward.1} parent=1 // pred_region
      %63 = dma.done [#allocation5], 2048
    $region37: #{recurrent_actor_prob_forward.1} parent=1 // pred_fallthru
      _
    %v64 = vld [vmem:[%s0] sm:$0xff]
    %v65 = vld [vmem:[%s0 + $0x8] sm:$0xff]
    %v66 = vld [vmem:[%s0 + $0x10] sm:$0xff]
    %v67 = vld [vmem:[%s0 + $0x18] sm:$0xff]
    %v68 = vld [vmem:[%s0 + $0x20] sm:$0xff]
    %v69 = vld [vmem:[%s0 + $0x28] sm:$0xff]
    %v70 = vld [vmem:[%s0 + $0x30] sm:$0xff]
    %v71 = vld [vmem:[%s0 + $0x38] sm:$0xff]
    %v72 = vld [vmem:[#allocation2] sm:$0xff]
    %v73 = vld [vmem:[#allocation2 + $0x8] sm:$0xff]
    %v74 = vld [vmem:[#allocation2 + $0x10] sm:$0xff]
    %v75 = vld [vmem:[#allocation2 + $0x18] sm:$0xff]
    %v76 = vld [vmem:[#allocation2 + $0x20] sm:$0xff]
    %v77 = vld [vmem:[#allocation2 + $0x28] sm:$0xff]
    %v78 = vld [vmem:[#allocation2 + $0x30] sm:$0xff]
    %v79 = vld [vmem:[#allocation2 + $0x38] sm:$0xff]
    %v80 = vld [vmem:[#allocation2 + $0x40] sm:$0xff]
    %v81 = vld [vmem:[#allocation2 + $0x48] sm:$0xff]
    %v82 = vld [vmem:[#allocation2 + $0x50] sm:$0xff]
    %v83 = vld [vmem:[#allocation2 + $0x58] sm:$0xff]
    %v84 = vld [vmem:[#allocation2 + $0x60] sm:$0xff]
    %v85 = vld [vmem:[#allocation2 + $0x68] sm:$0xff]
    %v86 = vld [vmem:[#allocation2 + $0x70] sm:$0xff]
    %v87 = vld [vmem:[#allocation2 + $0x78] sm:$0xff]
    %v88 = vld [vmem:[#allocation2 + $0x80] sm:$0xff]
    %v89 = vld [vmem:[#allocation2 + $0x88] sm:$0xff]
    %v90 = vld [vmem:[#allocation2 + $0x90] sm:$0xff]
    %v91 = vld [vmem:[#allocation2 + $0x98] sm:$0xff]
    %v92 = vld [vmem:[#allocation2 + $0xa0] sm:$0xff]
    %v93 = vld [vmem:[#allocation2 + $0xa8] sm:$0xff]
    %v94 = vld [vmem:[#allocation2 + $0xb0] sm:$0xff]
    %v95 = vld [vmem:[#allocation2 + $0xb8] sm:$0xff]
    %v96 = vld [vmem:[#allocation2 + $0xc0] sm:$0xff]
    %v97 = vld [vmem:[#allocation2 + $0xc8] sm:$0xff]
    %v98 = vld [vmem:[#allocation2 + $0xd0] sm:$0xff]
    %v99 = vld [vmem:[#allocation2 + $0xd8] sm:$0xff]
    %v100 = vld [vmem:[#allocation2 + $0xe0] sm:$0xff]
    %v101 = vld [vmem:[#allocation2 + $0xe8] sm:$0xff]
    %v102 = vld [vmem:[#allocation2 + $0xf0] sm:$0xff]
    %v103 = vld [vmem:[#allocation2 + $0xf8] sm:$0xff]
    %v104 = vld [vmem:[#allocation2 + $0x100] sm:$0xff]
    %v105 = vld [vmem:[#allocation2 + $0x108] sm:$0xff]
    %v106 = vld [vmem:[#allocation2 + $0x110] sm:$0xff]
    %v107 = vld [vmem:[#allocation2 + $0x118] sm:$0xff]
    %v108 = vld [vmem:[#allocation2 + $0x120] sm:$0xff]
    %v109 = vld [vmem:[#allocation2 + $0x128] sm:$0xff]
    %v110 = vld [vmem:[#allocation2 + $0x130] sm:$0xff]
    %v111 = vld [vmem:[#allocation2 + $0x138] sm:$0xff]
    %v112 = vld [vmem:[#allocation2 + $0x140] sm:$0xff]
    %v113 = vld [vmem:[#allocation2 + $0x148] sm:$0xff]
    %v114 = vld [vmem:[#allocation2 + $0x150] sm:$0xff]
    %v115 = vld [vmem:[#allocation2 + $0x158] sm:$0xff]
    %v116 = vld [vmem:[#allocation2 + $0x160] sm:$0xff]
    %v117 = vld [vmem:[#allocation2 + $0x168] sm:$0xff]
    %v118 = vld [vmem:[#allocation2 + $0x170] sm:$0xff]
    %v119 = vld [vmem:[#allocation2 + $0x178] sm:$0xff]
    %v120 = vld [vmem:[#allocation2 + $0x180] sm:$0xff]
    %v121 = vld [vmem:[#allocation2 + $0x188] sm:$0xff]
    %v122 = vld [vmem:[#allocation2 + $0x190] sm:$0xff]
    %v123 = vld [vmem:[#allocation2 + $0x198] sm:$0xff]
    %v124 = vld [vmem:[#allocation2 + $0x1a0] sm:$0xff]
    %v125 = vld [vmem:[#allocation2 + $0x1a8] sm:$0xff]
    %v126 = vld [vmem:[#allocation2 + $0x1b0] sm:$0xff]
    %v127 = vld [vmem:[#allocation2 + $0x1b8] sm:$0xff]
    %v128 = vld [vmem:[#allocation2 + $0x1c0] sm:$0xff]
    %v129 = vld [vmem:[#allocation2 + $0x1c8] sm:$0xff]
    %v130 = vld [vmem:[#allocation2 + $0x1d0] sm:$0xff]
    %v131 = vld [vmem:[#allocation2 + $0x1d8] sm:$0xff]
    %v132 = vld [vmem:[#allocation2 + $0x1e0] sm:$0xff]
    %v133 = vld [vmem:[#allocation2 + $0x1e8] sm:$0xff]
    %v134 = vld [vmem:[#allocation2 + $0x1f0] sm:$0xff]
    %v135 = vld [vmem:[#allocation2 + $0x1f8] sm:$0xff]
    %v136 = vld [vmem:[%s3] ss:$2 sm:$0xf]
    %v138 = vlaneseq
    %v139 = vshrl.u32 %v138, 7
    %v140 = vsub.s32 0, %v139
    %v141 = vrot.slane %v136, %v140
    %v142 = vlaneseq
    %v143 = vshrl.u32 %v142, 7
    %v144 = vsub.s32 1, %v143
    %v145 = vrot.slane %v136, %v144
    %v146 = vlaneseq
    %v147 = vshrl.u32 %v146, 7
    %v148 = vsub.s32 2, %v147
    %v149 = vrot.slane %v136, %v148
    %v150 = vlaneseq
    %v151 = vshrl.u32 %v150, 7
    %v152 = vsub.s32 3, %v151
    %v153 = vrot.slane %v136, %v152
    %158 = vmatprep.subr.mxu0 %v73
    %159 = vmatpush1.msra.mxu0 %v72
    %160 = vmatprep.subr.mxu0 %v77
    %161 = vmatpush1.msra.mxu0 %v76
    %162 = vmatprep.subr.mxu0 %v81
    %163 = vmatpush1.msra.mxu0 %v80
    %164 = vmatprep.subr.mxu0 %v85
    %165 = vmatpush1.msra.mxu0 %v84
    %166 = vmatprep.subr.mxu0 %v89
    %167 = vmatpush1.msra.mxu0 %v88
    %168 = vmatprep.subr.mxu0 %v93
    %169 = vmatpush1.msra.mxu0 %v92
    %170 = vmatprep.subr.mxu0 %v97
    %171 = vmatpush1.msra.mxu0 %v96
    %172 = vmatprep.subr.mxu0 %v101
    %173 = vmatpush1.msra.mxu0 %v100
    %174 = vmatprep.subr.mxu0 %v105
    %175 = vmatpush1.msra.mxu0 %v104
    %176 = vmatprep.subr.mxu0 %v109
    %177 = vmatpush1.msra.mxu0 %v108
    %178 = vmatprep.subr.mxu0 %v113
    %179 = vmatpush1.msra.mxu0 %v112
    %180 = vmatprep.subr.mxu0 %v117
    %181 = vmatpush1.msra.mxu0 %v116
    %182 = vmatprep.subr.mxu0 %v121
    %183 = vmatpush1.msra.mxu0 %v120
    %184 = vmatprep.subr.mxu0 %v125
    %185 = vmatpush1.msra.mxu0 %v124
    %186 = vmatprep.subr.mxu0 %v129
    %187 = vmatpush1.msra.mxu0 %v128
    %188 = vmatprep.subr.mxu0 %v133
    %189 = vmatpush1.msra.mxu0 %v132
    %190 = vmatprep.subr.mxu0 0.0
    %191 = vmatpush1.msra.mxu0 0.0
    %192 = vmatprep.subr.mxu0 0.0
    %193 = vmatpush1.msra.mxu0 0.0
    %194 = vmatprep.subr.mxu0 0.0
    %195 = vmatpush1.msra.mxu0 0.0
    %196 = vmatprep.subr.mxu0 0.0
    %197 = vmatpush1.msra.mxu0 0.0
    %198 = vmatprep.subr.mxu0 0.0
    %199 = vmatpush1.msra.mxu0 0.0
    %200 = vmatprep.subr.mxu0 0.0
    %201 = vmatpush1.msra.mxu0 0.0
    %202 = vmatprep.subr.mxu0 0.0
    %203 = vmatpush1.msra.mxu0 0.0
    %204 = vmatprep.subr.mxu0 0.0
    %205 = vmatpush1.msra.mxu0 0.0
    %206 = vmatprep.subr.mxu0 0.0
    %207 = vmatpush1.msra.mxu0 0.0
    %208 = vmatprep.subr.mxu0 0.0
    %209 = vmatpush1.msra.mxu0 0.0
    %210 = vmatprep.subr.mxu0 0.0
    %211 = vmatpush1.msra.mxu0 0.0
    %212 = vmatprep.subr.mxu0 0.0
    %213 = vmatpush1.msra.mxu0 0.0
    %214 = vmatprep.subr.mxu0 0.0
    %215 = vmatpush1.msra.mxu0 0.0
    %216 = vmatprep.subr.mxu0 0.0
    %217 = vmatpush1.msra.mxu0 0.0
    %218 = vmatprep.subr.mxu0 0.0
    %219 = vmatpush1.msra.mxu0 0.0
    %220 = vmatprep.subr.mxu0 0.0
    %221 = vmatpush1.msra.mxu0 0.0
    %222 = vmatprep.mubr.f32.mxu0 0.0
    %223 = vmatmul.mubr.f32.gmra.mrb[0].mxu0 %v64
    %v224 = vpop.f32.mrb[0].mxu0
    %v225 = vadd.f32 %v141, %v224
    %v226 = vpop.f32.mrb[0].mxu0
    %v227 = vadd.f32 %v145, %v226
    %228 = vmatprep.mubr.f32.mxu0 0.0
    %229 = vmatmul.mubr.f32.gmra.mrb[0].mxu0 %v65
    %v230 = vpop.f32.mrb[0].mxu0
    %v231 = vadd.f32 %v141, %v230
    %v232 = vpop.f32.mrb[0].mxu0
    %v233 = vadd.f32 %v145, %v232
    %234 = vmatprep.mubr.f32.mxu0 0.0
    %235 = vmatmul.mubr.f32.gmra.mrb[0].mxu0 %v66
    %v236 = vpop.f32.mrb[0].mxu0
    %v237 = vadd.f32 %v141, %v236
    %v238 = vpop.f32.mrb[0].mxu0
    %v239 = vadd.f32 %v145, %v238
    %240 = vmatprep.mubr.f32.mxu0 0.0
    %241 = vmatmul.mubr.f32.gmra.mrb[0].mxu0 %v67
    %v242 = vpop.f32.mrb[0].mxu0
    %v243 = vadd.f32 %v141, %v242
    %v244 = vpop.f32.mrb[0].mxu0
    %v245 = vadd.f32 %v145, %v244
    %246 = vmatprep.mubr.f32.mxu0 0.0
    %247 = vmatmul.mubr.f32.gmra.mrb[0].mxu0 %v68
    %v248 = vpop.f32.mrb[0].mxu0
    %v249 = vadd.f32 %v141, %v248
    %v250 = vpop.f32.mrb[0].mxu0
    %v251 = vadd.f32 %v145, %v250
    %252 = vmatprep.mubr.f32.mxu0 0.0
    %253 = vmatmul.mubr.f32.gmra.mrb[0].mxu0 %v69
    %v254 = vpop.f32.mrb[0].mxu0
    %v255 = vadd.f32 %v141, %v254
    %v256 = vpop.f32.mrb[0].mxu0
    %v257 = vadd.f32 %v145, %v256
    %258 = vmatprep.mubr.f32.mxu0 0.0
    %259 = vmatmul.mubr.f32.gmra.mrb[0].mxu0 %v70
    %v260 = vpop.f32.mrb[0].mxu0
    %v261 = vadd.f32 %v141, %v260
    %v262 = vpop.f32.mrb[0].mxu0
    %v263 = vadd.f32 %v145, %v262
    %264 = vmatprep.mubr.f32.mxu0 0.0
    %265 = vmatmul.mubr.f32.gmra.mrb[0].mxu0 %v71
    %v266 = vpop.f32.mrb[0].mxu0
    %v267 = vadd.f32 %v141, %v266
    %v268 = vpop.f32.mrb[0].mxu0
    %v269 = vadd.f32 %v145, %v268
    %270 = vdwg.mxu0
    %271 = vmatprep.subr.mxu0 %v75
    %272 = vmatpush1.msra.mxu0 %v74
    %273 = vmatprep.subr.mxu0 %v79
    %274 = vmatpush1.msra.mxu0 %v78
    %275 = vmatprep.subr.mxu0 %v83
    %276 = vmatpush1.msra.mxu0 %v82
    %277 = vmatprep.subr.mxu0 %v87
    %278 = vmatpush1.msra.mxu0 %v86
    %279 = vmatprep.subr.mxu0 %v91
    %280 = vmatpush1.msra.mxu0 %v90
    %281 = vmatprep.subr.mxu0 %v95
    %282 = vmatpush1.msra.mxu0 %v94
    %283 = vmatprep.subr.mxu0 %v99
    %284 = vmatpush1.msra.mxu0 %v98
    %285 = vmatprep.subr.mxu0 %v103
    %286 = vmatpush1.msra.mxu0 %v102
    %287 = vmatprep.subr.mxu0 %v107
    %288 = vmatpush1.msra.mxu0 %v106
    %289 = vmatprep.subr.mxu0 %v111
    %290 = vmatpush1.msra.mxu0 %v110
    %291 = vmatprep.subr.mxu0 %v115
    %292 = vmatpush1.msra.mxu0 %v114
    %293 = vmatprep.subr.mxu0 %v119
    %294 = vmatpush1.msra.mxu0 %v118
    %295 = vmatprep.subr.mxu0 %v123
    %296 = vmatpush1.msra.mxu0 %v122
    %297 = vmatprep.subr.mxu0 %v127
    %298 = vmatpush1.msra.mxu0 %v126
    %299 = vmatprep.subr.mxu0 %v131
    %300 = vmatpush1.msra.mxu0 %v130
    %301 = vmatprep.subr.mxu0 %v135
    %302 = vmatpush1.msra.mxu0 %v134
    %303 = vmatprep.subr.mxu0 0.0
    %304 = vmatpush1.msra.mxu0 0.0
    %305 = vmatprep.subr.mxu0 0.0
    %306 = vmatpush1.msra.mxu0 0.0
    %307 = vmatprep.subr.mxu0 0.0
    %308 = vmatpush1.msra.mxu0 0.0
    %309 = vmatprep.subr.mxu0 0.0
    %310 = vmatpush1.msra.mxu0 0.0
    %311 = vmatprep.subr.mxu0 0.0
    %312 = vmatpush1.msra.mxu0 0.0
    %313 = vmatprep.subr.mxu0 0.0
    %314 = vmatpush1.msra.mxu0 0.0
    %315 = vmatprep.subr.mxu0 0.0
    %316 = vmatpush1.msra.mxu0 0.0
    %317 = vmatprep.subr.mxu0 0.0
    %318 = vmatpush1.msra.mxu0 0.0
    %319 = vmatprep.subr.mxu0 0.0
    %320 = vmatpush1.msra.mxu0 0.0
    %321 = vmatprep.subr.mxu0 0.0
    %322 = vmatpush1.msra.mxu0 0.0
    %323 = vmatprep.subr.mxu0 0.0
    %324 = vmatpush1.msra.mxu0 0.0
    %325 = vmatprep.subr.mxu0 0.0
    %326 = vmatpush1.msra.mxu0 0.0
    %327 = vmatprep.subr.mxu0 0.0
    %328 = vmatpush1.msra.mxu0 0.0
    %329 = vmatprep.subr.mxu0 0.0
    %330 = vmatpush1.msra.mxu0 0.0
    %331 = vmatprep.subr.mxu0 0.0
    %332 = vmatpush1.msra.mxu0 0.0
    %333 = vmatprep.subr.mxu0 0.0
    %334 = vmatpush1.msra.mxu0 0.0
    %335 = vmatprep.mubr.f32.mxu0 0.0
    %336 = vmatmul.mubr.f32.gmra.mrb[0].mxu0 %v64
    %v337 = vpop.f32.mrb[0].mxu0
    %v338 = vadd.f32 %v149, %v337
    %v339 = vpop.f32.mrb[0].mxu0
    %v340 = vadd.f32 %v153, %v339
    %341 = vmatprep.mubr.f32.mxu0 0.0
    %342 = vmatmul.mubr.f32.gmra.mrb[0].mxu0 %v65
    %v343 = vpop.f32.mrb[0].mxu0
    %v344 = vadd.f32 %v149, %v343
    %v345 = vpop.f32.mrb[0].mxu0
    %v346 = vadd.f32 %v153, %v345
    %347 = vmatprep.mubr.f32.mxu0 0.0
    %348 = vmatmul.mubr.f32.gmra.mrb[0].mxu0 %v66
    %v349 = vpop.f32.mrb[0].mxu0
    %v350 = vadd.f32 %v149, %v349
    %v351 = vpop.f32.mrb[0].mxu0
    %v352 = vadd.f32 %v153, %v351
    %353 = vmatprep.mubr.f32.mxu0 0.0
    %354 = vmatmul.mubr.f32.gmra.mrb[0].mxu0 %v67
    %v355 = vpop.f32.mrb[0].mxu0
    %v356 = vadd.f32 %v149, %v355
    %v357 = vpop.f32.mrb[0].mxu0
    %v358 = vadd.f32 %v153, %v357
    %359 = vmatprep.mubr.f32.mxu0 0.0
    %360 = vmatmul.mubr.f32.gmra.mrb[0].mxu0 %v68
    %v361 = vpop.f32.mrb[0].mxu0
    %v362 = vadd.f32 %v149, %v361
    %v363 = vpop.f32.mrb[0].mxu0
    %v364 = vadd.f32 %v153, %v363
    %365 = vmatprep.mubr.f32.mxu0 0.0
    %366 = vmatmul.mubr.f32.gmra.mrb[0].mxu0 %v69
    %v367 = vpop.f32.mrb[0].mxu0
    %v368 = vadd.f32 %v149, %v367
    %v369 = vpop.f32.mrb[0].mxu0
    %v370 = vadd.f32 %v153, %v369
    %371 = vmatprep.mubr.f32.mxu0 0.0
    %372 = vmatmul.mubr.f32.gmra.mrb[0].mxu0 %v70
    %v373 = vpop.f32.mrb[0].mxu0
    %v374 = vadd.f32 %v149, %v373
    %v375 = vpop.f32.mrb[0].mxu0
    %v376 = vadd.f32 %v153, %v375
    %377 = vmatprep.mubr.f32.mxu0 0.0
    %378 = vmatmul.mubr.f32.gmra.mrb[0].mxu0 %v71
    %v379 = vpop.f32.mrb[0].mxu0
    %v380 = vadd.f32 %v149, %v379
    %v381 = vpop.f32.mrb[0].mxu0
    %v382 = vadd.f32 %v153, %v381
    %383 = vdwg.mxu0
    %v384 = vld [vmem:[#allocation4] sm:$0xff]
    %v385 = vld [vmem:[#allocation4 + $0x8] sm:$0xff]
    %v386 = vld [vmem:[#allocation4 + $0x10] sm:$0xff]
    %v387 = vld [vmem:[#allocation4 + $0x18] sm:$0xff]
    %v388 = vld [vmem:[#allocation4 + $0x20] sm:$0xff]
    %v389 = vld [vmem:[#allocation4 + $0x28] sm:$0xff]
    %v390 = vld [vmem:[#allocation4 + $0x30] sm:$0xff]
    %v391 = vld [vmem:[#allocation4 + $0x38] sm:$0xff]
    %v392 = vld [vmem:[#allocation4 + $0x40] sm:$0xff]
    %v393 = vld [vmem:[#allocation4 + $0x48] sm:$0xff]
    %v394 = vld [vmem:[#allocation4 + $0x50] sm:$0xff]
    %v395 = vld [vmem:[#allocation4 + $0x58] sm:$0xff]
    %v396 = vld [vmem:[#allocation4 + $0x60] sm:$0xff]
    %v397 = vld [vmem:[#allocation4 + $0x68] sm:$0xff]
    %v398 = vld [vmem:[#allocation4 + $0x70] sm:$0xff]
    %v399 = vld [vmem:[#allocation4 + $0x78] sm:$0xff]
    %v400 = vld [vmem:[#allocation4 + $0x80] sm:$0xff]
    %v401 = vld [vmem:[#allocation4 + $0x88] sm:$0xff]
    %v402 = vld [vmem:[#allocation4 + $0x90] sm:$0xff]
    %v403 = vld [vmem:[#allocation4 + $0x98] sm:$0xff]
    %v404 = vld [vmem:[#allocation4 + $0xa0] sm:$0xff]
    %v405 = vld [vmem:[#allocation4 + $0xa8] sm:$0xff]
    %v406 = vld [vmem:[#allocation4 + $0xb0] sm:$0xff]
    %v407 = vld [vmem:[#allocation4 + $0xb8] sm:$0xff]
    %v408 = vld [vmem:[#allocation4 + $0xc0] sm:$0xff]
    %v409 = vld [vmem:[#allocation4 + $0xc8] sm:$0xff]
    %v410 = vld [vmem:[#allocation4 + $0xd0] sm:$0xff]
    %v411 = vld [vmem:[#allocation4 + $0xd8] sm:$0xff]
    %v412 = vld [vmem:[#allocation4 + $0xe0] sm:$0xff]
    %v413 = vld [vmem:[#allocation4 + $0xe8] sm:$0xff]
    %v414 = vld [vmem:[#allocation4 + $0xf0] sm:$0xff]
    %v415 = vld [vmem:[#allocation4 + $0xf8] sm:$0xff]
    %v416 = vld [vmem:[#allocation4 + $0x100] sm:$0xff]
    %v417 = vld [vmem:[#allocation4 + $0x108] sm:$0xff]
    %v418 = vld [vmem:[#allocation4 + $0x110] sm:$0xff]
    %v419 = vld [vmem:[#allocation4 + $0x118] sm:$0xff]
    %v420 = vld [vmem:[#allocation4 + $0x120] sm:$0xff]
    %v421 = vld [vmem:[#allocation4 + $0x128] sm:$0xff]
    %v422 = vld [vmem:[#allocation4 + $0x130] sm:$0xff]
    %v423 = vld [vmem:[#allocation4 + $0x138] sm:$0xff]
    %v424 = vld [vmem:[#allocation4 + $0x140] sm:$0xff]
    %v425 = vld [vmem:[#allocation4 + $0x148] sm:$0xff]
    %v426 = vld [vmem:[#allocation4 + $0x150] sm:$0xff]
    %v427 = vld [vmem:[#allocation4 + $0x158] sm:$0xff]
    %v428 = vld [vmem:[#allocation4 + $0x160] sm:$0xff]
    %v429 = vld [vmem:[#allocation4 + $0x168] sm:$0xff]
    %v430 = vld [vmem:[#allocation4 + $0x170] sm:$0xff]
    %v431 = vld [vmem:[#allocation4 + $0x178] sm:$0xff]
    %v432 = vld [vmem:[#allocation4 + $0x180] sm:$0xff]
    %v433 = vld [vmem:[#allocation4 + $0x188] sm:$0xff]
    %v434 = vld [vmem:[#allocation4 + $0x190] sm:$0xff]
    %v435 = vld [vmem:[#allocation4 + $0x198] sm:$0xff]
    %v436 = vld [vmem:[#allocation4 + $0x1a0] sm:$0xff]
    %v437 = vld [vmem:[#allocation4 + $0x1a8] sm:$0xff]
    %v438 = vld [vmem:[#allocation4 + $0x1b0] sm:$0xff]
    %v439 = vld [vmem:[#allocation4 + $0x1b8] sm:$0xff]
    %v440 = vld [vmem:[#allocation4 + $0x1c0] sm:$0xff]
    %v441 = vld [vmem:[#allocation4 + $0x1c8] sm:$0xff]
    %v442 = vld [vmem:[#allocation4 + $0x1d0] sm:$0xff]
    %v443 = vld [vmem:[#allocation4 + $0x1d8] sm:$0xff]
    %v444 = vld [vmem:[#allocation4 + $0x1e0] sm:$0xff]
    %v445 = vld [vmem:[#allocation4 + $0x1e8] sm:$0xff]
    %v446 = vld [vmem:[#allocation4 + $0x1f0] sm:$0xff]
    %v447 = vld [vmem:[#allocation4 + $0x1f8] sm:$0xff]
    %v448 = vld [vmem:[#allocation4 + $0x200] sm:$0xff]
    %v449 = vld [vmem:[#allocation4 + $0x208] sm:$0xff]
    %v450 = vld [vmem:[#allocation4 + $0x210] sm:$0xff]
    %v451 = vld [vmem:[#allocation4 + $0x218] sm:$0xff]
    %v452 = vld [vmem:[#allocation4 + $0x220] sm:$0xff]
    %v453 = vld [vmem:[#allocation4 + $0x228] sm:$0xff]
    %v454 = vld [vmem:[#allocation4 + $0x230] sm:$0xff]
    %v455 = vld [vmem:[#allocation4 + $0x238] sm:$0xff]
    %v456 = vld [vmem:[#allocation4 + $0x240] sm:$0xff]
    %v457 = vld [vmem:[#allocation4 + $0x248] sm:$0xff]
    %v458 = vld [vmem:[#allocation4 + $0x250] sm:$0xff]
    %v459 = vld [vmem:[#allocation4 + $0x258] sm:$0xff]
    %v460 = vld [vmem:[#allocation4 + $0x260] sm:$0xff]
    %v461 = vld [vmem:[#allocation4 + $0x268] sm:$0xff]
    %v462 = vld [vmem:[#allocation4 + $0x270] sm:$0xff]
    %v463 = vld [vmem:[#allocation4 + $0x278] sm:$0xff]
    %v464 = vld [vmem:[#allocation4 + $0x280] sm:$0xff]
    %v465 = vld [vmem:[#allocation4 + $0x288] sm:$0xff]
    %v466 = vld [vmem:[#allocation4 + $0x290] sm:$0xff]
    %v467 = vld [vmem:[#allocation4 + $0x298] sm:$0xff]
    %v468 = vld [vmem:[#allocation4 + $0x2a0] sm:$0xff]
    %v469 = vld [vmem:[#allocation4 + $0x2a8] sm:$0xff]
    %v470 = vld [vmem:[#allocation4 + $0x2b0] sm:$0xff]
    %v471 = vld [vmem:[#allocation4 + $0x2b8] sm:$0xff]
    %v472 = vld [vmem:[#allocation4 + $0x2c0] sm:$0xff]
    %v473 = vld [vmem:[#allocation4 + $0x2c8] sm:$0xff]
    %v474 = vld [vmem:[#allocation4 + $0x2d0] sm:$0xff]
    %v475 = vld [vmem:[#allocation4 + $0x2d8] sm:$0xff]
    %v476 = vld [vmem:[#allocation4 + $0x2e0] sm:$0xff]
    %v477 = vld [vmem:[#allocation4 + $0x2e8] sm:$0xff]
    %v478 = vld [vmem:[#allocation4 + $0x2f0] sm:$0xff]
    %v479 = vld [vmem:[#allocation4 + $0x2f8] sm:$0xff]
    %v480 = vld [vmem:[#allocation4 + $0x300] sm:$0xff]
    %v481 = vld [vmem:[#allocation4 + $0x308] sm:$0xff]
    %v482 = vld [vmem:[#allocation4 + $0x310] sm:$0xff]
    %v483 = vld [vmem:[#allocation4 + $0x318] sm:$0xff]
    %v484 = vld [vmem:[#allocation4 + $0x320] sm:$0xff]
    %v485 = vld [vmem:[#allocation4 + $0x328] sm:$0xff]
    %v486 = vld [vmem:[#allocation4 + $0x330] sm:$0xff]
    %v487 = vld [vmem:[#allocation4 + $0x338] sm:$0xff]
    %v488 = vld [vmem:[#allocation4 + $0x340] sm:$0xff]
    %v489 = vld [vmem:[#allocation4 + $0x348] sm:$0xff]
    %v490 = vld [vmem:[#allocation4 + $0x350] sm:$0xff]
    %v491 = vld [vmem:[#allocation4 + $0x358] sm:$0xff]
    %v492 = vld [vmem:[#allocation4 + $0x360] sm:$0xff]
    %v493 = vld [vmem:[#allocation4 + $0x368] sm:$0xff]
    %v494 = vld [vmem:[#allocation4 + $0x370] sm:$0xff]
    %v495 = vld [vmem:[#allocation4 + $0x378] sm:$0xff]
    %v496 = vld [vmem:[#allocation4 + $0x380] sm:$0xff]
    %v497 = vld [vmem:[#allocation4 + $0x388] sm:$0xff]
    %v498 = vld [vmem:[#allocation4 + $0x390] sm:$0xff]
    %v499 = vld [vmem:[#allocation4 + $0x398] sm:$0xff]
    %v500 = vld [vmem:[#allocation4 + $0x3a0] sm:$0xff]
    %v501 = vld [vmem:[#allocation4 + $0x3a8] sm:$0xff]
    %v502 = vld [vmem:[#allocation4 + $0x3b0] sm:$0xff]
    %v503 = vld [vmem:[#allocation4 + $0x3b8] sm:$0xff]
    %v504 = vld [vmem:[#allocation4 + $0x3c0] sm:$0xff]
    %v505 = vld [vmem:[#allocation4 + $0x3c8] sm:$0xff]
    %v506 = vld [vmem:[#allocation4 + $0x3d0] sm:$0xff]
    %v507 = vld [vmem:[#allocation4 + $0x3d8] sm:$0xff]
    %v508 = vld [vmem:[#allocation4 + $0x3e0] sm:$0xff]
    %v509 = vld [vmem:[#allocation4 + $0x3e8] sm:$0xff]
    %v510 = vld [vmem:[#allocation4 + $0x3f0] sm:$0xff]
    %v511 = vld [vmem:[#allocation4 + $0x3f8] sm:$0xff]
    %v512 = vld [vmem:[#allocation4 + $0x400] sm:$0xff]
    %v513 = vld [vmem:[#allocation4 + $0x408] sm:$0xff]
    %v514 = vld [vmem:[#allocation4 + $0x410] sm:$0xff]
    %v515 = vld [vmem:[#allocation4 + $0x418] sm:$0xff]
    %v516 = vld [vmem:[#allocation4 + $0x420] sm:$0xff]
    %v517 = vld [vmem:[#allocation4 + $0x428] sm:$0xff]
    %v518 = vld [vmem:[#allocation4 + $0x430] sm:$0xff]
    %v519 = vld [vmem:[#allocation4 + $0x438] sm:$0xff]
    %v520 = vld [vmem:[#allocation4 + $0x440] sm:$0xff]
    %v521 = vld [vmem:[#allocation4 + $0x448] sm:$0xff]
    %v522 = vld [vmem:[#allocation4 + $0x450] sm:$0xff]
    %v523 = vld [vmem:[#allocation4 + $0x458] sm:$0xff]
    %v524 = vld [vmem:[#allocation4 + $0x460] sm:$0xff]
    %v525 = vld [vmem:[#allocation4 + $0x468] sm:$0xff]
    %v526 = vld [vmem:[#allocation4 + $0x470] sm:$0xff]
    %v527 = vld [vmem:[#allocation4 + $0x478] sm:$0xff]
    %v528 = vld [vmem:[#allocation4 + $0x480] sm:$0xff]
    %v529 = vld [vmem:[#allocation4 + $0x488] sm:$0xff]
    %v530 = vld [vmem:[#allocation4 + $0x490] sm:$0xff]
    %v531 = vld [vmem:[#allocation4 + $0x498] sm:$0xff]
    %v532 = vld [vmem:[#allocation4 + $0x4a0] sm:$0xff]
    %v533 = vld [vmem:[#allocation4 + $0x4a8] sm:$0xff]
    %v534 = vld [vmem:[#allocation4 + $0x4b0] sm:$0xff]
    %v535 = vld [vmem:[#allocation4 + $0x4b8] sm:$0xff]
    %v536 = vld [vmem:[#allocation4 + $0x4c0] sm:$0xff]
    %v537 = vld [vmem:[#allocation4 + $0x4c8] sm:$0xff]
    %v538 = vld [vmem:[#allocation4 + $0x4d0] sm:$0xff]
    %v539 = vld [vmem:[#allocation4 + $0x4d8] sm:$0xff]
    %v540 = vld [vmem:[#allocation4 + $0x4e0] sm:$0xff]
    %v541 = vld [vmem:[#allocation4 + $0x4e8] sm:$0xff]
    %v542 = vld [vmem:[#allocation4 + $0x4f0] sm:$0xff]
    %v543 = vld [vmem:[#allocation4 + $0x4f8] sm:$0xff]
    %v544 = vld [vmem:[#allocation4 + $0x500] sm:$0xff]
    %v545 = vld [vmem:[#allocation4 + $0x508] sm:$0xff]
    %v546 = vld [vmem:[#allocation4 + $0x510] sm:$0xff]
    %v547 = vld [vmem:[#allocation4 + $0x518] sm:$0xff]
    %v548 = vld [vmem:[#allocation4 + $0x520] sm:$0xff]
    %v549 = vld [vmem:[#allocation4 + $0x528] sm:$0xff]
    %v550 = vld [vmem:[#allocation4 + $0x530] sm:$0xff]
    %v551 = vld [vmem:[#allocation4 + $0x538] sm:$0xff]
    %v552 = vld [vmem:[#allocation4 + $0x540] sm:$0xff]
    %v553 = vld [vmem:[#allocation4 + $0x548] sm:$0xff]
    %v554 = vld [vmem:[#allocation4 + $0x550] sm:$0xff]
    %v555 = vld [vmem:[#allocation4 + $0x558] sm:$0xff]
    %v556 = vld [vmem:[#allocation4 + $0x560] sm:$0xff]
    %v557 = vld [vmem:[#allocation4 + $0x568] sm:$0xff]
    %v558 = vld [vmem:[#allocation4 + $0x570] sm:$0xff]
    %v559 = vld [vmem:[#allocation4 + $0x578] sm:$0xff]
    %v560 = vld [vmem:[#allocation4 + $0x580] sm:$0xff]
    %v561 = vld [vmem:[#allocation4 + $0x588] sm:$0xff]
    %v562 = vld [vmem:[#allocation4 + $0x590] sm:$0xff]
    %v563 = vld [vmem:[#allocation4 + $0x598] sm:$0xff]
    %v564 = vld [vmem:[#allocation4 + $0x5a0] sm:$0xff]
    %v565 = vld [vmem:[#allocation4 + $0x5a8] sm:$0xff]
    %v566 = vld [vmem:[#allocation4 + $0x5b0] sm:$0xff]
    %v567 = vld [vmem:[#allocation4 + $0x5b8] sm:$0xff]
    %v568 = vld [vmem:[#allocation4 + $0x5c0] sm:$0xff]
    %v569 = vld [vmem:[#allocation4 + $0x5c8] sm:$0xff]
    %v570 = vld [vmem:[#allocation4 + $0x5d0] sm:$0xff]
    %v571 = vld [vmem:[#allocation4 + $0x5d8] sm:$0xff]
    %v572 = vld [vmem:[#allocation4 + $0x5e0] sm:$0xff]
    %v573 = vld [vmem:[#allocation4 + $0x5e8] sm:$0xff]
    %v574 = vld [vmem:[#allocation4 + $0x5f0] sm:$0xff]
    %v575 = vld [vmem:[#allocation4 + $0x5f8] sm:$0xff]
    %v576 = vld [vmem:[#allocation4 + $0x600] sm:$0xff]
    %v577 = vld [vmem:[#allocation4 + $0x608] sm:$0xff]
    %v578 = vld [vmem:[#allocation4 + $0x610] sm:$0xff]
    %v579 = vld [vmem:[#allocation4 + $0x618] sm:$0xff]
    %v580 = vld [vmem:[#allocation4 + $0x620] sm:$0xff]
    %v581 = vld [vmem:[#allocation4 + $0x628] sm:$0xff]
    %v582 = vld [vmem:[#allocation4 + $0x630] sm:$0xff]
    %v583 = vld [vmem:[#allocation4 + $0x638] sm:$0xff]
    %v584 = vld [vmem:[#allocation4 + $0x640] sm:$0xff]
    %v585 = vld [vmem:[#allocation4 + $0x648] sm:$0xff]
    %v586 = vld [vmem:[#allocation4 + $0x650] sm:$0xff]
    %v587 = vld [vmem:[#allocation4 + $0x658] sm:$0xff]
    %v588 = vld [vmem:[#allocation4 + $0x660] sm:$0xff]
    %v589 = vld [vmem:[#allocation4 + $0x668] sm:$0xff]
    %v590 = vld [vmem:[#allocation4 + $0x670] sm:$0xff]
    %v591 = vld [vmem:[#allocation4 + $0x678] sm:$0xff]
    %v592 = vld [vmem:[#allocation4 + $0x680] sm:$0xff]
    %v593 = vld [vmem:[#allocation4 + $0x688] sm:$0xff]
    %v594 = vld [vmem:[#allocation4 + $0x690] sm:$0xff]
    %v595 = vld [vmem:[#allocation4 + $0x698] sm:$0xff]
    %v596 = vld [vmem:[#allocation4 + $0x6a0] sm:$0xff]
    %v597 = vld [vmem:[#allocation4 + $0x6a8] sm:$0xff]
    %v598 = vld [vmem:[#allocation4 + $0x6b0] sm:$0xff]
    %v599 = vld [vmem:[#allocation4 + $0x6b8] sm:$0xff]
    %v600 = vld [vmem:[#allocation4 + $0x6c0] sm:$0xff]
    %v601 = vld [vmem:[#allocation4 + $0x6c8] sm:$0xff]
    %v602 = vld [vmem:[#allocation4 + $0x6d0] sm:$0xff]
    %v603 = vld [vmem:[#allocation4 + $0x6d8] sm:$0xff]
    %v604 = vld [vmem:[#allocation4 + $0x6e0] sm:$0xff]
    %v605 = vld [vmem:[#allocation4 + $0x6e8] sm:$0xff]
    %v606 = vld [vmem:[#allocation4 + $0x6f0] sm:$0xff]
    %v607 = vld [vmem:[#allocation4 + $0x6f8] sm:$0xff]
    %v608 = vld [vmem:[#allocation4 + $0x700] sm:$0xff]
    %v609 = vld [vmem:[#allocation4 + $0x708] sm:$0xff]
    %v610 = vld [vmem:[#allocation4 + $0x710] sm:$0xff]
    %v611 = vld [vmem:[#allocation4 + $0x718] sm:$0xff]
    %v612 = vld [vmem:[#allocation4 + $0x720] sm:$0xff]
    %v613 = vld [vmem:[#allocation4 + $0x728] sm:$0xff]
    %v614 = vld [vmem:[#allocation4 + $0x730] sm:$0xff]
    %v615 = vld [vmem:[#allocation4 + $0x738] sm:$0xff]
    %v616 = vld [vmem:[#allocation4 + $0x740] sm:$0xff]
    %v617 = vld [vmem:[#allocation4 + $0x748] sm:$0xff]
    %v618 = vld [vmem:[#allocation4 + $0x750] sm:$0xff]
    %v619 = vld [vmem:[#allocation4 + $0x758] sm:$0xff]
    %v620 = vld [vmem:[#allocation4 + $0x760] sm:$0xff]
    %v621 = vld [vmem:[#allocation4 + $0x768] sm:$0xff]
    %v622 = vld [vmem:[#allocation4 + $0x770] sm:$0xff]
    %v623 = vld [vmem:[#allocation4 + $0x778] sm:$0xff]
    %v624 = vld [vmem:[#allocation4 + $0x780] sm:$0xff]
    %v625 = vld [vmem:[#allocation4 + $0x788] sm:$0xff]
    %v626 = vld [vmem:[#allocation4 + $0x790] sm:$0xff]
    %v627 = vld [vmem:[#allocation4 + $0x798] sm:$0xff]
    %v628 = vld [vmem:[#allocation4 + $0x7a0] sm:$0xff]
    %v629 = vld [vmem:[#allocation4 + $0x7a8] sm:$0xff]
    %v630 = vld [vmem:[#allocation4 + $0x7b0] sm:$0xff]
    %v631 = vld [vmem:[#allocation4 + $0x7b8] sm:$0xff]
    %v632 = vld [vmem:[#allocation4 + $0x7c0] sm:$0xff]
    %v633 = vld [vmem:[#allocation4 + $0x7c8] sm:$0xff]
    %v634 = vld [vmem:[#allocation4 + $0x7d0] sm:$0xff]
    %v635 = vld [vmem:[#allocation4 + $0x7d8] sm:$0xff]
    %v636 = vld [vmem:[#allocation4 + $0x7e0] sm:$0xff]
    %v637 = vld [vmem:[#allocation4 + $0x7e8] sm:$0xff]
    %v638 = vld [vmem:[#allocation4 + $0x7f0] sm:$0xff]
    %v639 = vld [vmem:[#allocation4 + $0x7f8] sm:$0xff]
    %v640 = vxor.u32 %v225, 2147483648
    %v641 = vxor.u32 %v227, 2147483648
    %v642 = vxor.u32 %v338, 2147483648
    %v643 = vmul.f32 %v640, 1.442695
    %v644 = vpow.pop %v643
    %v645 = vmul.f32 %v641, 1.442695
    %v646 = vpow.pop %v645
    %v647 = vmul.f32 %v642, 1.442695
    %v648 = vpow.pop %v647
    %v649 = vadd.f32 %v644, 1.0
    %v650 = vadd.f32 %v646, 1.0
    %v651 = vadd.f32 %v648, 1.0
    %v652 = vrcp.pop %v649
    %v653 = vmul.f32 1.0, %v652
    %v654 = vrcp.pop %v650
    %v655 = vmul.f32 1.0, %v654
    %v656 = vrcp.pop %v651
    %v657 = vmul.f32 1.0, %v656
    %v658 = vtanh.pop %v340
    %v659 = vmul.f32 %v655, 0.0
    %v660 = vmul.f32 %v653, %v658
    %v661 = vadd.f32 %v659, %v660
    %v662 = vtanh.pop %v661
    %v663 = vmul.f32 %v657, %v662
    %664 = vmatprep.subr.mxu0 %v385
    %665 = vmatpush1.msra.mxu0 %v384
    %666 = vmatprep.subr.mxu0 %v393
    %667 = vmatpush1.msra.mxu0 %v392
    %668 = vmatprep.subr.mxu0 %v401
    %669 = vmatpush1.msra.mxu0 %v400
    %670 = vmatprep.subr.mxu0 %v409
    %671 = vmatpush1.msra.mxu0 %v408
    %672 = vmatprep.subr.mxu0 %v417
    %673 = vmatpush1.msra.mxu0 %v416
    %674 = vmatprep.subr.mxu0 %v425
    %675 = vmatpush1.msra.mxu0 %v424
    %676 = vmatprep.subr.mxu0 %v433
    %677 = vmatpush1.msra.mxu0 %v432
    %678 = vmatprep.subr.mxu0 %v441
    %679 = vmatpush1.msra.mxu0 %v440
    %680 = vmatprep.subr.mxu0 %v449
    %681 = vmatpush1.msra.mxu0 %v448
    %682 = vmatprep.subr.mxu0 %v457
    %683 = vmatpush1.msra.mxu0 %v456
    %684 = vmatprep.subr.mxu0 %v465
    %685 = vmatpush1.msra.mxu0 %v464
    %686 = vmatprep.subr.mxu0 %v473
    %687 = vmatpush1.msra.mxu0 %v472
    %688 = vmatprep.subr.mxu0 %v481
    %689 = vmatpush1.msra.mxu0 %v480
    %690 = vmatprep.subr.mxu0 %v489
    %691 = vmatpush1.msra.mxu0 %v488
    %692 = vmatprep.subr.mxu0 %v497
    %693 = vmatpush1.msra.mxu0 %v496
    %694 = vmatprep.subr.mxu0 %v505
    %695 = vmatpush1.msra.mxu0 %v504
    %696 = vmatprep.subr.mxu0 %v513
    %697 = vmatpush1.msra.mxu0 %v512
    %698 = vmatprep.subr.mxu0 %v521
    %699 = vmatpush1.msra.mxu0 %v520
    %700 = vmatprep.subr.mxu0 %v529
    %701 = vmatpush1.msra.mxu0 %v528
    %702 = vmatprep.subr.mxu0 %v537
    %703 = vmatpush1.msra.mxu0 %v536
    %704 = vmatprep.subr.mxu0 %v545
    %705 = vmatpush1.msra.mxu0 %v544
    %706 = vmatprep.subr.mxu0 %v553
    %707 = vmatpush1.msra.mxu0 %v552
    %708 = vmatprep.subr.mxu0 %v561
    %709 = vmatpush1.msra.mxu0 %v560
    %710 = vmatprep.subr.mxu0 %v569
    %711 = vmatpush1.msra.mxu0 %v568
    %712 = vmatprep.subr.mxu0 %v577
    %713 = vmatpush1.msra.mxu0 %v576
    %714 = vmatprep.subr.mxu0 %v585
    %715 = vmatpush1.msra.mxu0 %v584
    %716 = vmatprep.subr.mxu0 %v593
    %717 = vmatpush1.msra.mxu0 %v592
    %718 = vmatprep.subr.mxu0 %v601
    %719 = vmatpush1.msra.mxu0 %v600
    %720 = vmatprep.subr.mxu0 %v609
    %721 = vmatpush1.msra.mxu0 %v608
    %722 = vmatprep.subr.mxu0 %v617
    %723 = vmatpush1.msra.mxu0 %v616
    %724 = vmatprep.subr.mxu0 %v625
    %725 = vmatpush1.msra.mxu0 %v624
    %726 = vmatprep.subr.mxu0 %v633
    %727 = vmatpush1.msra.mxu0 %v632
    %728 = vmatprep.mubr.f32.mxu0 0.0
    %729 = vmatmul.mubr.f32.gmra.mrb[0].mxu0 %v663
    %v730 = vpop.f32.mrb[0].mxu0
    %v731 = vadd.f32 0.0, %v730
    %v732 = vpop.f32.mrb[0].mxu0
    %v733 = vadd.f32 0.0, %v732
    %734 = vdwg.mxu0
    %735 = vmatprep.subr.mxu0 %v387
    %736 = vmatpush1.msra.mxu0 %v386
    %737 = vmatprep.subr.mxu0 %v395
    %738 = vmatpush1.msra.mxu0 %v394
    %739 = vmatprep.subr.mxu0 %v403
    %740 = vmatpush1.msra.mxu0 %v402
    %741 = vmatprep.subr.mxu0 %v411
    %742 = vmatpush1.msra.mxu0 %v410
    %743 = vmatprep.subr.mxu0 %v419
    %744 = vmatpush1.msra.mxu0 %v418
    %745 = vmatprep.subr.mxu0 %v427
    %746 = vmatpush1.msra.mxu0 %v426
    %747 = vmatprep.subr.mxu0 %v435
    %748 = vmatpush1.msra.mxu0 %v434
    %749 = vmatprep.subr.mxu0 %v443
    %750 = vmatpush1.msra.mxu0 %v442
    %751 = vmatprep.subr.mxu0 %v451
    %752 = vmatpush1.msra.mxu0 %v450
    %753 = vmatprep.subr.mxu0 %v459
    %754 = vmatpush1.msra.mxu0 %v458
    %755 = vmatprep.subr.mxu0 %v467
    %756 = vmatpush1.msra.mxu0 %v466
    %757 = vmatprep.subr.mxu0 %v475
    %758 = vmatpush1.msra.mxu0 %v474
    %759 = vmatprep.subr.mxu0 %v483
    %760 = vmatpush1.msra.mxu0 %v482
    %761 = vmatprep.subr.mxu0 %v491
    %762 = vmatpush1.msra.mxu0 %v490
    %763 = vmatprep.subr.mxu0 %v499
    %764 = vmatpush1.msra.mxu0 %v498
    %765 = vmatprep.subr.mxu0 %v507
    %766 = vmatpush1.msra.mxu0 %v506
    %767 = vmatprep.subr.mxu0 %v515
    %768 = vmatpush1.msra.mxu0 %v514
    %769 = vmatprep.subr.mxu0 %v523
    %770 = vmatpush1.msra.mxu0 %v522
    %771 = vmatprep.subr.mxu0 %v531
    %772 = vmatpush1.msra.mxu0 %v530
    %773 = vmatprep.subr.mxu0 %v539
    %774 = vmatpush1.msra.mxu0 %v538
    %775 = vmatprep.subr.mxu0 %v547
    %776 = vmatpush1.msra.mxu0 %v546
    %777 = vmatprep.subr.mxu0 %v555
    %778 = vmatpush1.msra.mxu0 %v554
    %779 = vmatprep.subr.mxu0 %v563
    %780 = vmatpush1.msra.mxu0 %v562
    %781 = vmatprep.subr.mxu0 %v571
    %782 = vmatpush1.msra.mxu0 %v570
    %783 = vmatprep.subr.mxu0 %v579
    %784 = vmatpush1.msra.mxu0 %v578
    %785 = vmatprep.subr.mxu0 %v587
    %786 = vmatpush1.msra.mxu0 %v586
    %787 = vmatprep.subr.mxu0 %v595
    %788 = vmatpush1.msra.mxu0 %v594
    %789 = vmatprep.subr.mxu0 %v603
    %790 = vmatpush1.msra.mxu0 %v602
    %791 = vmatprep.subr.mxu0 %v611
    %792 = vmatpush1.msra.mxu0 %v610
    %793 = vmatprep.subr.mxu0 %v619
    %794 = vmatpush1.msra.mxu0 %v618
    %795 = vmatprep.subr.mxu0 %v627
    %796 = vmatpush1.msra.mxu0 %v626
    %797 = vmatprep.subr.mxu0 %v635
    %798 = vmatpush1.msra.mxu0 %v634
    %799 = vmatprep.mubr.f32.mxu0 0.0
    %800 = vmatmul.mubr.f32.gmra.mrb[0].mxu0 %v663
    %v801 = vpop.f32.mrb[0].mxu0
    %v802 = vadd.f32 0.0, %v801
    %v803 = vpop.f32.mrb[0].mxu0
    %v804 = vadd.f32 0.0, %v803
    %805 = vdwg.mxu0
    %806 = vmatprep.subr.mxu0 %v389
    %807 = vmatpush1.msra.mxu0 %v388
    %808 = vmatprep.subr.mxu0 %v397
    %809 = vmatpush1.msra.mxu0 %v396
    %810 = vmatprep.subr.mxu0 %v405
    %811 = vmatpush1.msra.mxu0 %v404
    %812 = vmatprep.subr.mxu0 %v413
    %813 = vmatpush1.msra.mxu0 %v412
    %814 = vmatprep.subr.mxu0 %v421
    %815 = vmatpush1.msra.mxu0 %v420
    %816 = vmatprep.subr.mxu0 %v429
    %817 = vmatpush1.msra.mxu0 %v428
    %818 = vmatprep.subr.mxu0 %v437
    %819 = vmatpush1.msra.mxu0 %v436
    %820 = vmatprep.subr.mxu0 %v445
    %821 = vmatpush1.msra.mxu0 %v444
    %822 = vmatprep.subr.mxu0 %v453
    %823 = vmatpush1.msra.mxu0 %v452
    %824 = vmatprep.subr.mxu0 %v461
    %825 = vmatpush1.msra.mxu0 %v460
    %826 = vmatprep.subr.mxu0 %v469
    %827 = vmatpush1.msra.mxu0 %v468
    %828 = vmatprep.subr.mxu0 %v477
    %829 = vmatpush1.msra.mxu0 %v476
    %830 = vmatprep.subr.mxu0 %v485
    %831 = vmatpush1.msra.mxu0 %v484
    %832 = vmatprep.subr.mxu0 %v493
    %833 = vmatpush1.msra.mxu0 %v492
    %834 = vmatprep.subr.mxu0 %v501
    %835 = vmatpush1.msra.mxu0 %v500
    %836 = vmatprep.subr.mxu0 %v509
    %837 = vmatpush1.msra.mxu0 %v508
    %838 = vmatprep.subr.mxu0 %v517
    %839 = vmatpush1.msra.mxu0 %v516
    %840 = vmatprep.subr.mxu0 %v525
    %841 = vmatpush1.msra.mxu0 %v524
    %842 = vmatprep.subr.mxu0 %v533
    %843 = vmatpush1.msra.mxu0 %v532
    %844 = vmatprep.subr.mxu0 %v541
    %845 = vmatpush1.msra.mxu0 %v540
    %846 = vmatprep.subr.mxu0 %v549
    %847 = vmatpush1.msra.mxu0 %v548
    %848 = vmatprep.subr.mxu0 %v557
    %849 = vmatpush1.msra.mxu0 %v556
    %850 = vmatprep.subr.mxu0 %v565
    %851 = vmatpush1.msra.mxu0 %v564
    %852 = vmatprep.subr.mxu0 %v573
    %853 = vmatpush1.msra.mxu0 %v572
    %854 = vmatprep.subr.mxu0 %v581
    %855 = vmatpush1.msra.mxu0 %v580
    %856 = vmatprep.subr.mxu0 %v589
    %857 = vmatpush1.msra.mxu0 %v588
    %858 = vmatprep.subr.mxu0 %v597
    %859 = vmatpush1.msra.mxu0 %v596
    %860 = vmatprep.subr.mxu0 %v605
    %861 = vmatpush1.msra.mxu0 %v604
    %862 = vmatprep.subr.mxu0 %v613
    %863 = vmatpush1.msra.mxu0 %v612
    %864 = vmatprep.subr.mxu0 %v621
    %865 = vmatpush1.msra.mxu0 %v620
    %866 = vmatprep.subr.mxu0 %v629
    %867 = vmatpush1.msra.mxu0 %v628
    %868 = vmatprep.subr.mxu0 %v637
    %869 = vmatpush1.msra.mxu0 %v636
    %870 = vmatprep.mubr.f32.mxu0 0.0
    %871 = vmatmul.mubr.f32.gmra.mrb[0].mxu0 %v663
    %v872 = vpop.f32.mrb[0].mxu0
    %v873 = vadd.f32 0.0, %v872
    %v874 = vpop.f32.mrb[0].mxu0
    %v875 = vadd.f32 0.0, %v874
    %876 = vdwg.mxu0
    %877 = vmatprep.subr.mxu0 %v391
    %878 = vmatpush1.msra.mxu0 %v390
    %879 = vmatprep.subr.mxu0 %v399
    %880 = vmatpush1.msra.mxu0 %v398
    %881 = vmatprep.subr.mxu0 %v407
    %882 = vmatpush1.msra.mxu0 %v406
    %883 = vmatprep.subr.mxu0 %v415
    %884 = vmatpush1.msra.mxu0 %v414
    %885 = vmatprep.subr.mxu0 %v423
    %886 = vmatpush1.msra.mxu0 %v422
    %887 = vmatprep.subr.mxu0 %v431
    %888 = vmatpush1.msra.mxu0 %v430
    %889 = vmatprep.subr.mxu0 %v439
    %890 = vmatpush1.msra.mxu0 %v438
    %891 = vmatprep.subr.mxu0 %v447
    %892 = vmatpush1.msra.mxu0 %v446
    %893 = vmatprep.subr.mxu0 %v455
    %894 = vmatpush1.msra.mxu0 %v454
    %895 = vmatprep.subr.mxu0 %v463
    %896 = vmatpush1.msra.mxu0 %v462
    %897 = vmatprep.subr.mxu0 %v471
    %898 = vmatpush1.msra.mxu0 %v470
    %899 = vmatprep.subr.mxu0 %v479
    %900 = vmatpush1.msra.mxu0 %v478
    %901 = vmatprep.subr.mxu0 %v487
    %902 = vmatpush1.msra.mxu0 %v486
    %903 = vmatprep.subr.mxu0 %v495
    %904 = vmatpush1.msra.mxu0 %v494
    %905 = vmatprep.subr.mxu0 %v503
    %906 = vmatpush1.msra.mxu0 %v502
    %907 = vmatprep.subr.mxu0 %v511
    %908 = vmatpush1.msra.mxu0 %v510
    %909 = vmatprep.subr.mxu0 %v519
    %910 = vmatpush1.msra.mxu0 %v518
    %911 = vmatprep.subr.mxu0 %v527
    %912 = vmatpush1.msra.mxu0 %v526
    %913 = vmatprep.subr.mxu0 %v535
    %914 = vmatpush1.msra.mxu0 %v534
    %915 = vmatprep.subr.mxu0 %v543
    %916 = vmatpush1.msra.mxu0 %v542
    %917 = vmatprep.subr.mxu0 %v551
    %918 = vmatpush1.msra.mxu0 %v550
    %919 = vmatprep.subr.mxu0 %v559
    %920 = vmatpush1.msra.mxu0 %v558
    %921 = vmatprep.subr.mxu0 %v567
    %922 = vmatpush1.msra.mxu0 %v566
    %923 = vmatprep.subr.mxu0 %v575
    %924 = vmatpush1.msra.mxu0 %v574
    %925 = vmatprep.subr.mxu0 %v583
    %926 = vmatpush1.msra.mxu0 %v582
    %927 = vmatprep.subr.mxu0 %v591
    %928 = vmatpush1.msra.mxu0 %v590
    %929 = vmatprep.subr.mxu0 %v599
    %930 = vmatpush1.msra.mxu0 %v598
    %931 = vmatprep.subr.mxu0 %v607
    %932 = vmatpush1.msra.mxu0 %v606
    %933 = vmatprep.subr.mxu0 %v615
    %934 = vmatpush1.msra.mxu0 %v614
    %935 = vmatprep.subr.mxu0 %v623
    %936 = vmatpush1.msra.mxu0 %v622
    %937 = vmatprep.subr.mxu0 %v631
    %938 = vmatpush1.msra.mxu0 %v630
    %939 = vmatprep.subr.mxu0 %v639
    %940 = vmatpush1.msra.mxu0 %v638
    %941 = vmatprep.mubr.f32.mxu0 0.0
    %942 = vmatmul.mubr.f32.gmra.mrb[0].mxu0 %v663
    %v943 = vpop.f32.mrb[0].mxu0
    %v944 = vadd.f32 0.0, %v943
    %v945 = vpop.f32.mrb[0].mxu0
    %v946 = vadd.f32 0.0, %v945
    %947 = vdwg.mxu0
    %v948 = vadd.f32 %v731, %v231
    %v949 = vadd.f32 %v733, %v233
    %v950 = vadd.f32 %v802, %v344
    %v951 = vadd.f32 %v804, %v346
    %v952 = vxor.u32 %v948, 2147483648
    %v953 = vxor.u32 %v949, 2147483648
    %v954 = vxor.u32 %v950, 2147483648
    %v955 = vmul.f32 %v952, 1.442695
    %v956 = vpow.pop %v955
    %v957 = vmul.f32 %v953, 1.442695
    %v958 = vpow.pop %v957
    %v959 = vmul.f32 %v954, 1.442695
    %v960 = vpow.pop %v959
    %v961 = vadd.f32 %v956, 1.0
    %v962 = vadd.f32 %v958, 1.0
    %v963 = vadd.f32 %v960, 1.0
    %v964 = vrcp.pop %v961
    %v965 = vmul.f32 1.0, %v964
    %v966 = vrcp.pop %v962
    %v967 = vmul.f32 1.0, %v966
    %v968 = vrcp.pop %v963
    %v969 = vmul.f32 1.0, %v968
    %v970 = vtanh.pop %v951
    %v971 = vmul.f32 %v967, %v661
    %v972 = vmul.f32 %v965, %v970
    %v973 = vadd.f32 %v971, %v972
    %v974 = vtanh.pop %v973
    %v975 = vmul.f32 %v969, %v974
    %s976 = scalar_lea.vmem %s3, 1
    %v977 = vld [vmem:[%s976] ss:$2 sm:$0xf]
    %v979 = vlaneseq
    %v980 = vshrl.u32 %v979, 7
    %v981 = vsub.s32 0, %v980
    %v982 = vrot.slane %v977, %v981
    %v983 = vlaneseq
    %v984 = vshrl.u32 %v983, 7
    %v985 = vsub.s32 1, %v984
    %v986 = vrot.slane %v977, %v985
    %v987 = vlaneseq
    %v988 = vshrl.u32 %v987, 7
    %v989 = vsub.s32 2, %v988
    %v990 = vrot.slane %v977, %v989
    %v991 = vlaneseq
    %v992 = vshrl.u32 %v991, 7
    %v993 = vsub.s32 3, %v992
    %v994 = vrot.slane %v977, %v993
    %v999 = vadd.f32 %v873, %v982
    %v1000 = vadd.f32 %v875, %v986
    %v1001 = vadd.f32 %v944, %v990
    %v1002 = vadd.f32 %v946, %v994
    %v1003 = vxor.u32 %v999, 2147483648
    %v1004 = vxor.u32 %v1000, 2147483648
    %v1005 = vxor.u32 %v1001, 2147483648
    %v1006 = vmul.f32 %v1003, 1.442695
    %v1007 = vpow.pop %v1006
    %v1008 = vmul.f32 %v1004, 1.442695
    %v1009 = vpow.pop %v1008
    %v1010 = vmul.f32 %v1005, 1.442695
    %v1011 = vpow.pop %v1010
    %v1012 = vadd.f32 %v1007, 1.0
    %v1013 = vadd.f32 %v1009, 1.0
    %v1014 = vadd.f32 %v1011, 1.0
    %v1015 = vrcp.pop %v1012
    %v1016 = vmul.f32 1.0, %v1015
    %v1017 = vrcp.pop %v1013
    %v1018 = vmul.f32 1.0, %v1017
    %v1019 = vrcp.pop %v1014
    %v1020 = vmul.f32 1.0, %v1019
    %v1021 = vtanh.pop %v1002
    %v1022 = vmul.f32 %v1018, 0.0
    %v1023 = vmul.f32 %v1016, %v1021
    %v1024 = vadd.f32 %v1022, %v1023
    %v1025 = vtanh.pop %v1024
    %v1026 = vmul.f32 %v1020, %v1025
    %1027 = vmatprep.subr.mxu0 %v385
    %1028 = vmatpush1.msra.mxu0 %v384
    %1029 = vmatprep.subr.mxu0 %v393
    %1030 = vmatpush1.msra.mxu0 %v392
    %1031 = vmatprep.subr.mxu0 %v401
    %1032 = vmatpush1.msra.mxu0 %v400
    %1033 = vmatprep.subr.mxu0 %v409
    %1034 = vmatpush1.msra.mxu0 %v408
    %1035 = vmatprep.subr.mxu0 %v417
    %1036 = vmatpush1.msra.mxu0 %v416
    %1037 = vmatprep.subr.mxu0 %v425
    %1038 = vmatpush1.msra.mxu0 %v424
    %1039 = vmatprep.subr.mxu0 %v433
    %1040 = vmatpush1.msra.mxu0 %v432
    %1041 = vmatprep.subr.mxu0 %v441
    %1042 = vmatpush1.msra.mxu0 %v440
    %1043 = vmatprep.subr.mxu0 %v449
    %1044 = vmatpush1.msra.mxu0 %v448
    %1045 = vmatprep.subr.mxu0 %v457
    %1046 = vmatpush1.msra.mxu0 %v456
    %1047 = vmatprep.subr.mxu0 %v465
    %1048 = vmatpush1.msra.mxu0 %v464
    %1049 = vmatprep.subr.mxu0 %v473
    %1050 = vmatpush1.msra.mxu0 %v472
    %1051 = vmatprep.subr.mxu0 %v481
    %1052 = vmatpush1.msra.mxu0 %v480
    %1053 = vmatprep.subr.mxu0 %v489
    %1054 = vmatpush1.msra.mxu0 %v488
    %1055 = vmatprep.subr.mxu0 %v497
    %1056 = vmatpush1.msra.mxu0 %v496
    %1057 = vmatprep.subr.mxu0 %v505
    %1058 = vmatpush1.msra.mxu0 %v504
    %1059 = vmatprep.subr.mxu0 %v513
    %1060 = vmatpush1.msra.mxu0 %v512
    %1061 = vmatprep.subr.mxu0 %v521
    %1062 = vmatpush1.msra.mxu0 %v520
    %1063 = vmatprep.subr.mxu0 %v529
    %1064 = vmatpush1.msra.mxu0 %v528
    %1065 = vmatprep.subr.mxu0 %v537
    %1066 = vmatpush1.msra.mxu0 %v536
    %1067 = vmatprep.subr.mxu0 %v545
    %1068 = vmatpush1.msra.mxu0 %v544
    %1069 = vmatprep.subr.mxu0 %v553
    %1070 = vmatpush1.msra.mxu0 %v552
    %1071 = vmatprep.subr.mxu0 %v561
    %1072 = vmatpush1.msra.mxu0 %v560
    %1073 = vmatprep.subr.mxu0 %v569
    %1074 = vmatpush1.msra.mxu0 %v568
    %1075 = vmatprep.subr.mxu0 %v577
    %1076 = vmatpush1.msra.mxu0 %v576
    %1077 = vmatprep.subr.mxu0 %v585
    %1078 = vmatpush1.msra.mxu0 %v584
    %1079 = vmatprep.subr.mxu0 %v593
    %1080 = vmatpush1.msra.mxu0 %v592
    %1081 = vmatprep.subr.mxu0 %v601
    %1082 = vmatpush1.msra.mxu0 %v600
    %1083 = vmatprep.subr.mxu0 %v609
    %1084 = vmatpush1.msra.mxu0 %v608
    %1085 = vmatprep.subr.mxu0 %v617
    %1086 = vmatpush1.msra.mxu0 %v616
    %1087 = vmatprep.subr.mxu0 %v625
    %1088 = vmatpush1.msra.mxu0 %v624
    %1089 = vmatprep.subr.mxu0 %v633
    %1090 = vmatpush1.msra.mxu0 %v632
    %1091 = vmatprep.mubr.f32.mxu0 %v1026
    %1092 = vmatmul.mubr.f32.gmra.mrb[0].mxu0 %v975
    %v1093 = vpop.f32.mrb[0].mxu0
    %v1094 = vadd.f32 0.0, %v1093
    %v1095 = vpop.f32.mrb[0].mxu0
    %v1096 = vadd.f32 0.0, %v1095
    %1097 = vdwg.mxu0
    %1098 = vmatprep.subr.mxu0 %v387
    %1099 = vmatpush1.msra.mxu0 %v386
    %1100 = vmatprep.subr.mxu0 %v395
    %1101 = vmatpush1.msra.mxu0 %v394
    %1102 = vmatprep.subr.mxu0 %v403
    %1103 = vmatpush1.msra.mxu0 %v402
    %1104 = vmatprep.subr.mxu0 %v411
    %1105 = vmatpush1.msra.mxu0 %v410
    %1106 = vmatprep.subr.mxu0 %v419
    %1107 = vmatpush1.msra.mxu0 %v418
    %1108 = vmatprep.subr.mxu0 %v427
    %1109 = vmatpush1.msra.mxu0 %v426
    %1110 = vmatprep.subr.mxu0 %v435
    %1111 = vmatpush1.msra.mxu0 %v434
    %1112 = vmatprep.subr.mxu0 %v443
    %1113 = vmatpush1.msra.mxu0 %v442
    %1114 = vmatprep.subr.mxu0 %v451
    %1115 = vmatpush1.msra.mxu0 %v450
    %1116 = vmatprep.subr.mxu0 %v459
    %1117 = vmatpush1.msra.mxu0 %v458
    %1118 = vmatprep.subr.mxu0 %v467
    %1119 = vmatpush1.msra.mxu0 %v466
    %1120 = vmatprep.subr.mxu0 %v475
    %1121 = vmatpush1.msra.mxu0 %v474
    %1122 = vmatprep.subr.mxu0 %v483
    %1123 = vmatpush1.msra.mxu0 %v482
    %1124 = vmatprep.subr.mxu0 %v491
    %1125 = vmatpush1.msra.mxu0 %v490
    %1126 = vmatprep.subr.mxu0 %v499
    %1127 = vmatpush1.msra.mxu0 %v498
    %1128 = vmatprep.subr.mxu0 %v507
    %1129 = vmatpush1.msra.mxu0 %v506
    %1130 = vmatprep.subr.mxu0 %v515
    %1131 = vmatpush1.msra.mxu0 %v514
    %1132 = vmatprep.subr.mxu0 %v523
    %1133 = vmatpush1.msra.mxu0 %v522
    %1134 = vmatprep.subr.mxu0 %v531
    %1135 = vmatpush1.msra.mxu0 %v530
    %1136 = vmatprep.subr.mxu0 %v539
    %1137 = vmatpush1.msra.mxu0 %v538
    %1138 = vmatprep.subr.mxu0 %v547
    %1139 = vmatpush1.msra.mxu0 %v546
    %1140 = vmatprep.subr.mxu0 %v555
    %1141 = vmatpush1.msra.mxu0 %v554
    %1142 = vmatprep.subr.mxu0 %v563
    %1143 = vmatpush1.msra.mxu0 %v562
    %1144 = vmatprep.subr.mxu0 %v571
    %1145 = vmatpush1.msra.mxu0 %v570
    %1146 = vmatprep.subr.mxu0 %v579
    %1147 = vmatpush1.msra.mxu0 %v578
    %1148 = vmatprep.subr.mxu0 %v587
    %1149 = vmatpush1.msra.mxu0 %v586
    %1150 = vmatprep.subr.mxu0 %v595
    %1151 = vmatpush1.msra.mxu0 %v594
    %1152 = vmatprep.subr.mxu0 %v603
    %1153 = vmatpush1.msra.mxu0 %v602
    %1154 = vmatprep.subr.mxu0 %v611
    %1155 = vmatpush1.msra.mxu0 %v610
    %1156 = vmatprep.subr.mxu0 %v619
    %1157 = vmatpush1.msra.mxu0 %v618
    %1158 = vmatprep.subr.mxu0 %v627
    %1159 = vmatpush1.msra.mxu0 %v626
    %1160 = vmatprep.subr.mxu0 %v635
    %1161 = vmatpush1.msra.mxu0 %v634
    %1162 = vmatprep.mubr.f32.mxu0 %v1026
    %1163 = vmatmul.mubr.f32.gmra.mrb[0].mxu0 %v975
    %v1164 = vpop.f32.mrb[0].mxu0
    %v1165 = vadd.f32 0.0, %v1164
    %v1166 = vpop.f32.mrb[0].mxu0
    %v1167 = vadd.f32 0.0, %v1166
    %1168 = vdwg.mxu0
    %1169 = vmatprep.subr.mxu0 %v389
    %1170 = vmatpush1.msra.mxu0 %v388
    %1171 = vmatprep.subr.mxu0 %v397
    %1172 = vmatpush1.msra.mxu0 %v396
    %1173 = vmatprep.subr.mxu0 %v405
    %1174 = vmatpush1.msra.mxu0 %v404
    %1175 = vmatprep.subr.mxu0 %v413
    %1176 = vmatpush1.msra.mxu0 %v412
    %1177 = vmatprep.subr.mxu0 %v421
    %1178 = vmatpush1.msra.mxu0 %v420
    %1179 = vmatprep.subr.mxu0 %v429
    %1180 = vmatpush1.msra.mxu0 %v428
    %1181 = vmatprep.subr.mxu0 %v437
    %1182 = vmatpush1.msra.mxu0 %v436
    %1183 = vmatprep.subr.mxu0 %v445
    %1184 = vmatpush1.msra.mxu0 %v444
    %1185 = vmatprep.subr.mxu0 %v453
    %1186 = vmatpush1.msra.mxu0 %v452
    %1187 = vmatprep.subr.mxu0 %v461
    %1188 = vmatpush1.msra.mxu0 %v460
    %1189 = vmatprep.subr.mxu0 %v469
    %1190 = vmatpush1.msra.mxu0 %v468
    %1191 = vmatprep.subr.mxu0 %v477
    %1192 = vmatpush1.msra.mxu0 %v476
    %1193 = vmatprep.subr.mxu0 %v485
    %1194 = vmatpush1.msra.mxu0 %v484
    %1195 = vmatprep.subr.mxu0 %v493
    %1196 = vmatpush1.msra.mxu0 %v492
    %1197 = vmatprep.subr.mxu0 %v501
    %1198 = vmatpush1.msra.mxu0 %v500
    %1199 = vmatprep.subr.mxu0 %v509
    %1200 = vmatpush1.msra.mxu0 %v508
    %1201 = vmatprep.subr.mxu0 %v517
    %1202 = vmatpush1.msra.mxu0 %v516
    %1203 = vmatprep.subr.mxu0 %v525
    %1204 = vmatpush1.msra.mxu0 %v524
    %1205 = vmatprep.subr.mxu0 %v533
    %1206 = vmatpush1.msra.mxu0 %v532
    %1207 = vmatprep.subr.mxu0 %v541
    %1208 = vmatpush1.msra.mxu0 %v540
    %1209 = vmatprep.subr.mxu0 %v549
    %1210 = vmatpush1.msra.mxu0 %v548
    %1211 = vmatprep.subr.mxu0 %v557
    %1212 = vmatpush1.msra.mxu0 %v556
    %1213 = vmatprep.subr.mxu0 %v565
    %1214 = vmatpush1.msra.mxu0 %v564
    %1215 = vmatprep.subr.mxu0 %v573
    %1216 = vmatpush1.msra.mxu0 %v572
    %1217 = vmatprep.subr.mxu0 %v581
    %1218 = vmatpush1.msra.mxu0 %v580
    %1219 = vmatprep.subr.mxu0 %v589
    %1220 = vmatpush1.msra.mxu0 %v588
    %1221 = vmatprep.subr.mxu0 %v597
    %1222 = vmatpush1.msra.mxu0 %v596
    %1223 = vmatprep.subr.mxu0 %v605
    %1224 = vmatpush1.msra.mxu0 %v604
    %1225 = vmatprep.subr.mxu0 %v613
    %1226 = vmatpush1.msra.mxu0 %v612
    %1227 = vmatprep.subr.mxu0 %v621
    %1228 = vmatpush1.msra.mxu0 %v620
    %1229 = vmatprep.subr.mxu0 %v629
    %1230 = vmatpush1.msra.mxu0 %v628
    %1231 = vmatprep.subr.mxu0 %v637
    %1232 = vmatpush1.msra.mxu0 %v636
    %1233 = vmatprep.mubr.f32.mxu0 %v1026
    %1234 = vmatmul.mubr.f32.gmra.mrb[0].mxu0 %v975
    %v1235 = vpop.f32.mrb[0].mxu0
    %v1236 = vadd.f32 0.0, %v1235
    %v1237 = vpop.f32.mrb[0].mxu0
    %v1238 = vadd.f32 0.0, %v1237
    %1239 = vdwg.mxu0
    %1240 = vmatprep.subr.mxu0 %v391
    %1241 = vmatpush1.msra.mxu0 %v390
    %1242 = vmatprep.subr.mxu0 %v399
    %1243 = vmatpush1.msra.mxu0 %v398
    %1244 = vmatprep.subr.mxu0 %v407
    %1245 = vmatpush1.msra.mxu0 %v406
    %1246 = vmatprep.subr.mxu0 %v415
    %1247 = vmatpush1.msra.mxu0 %v414
    %1248 = vmatprep.subr.mxu0 %v423
    %1249 = vmatpush1.msra.mxu0 %v422
    %1250 = vmatprep.subr.mxu0 %v431
    %1251 = vmatpush1.msra.mxu0 %v430
    %1252 = vmatprep.subr.mxu0 %v439
    %1253 = vmatpush1.msra.mxu0 %v438
    %1254 = vmatprep.subr.mxu0 %v447
    %1255 = vmatpush1.msra.mxu0 %v446
    %1256 = vmatprep.subr.mxu0 %v455
    %1257 = vmatpush1.msra.mxu0 %v454
    %1258 = vmatprep.subr.mxu0 %v463
    %1259 = vmatpush1.msra.mxu0 %v462
    %1260 = vmatprep.subr.mxu0 %v471
    %1261 = vmatpush1.msra.mxu0 %v470
    %1262 = vmatprep.subr.mxu0 %v479
    %1263 = vmatpush1.msra.mxu0 %v478
    %1264 = vmatprep.subr.mxu0 %v487
    %1265 = vmatpush1.msra.mxu0 %v486
    %1266 = vmatprep.subr.mxu0 %v495
    %1267 = vmatpush1.msra.mxu0 %v494
    %1268 = vmatprep.subr.mxu0 %v503
    %1269 = vmatpush1.msra.mxu0 %v502
    %1270 = vmatprep.subr.mxu0 %v511
    %1271 = vmatpush1.msra.mxu0 %v510
    %1272 = vmatprep.subr.mxu0 %v519
    %1273 = vmatpush1.msra.mxu0 %v518
    %1274 = vmatprep.subr.mxu0 %v527
    %1275 = vmatpush1.msra.mxu0 %v526
    %1276 = vmatprep.subr.mxu0 %v535
    %1277 = vmatpush1.msra.mxu0 %v534
    %1278 = vmatprep.subr.mxu0 %v543
    %1279 = vmatpush1.msra.mxu0 %v542
    %1280 = vmatprep.subr.mxu0 %v551
    %1281 = vmatpush1.msra.mxu0 %v550
    %1282 = vmatprep.subr.mxu0 %v559
    %1283 = vmatpush1.msra.mxu0 %v558
    %1284 = vmatprep.subr.mxu0 %v567
    %1285 = vmatpush1.msra.mxu0 %v566
    %1286 = vmatprep.subr.mxu0 %v575
    %1287 = vmatpush1.msra.mxu0 %v574
    %1288 = vmatprep.subr.mxu0 %v583
    %1289 = vmatpush1.msra.mxu0 %v582
    %1290 = vmatprep.subr.mxu0 %v591
    %1291 = vmatpush1.msra.mxu0 %v590
    %1292 = vmatprep.subr.mxu0 %v599
    %1293 = vmatpush1.msra.mxu0 %v598
    %1294 = vmatprep.subr.mxu0 %v607
    %1295 = vmatpush1.msra.mxu0 %v606
    %1296 = vmatprep.subr.mxu0 %v615
    %1297 = vmatpush1.msra.mxu0 %v614
    %1298 = vmatprep.subr.mxu0 %v623
    %1299 = vmatpush1.msra.mxu0 %v622
    %1300 = vmatprep.subr.mxu0 %v631
    %1301 = vmatpush1.msra.mxu0 %v630
    %1302 = vmatprep.subr.mxu0 %v639
    %1303 = vmatpush1.msra.mxu0 %v638
    %1304 = vmatprep.mubr.f32.mxu0 %v1026
    %1305 = vmatmul.mubr.f32.gmra.mrb[0].mxu0 %v975
    %v1306 = vpop.f32.mrb[0].mxu0
    %v1307 = vadd.f32 0.0, %v1306
    %v1308 = vpop.f32.mrb[0].mxu0
    %v1309 = vadd.f32 0.0, %v1308
    %1310 = vdwg.mxu0
    %v1311 = vadd.f32 %v1094, %v237
    %v1312 = vadd.f32 %v1096, %v239
    %v1313 = vadd.f32 %v1165, %v350
    %v1314 = vadd.f32 %v1167, %v352
    %v1315 = vxor.u32 %v1311, 2147483648
    %v1316 = vxor.u32 %v1312, 2147483648
    %v1317 = vxor.u32 %v1313, 2147483648
    %v1318 = vmul.f32 %v1315, 1.442695
    %v1319 = vpow.pop %v1318
    %v1320 = vmul.f32 %v1316, 1.442695
    %v1321 = vpow.pop %v1320
    %v1322 = vmul.f32 %v1317, 1.442695
    %v1323 = vpow.pop %v1322
    %v1324 = vadd.f32 %v1319, 1.0
    %v1325 = vadd.f32 %v1321, 1.0
    %v1326 = vadd.f32 %v1323, 1.0
    %v1327 = vrcp.pop %v1324
    %v1328 = vmul.f32 1.0, %v1327
    %v1329 = vrcp.pop %v1325
    %v1330 = vmul.f32 1.0, %v1329
    %v1331 = vrcp.pop %v1326
    %v1332 = vmul.f32 1.0, %v1331
    %v1333 = vtanh.pop %v1314
    %v1334 = vmul.f32 %v1330, %v973
    %v1335 = vmul.f32 %v1328, %v1333
    %v1336 = vadd.f32 %v1334, %v1335
    %v1337 = vtanh.pop %v1336
    %v1338 = vmul.f32 %v1332, %v1337
    %v1339 = vadd.f32 %v1236, %v982
    %v1340 = vadd.f32 %v1238, %v986
    %v1341 = vadd.f32 %v1307, %v990
    %v1342 = vadd.f32 %v1309, %v994
    %v1343 = vxor.u32 %v1339, 2147483648
    %v1344 = vxor.u32 %v1340, 2147483648
    %v1345 = vxor.u32 %v1341, 2147483648
    %v1346 = vmul.f32 %v1343, 1.442695
    %v1347 = vpow.pop %v1346
    %v1348 = vmul.f32 %v1344, 1.442695
    %v1349 = vpow.pop %v1348
    %v1350 = vmul.f32 %v1345, 1.442695
    %v1351 = vpow.pop %v1350
    %v1352 = vadd.f32 %v1347, 1.0
    %v1353 = vadd.f32 %v1349, 1.0
    %v1354 = vadd.f32 %v1351, 1.0
    %v1355 = vrcp.pop %v1352
    %v1356 = vmul.f32 1.0, %v1355
    %v1357 = vrcp.pop %v1353
    %v1358 = vmul.f32 1.0, %v1357
    %v1359 = vrcp.pop %v1354
    %v1360 = vmul.f32 1.0, %v1359
    %v1361 = vtanh.pop %v1342
    %v1362 = vmul.f32 %v1358, %v1024
    %v1363 = vmul.f32 %v1356, %v1361
    %v1364 = vadd.f32 %v1362, %v1363
    %v1365 = vtanh.pop %v1364
    %v1366 = vmul.f32 %v1360, %v1365
    %1367 = vmatprep.subr.mxu0 %v385
    %1368 = vmatpush1.msra.mxu0 %v384
    %1369 = vmatprep.subr.mxu0 %v393
    %1370 = vmatpush1.msra.mxu0 %v392
    %1371 = vmatprep.subr.mxu0 %v401
    %1372 = vmatpush1.msra.mxu0 %v400
    %1373 = vmatprep.subr.mxu0 %v409
    %1374 = vmatpush1.msra.mxu0 %v408
    %1375 = vmatprep.subr.mxu0 %v417
    %1376 = vmatpush1.msra.mxu0 %v416
    %1377 = vmatprep.subr.mxu0 %v425
    %1378 = vmatpush1.msra.mxu0 %v424
    %1379 = vmatprep.subr.mxu0 %v433
    %1380 = vmatpush1.msra.mxu0 %v432
    %1381 = vmatprep.subr.mxu0 %v441
    %1382 = vmatpush1.msra.mxu0 %v440
    %1383 = vmatprep.subr.mxu0 %v449
    %1384 = vmatpush1.msra.mxu0 %v448
    %1385 = vmatprep.subr.mxu0 %v457
    %1386 = vmatpush1.msra.mxu0 %v456
    %1387 = vmatprep.subr.mxu0 %v465
    %1388 = vmatpush1.msra.mxu0 %v464
    %1389 = vmatprep.subr.mxu0 %v473
    %1390 = vmatpush1.msra.mxu0 %v472
    %1391 = vmatprep.subr.mxu0 %v481
    %1392 = vmatpush1.msra.mxu0 %v480
    %1393 = vmatprep.subr.mxu0 %v489
    %1394 = vmatpush1.msra.mxu0 %v488
    %1395 = vmatprep.subr.mxu0 %v497
    %1396 = vmatpush1.msra.mxu0 %v496
    %1397 = vmatprep.subr.mxu0 %v505
    %1398 = vmatpush1.msra.mxu0 %v504
    %1399 = vmatprep.subr.mxu0 %v513
    %1400 = vmatpush1.msra.mxu0 %v512
    %1401 = vmatprep.subr.mxu0 %v521
    %1402 = vmatpush1.msra.mxu0 %v520
    %1403 = vmatprep.subr.mxu0 %v529
    %1404 = vmatpush1.msra.mxu0 %v528
    %1405 = vmatprep.subr.mxu0 %v537
    %1406 = vmatpush1.msra.mxu0 %v536
    %1407 = vmatprep.subr.mxu0 %v545
    %1408 = vmatpush1.msra.mxu0 %v544
    %1409 = vmatprep.subr.mxu0 %v553
    %1410 = vmatpush1.msra.mxu0 %v552
    %1411 = vmatprep.subr.mxu0 %v561
    %1412 = vmatpush1.msra.mxu0 %v560
    %1413 = vmatprep.subr.mxu0 %v569
    %1414 = vmatpush1.msra.mxu0 %v568
    %1415 = vmatprep.subr.mxu0 %v577
    %1416 = vmatpush1.msra.mxu0 %v576
    %1417 = vmatprep.subr.mxu0 %v585
    %1418 = vmatpush1.msra.mxu0 %v584
    %1419 = vmatprep.subr.mxu0 %v593
    %1420 = vmatpush1.msra.mxu0 %v592
    %1421 = vmatprep.subr.mxu0 %v601
    %1422 = vmatpush1.msra.mxu0 %v600
    %1423 = vmatprep.subr.mxu0 %v609
    %1424 = vmatpush1.msra.mxu0 %v608
    %1425 = vmatprep.subr.mxu0 %v617
    %1426 = vmatpush1.msra.mxu0 %v616
    %1427 = vmatprep.subr.mxu0 %v625
    %1428 = vmatpush1.msra.mxu0 %v624
    %1429 = vmatprep.subr.mxu0 %v633
    %1430 = vmatpush1.msra.mxu0 %v632
    %1431 = vmatprep.mubr.f32.mxu0 %v1366
    %1432 = vmatmul.mubr.f32.gmra.mrb[0].mxu0 %v1338
    %v1433 = vpop.f32.mrb[0].mxu0
    %v1434 = vadd.f32 0.0, %v1433
    %v1435 = vpop.f32.mrb[0].mxu0
    %v1436 = vadd.f32 0.0, %v1435
    %1437 = vdwg.mxu0
    %1438 = vmatprep.subr.mxu0 %v387
    %1439 = vmatpush1.msra.mxu0 %v386
    %1440 = vmatprep.subr.mxu0 %v395
    %1441 = vmatpush1.msra.mxu0 %v394
    %1442 = vmatprep.subr.mxu0 %v403
    %1443 = vmatpush1.msra.mxu0 %v402
    %1444 = vmatprep.subr.mxu0 %v411
    %1445 = vmatpush1.msra.mxu0 %v410
    %1446 = vmatprep.subr.mxu0 %v419
    %1447 = vmatpush1.msra.mxu0 %v418
    %1448 = vmatprep.subr.mxu0 %v427
    %1449 = vmatpush1.msra.mxu0 %v426
    %1450 = vmatprep.subr.mxu0 %v435
    %1451 = vmatpush1.msra.mxu0 %v434
    %1452 = vmatprep.subr.mxu0 %v443
    %1453 = vmatpush1.msra.mxu0 %v442
    %1454 = vmatprep.subr.mxu0 %v451
    %1455 = vmatpush1.msra.mxu0 %v450
    %1456 = vmatprep.subr.mxu0 %v459
    %1457 = vmatpush1.msra.mxu0 %v458
    %1458 = vmatprep.subr.mxu0 %v467
    %1459 = vmatpush1.msra.mxu0 %v466
    %1460 = vmatprep.subr.mxu0 %v475
    %1461 = vmatpush1.msra.mxu0 %v474
    %1462 = vmatprep.subr.mxu0 %v483
    %1463 = vmatpush1.msra.mxu0 %v482
    %1464 = vmatprep.subr.mxu0 %v491
    %1465 = vmatpush1.msra.mxu0 %v490
    %1466 = vmatprep.subr.mxu0 %v499
    %1467 = vmatpush1.msra.mxu0 %v498
    %1468 = vmatprep.subr.mxu0 %v507
    %1469 = vmatpush1.msra.mxu0 %v506
    %1470 = vmatprep.subr.mxu0 %v515
    %1471 = vmatpush1.msra.mxu0 %v514
    %1472 = vmatprep.subr.mxu0 %v523
    %1473 = vmatpush1.msra.mxu0 %v522
    %1474 = vmatprep.subr.mxu0 %v531
    %1475 = vmatpush1.msra.mxu0 %v530
    %1476 = vmatprep.subr.mxu0 %v539
    %1477 = vmatpush1.msra.mxu0 %v538
    %1478 = vmatprep.subr.mxu0 %v547
    %1479 = vmatpush1.msra.mxu0 %v546
    %1480 = vmatprep.subr.mxu0 %v555
    %1481 = vmatpush1.msra.mxu0 %v554
    %1482 = vmatprep.subr.mxu0 %v563
    %1483 = vmatpush1.msra.mxu0 %v562
    %1484 = vmatprep.subr.mxu0 %v571
    %1485 = vmatpush1.msra.mxu0 %v570
    %1486 = vmatprep.subr.mxu0 %v579
    %1487 = vmatpush1.msra.mxu0 %v578
    %1488 = vmatprep.subr.mxu0 %v587
    %1489 = vmatpush1.msra.mxu0 %v586
    %1490 = vmatprep.subr.mxu0 %v595
    %1491 = vmatpush1.msra.mxu0 %v594
    %1492 = vmatprep.subr.mxu0 %v603
    %1493 = vmatpush1.msra.mxu0 %v602
    %1494 = vmatprep.subr.mxu0 %v611
    %1495 = vmatpush1.msra.mxu0 %v610
    %1496 = vmatprep.subr.mxu0 %v619
    %1497 = vmatpush1.msra.mxu0 %v618
    %1498 = vmatprep.subr.mxu0 %v627
    %1499 = vmatpush1.msra.mxu0 %v626
    %1500 = vmatprep.subr.mxu0 %v635
    %1501 = vmatpush1.msra.mxu0 %v634
    %1502 = vmatprep.mubr.f32.mxu0 %v1366
    %1503 = vmatmul.mubr.f32.gmra.mrb[0].mxu0 %v1338
    %v1504 = vpop.f32.mrb[0].mxu0
    %v1505 = vadd.f32 0.0, %v1504
    %v1506 = vpop.f32.mrb[0].mxu0
    %v1507 = vadd.f32 0.0, %v1506
    %1508 = vdwg.mxu0
    %1509 = vmatprep.subr.mxu0 %v389
    %1510 = vmatpush1.msra.mxu0 %v388
    %1511 = vmatprep.subr.mxu0 %v397
    %1512 = vmatpush1.msra.mxu0 %v396
    %1513 = vmatprep.subr.mxu0 %v405
    %1514 = vmatpush1.msra.mxu0 %v404
    %1515 = vmatprep.subr.mxu0 %v413
    %1516 = vmatpush1.msra.mxu0 %v412
    %1517 = vmatprep.subr.mxu0 %v421
    %1518 = vmatpush1.msra.mxu0 %v420
    %1519 = vmatprep.subr.mxu0 %v429
    %1520 = vmatpush1.msra.mxu0 %v428
    %1521 = vmatprep.subr.mxu0 %v437
    %1522 = vmatpush1.msra.mxu0 %v436
    %1523 = vmatprep.subr.mxu0 %v445
    %1524 = vmatpush1.msra.mxu0 %v444
    %1525 = vmatprep.subr.mxu0 %v453
    %1526 = vmatpush1.msra.mxu0 %v452
    %1527 = vmatprep.subr.mxu0 %v461
    %1528 = vmatpush1.msra.mxu0 %v460
    %1529 = vmatprep.subr.mxu0 %v469
    %1530 = vmatpush1.msra.mxu0 %v468
    %1531 = vmatprep.subr.mxu0 %v477
    %1532 = vmatpush1.msra.mxu0 %v476
    %1533 = vmatprep.subr.mxu0 %v485
    %1534 = vmatpush1.msra.mxu0 %v484
    %1535 = vmatprep.subr.mxu0 %v493
    %1536 = vmatpush1.msra.mxu0 %v492
    %1537 = vmatprep.subr.mxu0 %v501
    %1538 = vmatpush1.msra.mxu0 %v500
    %1539 = vmatprep.subr.mxu0 %v509
    %1540 = vmatpush1.msra.mxu0 %v508
    %1541 = vmatprep.subr.mxu0 %v517
    %1542 = vmatpush1.msra.mxu0 %v516
    %1543 = vmatprep.subr.mxu0 %v525
    %1544 = vmatpush1.msra.mxu0 %v524
    %1545 = vmatprep.subr.mxu0 %v533
    %1546 = vmatpush1.msra.mxu0 %v532
    %1547 = vmatprep.subr.mxu0 %v541
    %1548 = vmatpush1.msra.mxu0 %v540
    %1549 = vmatprep.subr.mxu0 %v549
    %1550 = vmatpush1.msra.mxu0 %v548
    %1551 = vmatprep.subr.mxu0 %v557
    %1552 = vmatpush1.msra.mxu0 %v556
    %1553 = vmatprep.subr.mxu0 %v565
    %1554 = vmatpush1.msra.mxu0 %v564
    %1555 = vmatprep.subr.mxu0 %v573
    %1556 = vmatpush1.msra.mxu0 %v572
    %1557 = vmatprep.subr.mxu0 %v581
    %1558 = vmatpush1.msra.mxu0 %v580
    %1559 = vmatprep.subr.mxu0 %v589
    %1560 = vmatpush1.msra.mxu0 %v588
    %1561 = vmatprep.subr.mxu0 %v597
    %1562 = vmatpush1.msra.mxu0 %v596
    %1563 = vmatprep.subr.mxu0 %v605
    %1564 = vmatpush1.msra.mxu0 %v604
    %1565 = vmatprep.subr.mxu0 %v613
    %1566 = vmatpush1.msra.mxu0 %v612
    %1567 = vmatprep.subr.mxu0 %v621
    %1568 = vmatpush1.msra.mxu0 %v620
    %1569 = vmatprep.subr.mxu0 %v629
    %1570 = vmatpush1.msra.mxu0 %v628
    %1571 = vmatprep.subr.mxu0 %v637
    %1572 = vmatpush1.msra.mxu0 %v636
    %1573 = vmatprep.mubr.f32.mxu0 %v1366
    %1574 = vmatmul.mubr.f32.gmra.mrb[0].mxu0 %v1338
    %v1575 = vpop.f32.mrb[0].mxu0
    %v1576 = vadd.f32 0.0, %v1575
    %v1577 = vpop.f32.mrb[0].mxu0
    %v1578 = vadd.f32 0.0, %v1577
    %1579 = vdwg.mxu0
    %1580 = vmatprep.subr.mxu0 %v391
    %1581 = vmatpush1.msra.mxu0 %v390
    %1582 = vmatprep.subr.mxu0 %v399
    %1583 = vmatpush1.msra.mxu0 %v398
    %1584 = vmatprep.subr.mxu0 %v407
    %1585 = vmatpush1.msra.mxu0 %v406
    %1586 = vmatprep.subr.mxu0 %v415
    %1587 = vmatpush1.msra.mxu0 %v414
    %1588 = vmatprep.subr.mxu0 %v423
    %1589 = vmatpush1.msra.mxu0 %v422
    %1590 = vmatprep.subr.mxu0 %v431
    %1591 = vmatpush1.msra.mxu0 %v430
    %1592 = vmatprep.subr.mxu0 %v439
    %1593 = vmatpush1.msra.mxu0 %v438
    %1594 = vmatprep.subr.mxu0 %v447
    %1595 = vmatpush1.msra.mxu0 %v446
    %1596 = vmatprep.subr.mxu0 %v455
    %1597 = vmatpush1.msra.mxu0 %v454
    %1598 = vmatprep.subr.mxu0 %v463
    %1599 = vmatpush1.msra.mxu0 %v462
    %1600 = vmatprep.subr.mxu0 %v471
    %1601 = vmatpush1.msra.mxu0 %v470
    %1602 = vmatprep.subr.mxu0 %v479
    %1603 = vmatpush1.msra.mxu0 %v478
    %1604 = vmatprep.subr.mxu0 %v487
    %1605 = vmatpush1.msra.mxu0 %v486
    %1606 = vmatprep.subr.mxu0 %v495
    %1607 = vmatpush1.msra.mxu0 %v494
    %1608 = vmatprep.subr.mxu0 %v503
    %1609 = vmatpush1.msra.mxu0 %v502
    %1610 = vmatprep.subr.mxu0 %v511
    %1611 = vmatpush1.msra.mxu0 %v510
    %1612 = vmatprep.subr.mxu0 %v519
    %1613 = vmatpush1.msra.mxu0 %v518
    %1614 = vmatprep.subr.mxu0 %v527
    %1615 = vmatpush1.msra.mxu0 %v526
    %1616 = vmatprep.subr.mxu0 %v535
    %1617 = vmatpush1.msra.mxu0 %v534
    %1618 = vmatprep.subr.mxu0 %v543
    %1619 = vmatpush1.msra.mxu0 %v542
    %1620 = vmatprep.subr.mxu0 %v551
    %1621 = vmatpush1.msra.mxu0 %v550
    %1622 = vmatprep.subr.mxu0 %v559
    %1623 = vmatpush1.msra.mxu0 %v558
    %1624 = vmatprep.subr.mxu0 %v567
    %1625 = vmatpush1.msra.mxu0 %v566
    %1626 = vmatprep.subr.mxu0 %v575
    %1627 = vmatpush1.msra.mxu0 %v574
    %1628 = vmatprep.subr.mxu0 %v583
    %1629 = vmatpush1.msra.mxu0 %v582
    %1630 = vmatprep.subr.mxu0 %v591
    %1631 = vmatpush1.msra.mxu0 %v590
    %1632 = vmatprep.subr.mxu0 %v599
    %1633 = vmatpush1.msra.mxu0 %v598
    %1634 = vmatprep.subr.mxu0 %v607
    %1635 = vmatpush1.msra.mxu0 %v606
    %1636 = vmatprep.subr.mxu0 %v615
    %1637 = vmatpush1.msra.mxu0 %v614
    %1638 = vmatprep.subr.mxu0 %v623
    %1639 = vmatpush1.msra.mxu0 %v622
    %1640 = vmatprep.subr.mxu0 %v631
    %1641 = vmatpush1.msra.mxu0 %v630
    %1642 = vmatprep.subr.mxu0 %v639
    %1643 = vmatpush1.msra.mxu0 %v638
    %1644 = vmatprep.mubr.f32.mxu0 %v1366
    %1645 = vmatmul.mubr.f32.gmra.mrb[0].mxu0 %v1338
    %v1646 = vpop.f32.mrb[0].mxu0
    %v1647 = vadd.f32 0.0, %v1646
    %v1648 = vpop.f32.mrb[0].mxu0
    %v1649 = vadd.f32 0.0, %v1648
    %1650 = vdwg.mxu0
    %v1651 = vadd.f32 %v1434, %v243
    %v1652 = vadd.f32 %v1436, %v245
    %v1653 = vadd.f32 %v1505, %v356
    %v1654 = vadd.f32 %v1507, %v358
    %v1655 = vxor.u32 %v1651, 2147483648
    %v1656 = vxor.u32 %v1652, 2147483648
    %v1657 = vxor.u32 %v1653, 2147483648
    %v1658 = vmul.f32 %v1655, 1.442695
    %v1659 = vpow.pop %v1658
    %v1660 = vmul.f32 %v1656, 1.442695
    %v1661 = vpow.pop %v1660
    %v1662 = vmul.f32 %v1657, 1.442695
    %v1663 = vpow.pop %v1662
    %v1664 = vadd.f32 %v1659, 1.0
    %v1665 = vadd.f32 %v1661, 1.0
    %v1666 = vadd.f32 %v1663, 1.0
    %v1667 = vrcp.pop %v1664
    %v1668 = vmul.f32 1.0, %v1667
    %v1669 = vrcp.pop %v1665
    %v1670 = vmul.f32 1.0, %v1669
    %v1671 = vrcp.pop %v1666
    %v1672 = vmul.f32 1.0, %v1671
    %v1673 = vtanh.pop %v1654
    %v1674 = vmul.f32 %v1670, %v1336
    %v1675 = vmul.f32 %v1668, %v1673
    %v1676 = vadd.f32 %v1674, %v1675
    %v1677 = vtanh.pop %v1676
    %v1678 = vmul.f32 %v1672, %v1677
    %v1679 = vadd.f32 %v1576, %v982
    %v1680 = vadd.f32 %v1578, %v986
    %v1681 = vadd.f32 %v1647, %v990
    %v1682 = vadd.f32 %v1649, %v994
    %v1683 = vxor.u32 %v1679, 2147483648
    %v1684 = vxor.u32 %v1680, 2147483648
    %v1685 = vxor.u32 %v1681, 2147483648
    %v1686 = vmul.f32 %v1683, 1.442695
    %v1687 = vpow.pop %v1686
    %v1688 = vmul.f32 %v1684, 1.442695
    %v1689 = vpow.pop %v1688
    %v1690 = vmul.f32 %v1685, 1.442695
    %v1691 = vpow.pop %v1690
    %v1692 = vadd.f32 %v1687, 1.0
    %v1693 = vadd.f32 %v1689, 1.0
    %v1694 = vadd.f32 %v1691, 1.0
    %v1695 = vrcp.pop %v1692
    %v1696 = vmul.f32 1.0, %v1695
    %v1697 = vrcp.pop %v1693
    %v1698 = vmul.f32 1.0, %v1697
    %v1699 = vrcp.pop %v1694
    %v1700 = vmul.f32 1.0, %v1699
    %v1701 = vtanh.pop %v1682
    %v1702 = vmul.f32 %v1698, %v1364
    %v1703 = vmul.f32 %v1696, %v1701
    %v1704 = vadd.f32 %v1702, %v1703
    %v1705 = vtanh.pop %v1704
    %v1706 = vmul.f32 %v1700, %v1705
    %1707 = vmatprep.subr.mxu0 %v385
    %1708 = vmatpush1.msra.mxu0 %v384
    %1709 = vmatprep.subr.mxu0 %v393
    %1710 = vmatpush1.msra.mxu0 %v392
    %1711 = vmatprep.subr.mxu0 %v401
    %1712 = vmatpush1.msra.mxu0 %v400
    %1713 = vmatprep.subr.mxu0 %v409
    %1714 = vmatpush1.msra.mxu0 %v408
    %1715 = vmatprep.subr.mxu0 %v417
    %1716 = vmatpush1.msra.mxu0 %v416
    %1717 = vmatprep.subr.mxu0 %v425
    %1718 = vmatpush1.msra.mxu0 %v424
    %1719 = vmatprep.subr.mxu0 %v433
    %1720 = vmatpush1.msra.mxu0 %v432
    %1721 = vmatprep.subr.mxu0 %v441
    %1722 = vmatpush1.msra.mxu0 %v440
    %1723 = vmatprep.subr.mxu0 %v449
    %1724 = vmatpush1.msra.mxu0 %v448
    %1725 = vmatprep.subr.mxu0 %v457
    %1726 = vmatpush1.msra.mxu0 %v456
    %1727 = vmatprep.subr.mxu0 %v465
    %1728 = vmatpush1.msra.mxu0 %v464
    %1729 = vmatprep.subr.mxu0 %v473
    %1730 = vmatpush1.msra.mxu0 %v472
    %1731 = vmatprep.subr.mxu0 %v481
    %1732 = vmatpush1.msra.mxu0 %v480
    %1733 = vmatprep.subr.mxu0 %v489
    %1734 = vmatpush1.msra.mxu0 %v488
    %1735 = vmatprep.subr.mxu0 %v497
    %1736 = vmatpush1.msra.mxu0 %v496
    %1737 = vmatprep.subr.mxu0 %v505
    %1738 = vmatpush1.msra.mxu0 %v504
    %1739 = vmatprep.subr.mxu0 %v513
    %1740 = vmatpush1.msra.mxu0 %v512
    %1741 = vmatprep.subr.mxu0 %v521
    %1742 = vmatpush1.msra.mxu0 %v520
    %1743 = vmatprep.subr.mxu0 %v529
    %1744 = vmatpush1.msra.mxu0 %v528
    %1745 = vmatprep.subr.mxu0 %v537
    %1746 = vmatpush1.msra.mxu0 %v536
    %1747 = vmatprep.subr.mxu0 %v545
    %1748 = vmatpush1.msra.mxu0 %v544
    %1749 = vmatprep.subr.mxu0 %v553
    %1750 = vmatpush1.msra.mxu0 %v552
    %1751 = vmatprep.subr.mxu0 %v561
    %1752 = vmatpush1.msra.mxu0 %v560
    %1753 = vmatprep.subr.mxu0 %v569
    %1754 = vmatpush1.msra.mxu0 %v568
    %1755 = vmatprep.subr.mxu0 %v577
    %1756 = vmatpush1.msra.mxu0 %v576
    %1757 = vmatprep.subr.mxu0 %v585
    %1758 = vmatpush1.msra.mxu0 %v584
    %1759 = vmatprep.subr.mxu0 %v593
    %1760 = vmatpush1.msra.mxu0 %v592
    %1761 = vmatprep.subr.mxu0 %v601
    %1762 = vmatpush1.msra.mxu0 %v600
    %1763 = vmatprep.subr.mxu0 %v609
    %1764 = vmatpush1.msra.mxu0 %v608
    %1765 = vmatprep.subr.mxu0 %v617
    %1766 = vmatpush1.msra.mxu0 %v616
    %1767 = vmatprep.subr.mxu0 %v625
    %1768 = vmatpush1.msra.mxu0 %v624
    %1769 = vmatprep.subr.mxu0 %v633
    %1770 = vmatpush1.msra.mxu0 %v632
    %1771 = vmatprep.mubr.f32.mxu0 %v1706
    %1772 = vmatmul.mubr.f32.gmra.mrb[0].mxu0 %v1678
    %v1773 = vpop.f32.mrb[0].mxu0
    %v1774 = vadd.f32 0.0, %v1773
    %v1775 = vpop.f32.mrb[0].mxu0
    %v1776 = vadd.f32 0.0, %v1775
    %1777 = vdwg.mxu0
    %1778 = vmatprep.subr.mxu0 %v387
    %1779 = vmatpush1.msra.mxu0 %v386
    %1780 = vmatprep.subr.mxu0 %v395
    %1781 = vmatpush1.msra.mxu0 %v394
    %1782 = vmatprep.subr.mxu0 %v403
    %1783 = vmatpush1.msra.mxu0 %v402
    %1784 = vmatprep.subr.mxu0 %v411
    %1785 = vmatpush1.msra.mxu0 %v410
    %1786 = vmatprep.subr.mxu0 %v419
    %1787 = vmatpush1.msra.mxu0 %v418
    %1788 = vmatprep.subr.mxu0 %v427
    %1789 = vmatpush1.msra.mxu0 %v426
    %1790 = vmatprep.subr.mxu0 %v435
    %1791 = vmatpush1.msra.mxu0 %v434
    %1792 = vmatprep.subr.mxu0 %v443
    %1793 = vmatpush1.msra.mxu0 %v442
    %1794 = vmatprep.subr.mxu0 %v451
    %1795 = vmatpush1.msra.mxu0 %v450
    %1796 = vmatprep.subr.mxu0 %v459
    %1797 = vmatpush1.msra.mxu0 %v458
    %1798 = vmatprep.subr.mxu0 %v467
    %1799 = vmatpush1.msra.mxu0 %v466
    %1800 = vmatprep.subr.mxu0 %v475
    %1801 = vmatpush1.msra.mxu0 %v474
    %1802 = vmatprep.subr.mxu0 %v483
    %1803 = vmatpush1.msra.mxu0 %v482
    %1804 = vmatprep.subr.mxu0 %v491
    %1805 = vmatpush1.msra.mxu0 %v490
    %1806 = vmatprep.subr.mxu0 %v499
    %1807 = vmatpush1.msra.mxu0 %v498
    %1808 = vmatprep.subr.mxu0 %v507
    %1809 = vmatpush1.msra.mxu0 %v506
    %1810 = vmatprep.subr.mxu0 %v515
    %1811 = vmatpush1.msra.mxu0 %v514
    %1812 = vmatprep.subr.mxu0 %v523
    %1813 = vmatpush1.msra.mxu0 %v522
    %1814 = vmatprep.subr.mxu0 %v531
    %1815 = vmatpush1.msra.mxu0 %v530
    %1816 = vmatprep.subr.mxu0 %v539
    %1817 = vmatpush1.msra.mxu0 %v538
    %1818 = vmatprep.subr.mxu0 %v547
    %1819 = vmatpush1.msra.mxu0 %v546
    %1820 = vmatprep.subr.mxu0 %v555
    %1821 = vmatpush1.msra.mxu0 %v554
    %1822 = vmatprep.subr.mxu0 %v563
    %1823 = vmatpush1.msra.mxu0 %v562
    %1824 = vmatprep.subr.mxu0 %v571
    %1825 = vmatpush1.msra.mxu0 %v570
    %1826 = vmatprep.subr.mxu0 %v579
    %1827 = vmatpush1.msra.mxu0 %v578
    %1828 = vmatprep.subr.mxu0 %v587
    %1829 = vmatpush1.msra.mxu0 %v586
    %1830 = vmatprep.subr.mxu0 %v595
    %1831 = vmatpush1.msra.mxu0 %v594
    %1832 = vmatprep.subr.mxu0 %v603
    %1833 = vmatpush1.msra.mxu0 %v602
    %1834 = vmatprep.subr.mxu0 %v611
    %1835 = vmatpush1.msra.mxu0 %v610
    %1836 = vmatprep.subr.mxu0 %v619
    %1837 = vmatpush1.msra.mxu0 %v618
    %1838 = vmatprep.subr.mxu0 %v627
    %1839 = vmatpush1.msra.mxu0 %v626
    %1840 = vmatprep.subr.mxu0 %v635
    %1841 = vmatpush1.msra.mxu0 %v634
    %1842 = vmatprep.mubr.f32.mxu0 %v1706
    %1843 = vmatmul.mubr.f32.gmra.mrb[0].mxu0 %v1678
    %v1844 = vpop.f32.mrb[0].mxu0
    %v1845 = vadd.f32 0.0, %v1844
    %v1846 = vpop.f32.mrb[0].mxu0
    %v1847 = vadd.f32 0.0, %v1846
    %1848 = vdwg.mxu0
    %1849 = vmatprep.subr.mxu0 %v389
    %1850 = vmatpush1.msra.mxu0 %v388
    %1851 = vmatprep.subr.mxu0 %v397
    %1852 = vmatpush1.msra.mxu0 %v396
    %1853 = vmatprep.subr.mxu0 %v405
    %1854 = vmatpush1.msra.mxu0 %v404
    %1855 = vmatprep.subr.mxu0 %v413
    %1856 = vmatpush1.msra.mxu0 %v412
    %1857 = vmatprep.subr.mxu0 %v421
    %1858 = vmatpush1.msra.mxu0 %v420
    %1859 = vmatprep.subr.mxu0 %v429
    %1860 = vmatpush1.msra.mxu0 %v428
    %1861 = vmatprep.subr.mxu0 %v437
    %1862 = vmatpush1.msra.mxu0 %v436
    %1863 = vmatprep.subr.mxu0 %v445
    %1864 = vmatpush1.msra.mxu0 %v444
    %1865 = vmatprep.subr.mxu0 %v453
    %1866 = vmatpush1.msra.mxu0 %v452
    %1867 = vmatprep.subr.mxu0 %v461
    %1868 = vmatpush1.msra.mxu0 %v460
    %1869 = vmatprep.subr.mxu0 %v469
    %1870 = vmatpush1.msra.mxu0 %v468
    %1871 = vmatprep.subr.mxu0 %v477
    %1872 = vmatpush1.msra.mxu0 %v476
    %1873 = vmatprep.subr.mxu0 %v485
    %1874 = vmatpush1.msra.mxu0 %v484
    %1875 = vmatprep.subr.mxu0 %v493
    %1876 = vmatpush1.msra.mxu0 %v492
    %1877 = vmatprep.subr.mxu0 %v501
    %1878 = vmatpush1.msra.mxu0 %v500
    %1879 = vmatprep.subr.mxu0 %v509
    %1880 = vmatpush1.msra.mxu0 %v508
    %1881 = vmatprep.subr.mxu0 %v517
    %1882 = vmatpush1.msra.mxu0 %v516
    %1883 = vmatprep.subr.mxu0 %v525
    %1884 = vmatpush1.msra.mxu0 %v524
    %1885 = vmatprep.subr.mxu0 %v533
    %1886 = vmatpush1.msra.mxu0 %v532
    %1887 = vmatprep.subr.mxu0 %v541
    %1888 = vmatpush1.msra.mxu0 %v540
    %1889 = vmatprep.subr.mxu0 %v549
    %1890 = vmatpush1.msra.mxu0 %v548
    %1891 = vmatprep.subr.mxu0 %v557
    %1892 = vmatpush1.msra.mxu0 %v556
    %1893 = vmatprep.subr.mxu0 %v565
    %1894 = vmatpush1.msra.mxu0 %v564
    %1895 = vmatprep.subr.mxu0 %v573
    %1896 = vmatpush1.msra.mxu0 %v572
    %1897 = vmatprep.subr.mxu0 %v581
    %1898 = vmatpush1.msra.mxu0 %v580
    %1899 = vmatprep.subr.mxu0 %v589
    %1900 = vmatpush1.msra.mxu0 %v588
    %1901 = vmatprep.subr.mxu0 %v597
    %1902 = vmatpush1.msra.mxu0 %v596
    %1903 = vmatprep.subr.mxu0 %v605
    %1904 = vmatpush1.msra.mxu0 %v604
    %1905 = vmatprep.subr.mxu0 %v613
    %1906 = vmatpush1.msra.mxu0 %v612
    %1907 = vmatprep.subr.mxu0 %v621
    %1908 = vmatpush1.msra.mxu0 %v620
    %1909 = vmatprep.subr.mxu0 %v629
    %1910 = vmatpush1.msra.mxu0 %v628
    %1911 = vmatprep.subr.mxu0 %v637
    %1912 = vmatpush1.msra.mxu0 %v636
    %1913 = vmatprep.mubr.f32.mxu0 %v1706
    %1914 = vmatmul.mubr.f32.gmra.mrb[0].mxu0 %v1678
    %v1915 = vpop.f32.mrb[0].mxu0
    %v1916 = vadd.f32 0.0, %v1915
    %v1917 = vpop.f32.mrb[0].mxu0
    %v1918 = vadd.f32 0.0, %v1917
    %1919 = vdwg.mxu0
    %1920 = vmatprep.subr.mxu0 %v391
    %1921 = vmatpush1.msra.mxu0 %v390
    %1922 = vmatprep.subr.mxu0 %v399
    %1923 = vmatpush1.msra.mxu0 %v398
    %1924 = vmatprep.subr.mxu0 %v407
    %1925 = vmatpush1.msra.mxu0 %v406
    %1926 = vmatprep.subr.mxu0 %v415
    %1927 = vmatpush1.msra.mxu0 %v414
    %1928 = vmatprep.subr.mxu0 %v423
    %1929 = vmatpush1.msra.mxu0 %v422
    %1930 = vmatprep.subr.mxu0 %v431
    %1931 = vmatpush1.msra.mxu0 %v430
    %1932 = vmatprep.subr.mxu0 %v439
    %1933 = vmatpush1.msra.mxu0 %v438
    %1934 = vmatprep.subr.mxu0 %v447
    %1935 = vmatpush1.msra.mxu0 %v446
    %1936 = vmatprep.subr.mxu0 %v455
    %1937 = vmatpush1.msra.mxu0 %v454
    %1938 = vmatprep.subr.mxu0 %v463
    %1939 = vmatpush1.msra.mxu0 %v462
    %1940 = vmatprep.subr.mxu0 %v471
    %1941 = vmatpush1.msra.mxu0 %v470
    %1942 = vmatprep.subr.mxu0 %v479
    %1943 = vmatpush1.msra.mxu0 %v478
    %1944 = vmatprep.subr.mxu0 %v487
    %1945 = vmatpush1.msra.mxu0 %v486
    %1946 = vmatprep.subr.mxu0 %v495
    %1947 = vmatpush1.msra.mxu0 %v494
    %1948 = vmatprep.subr.mxu0 %v503
    %1949 = vmatpush1.msra.mxu0 %v502
    %1950 = vmatprep.subr.mxu0 %v511
    %1951 = vmatpush1.msra.mxu0 %v510
    %1952 = vmatprep.subr.mxu0 %v519
    %1953 = vmatpush1.msra.mxu0 %v518
    %1954 = vmatprep.subr.mxu0 %v527
    %1955 = vmatpush1.msra.mxu0 %v526
    %1956 = vmatprep.subr.mxu0 %v535
    %1957 = vmatpush1.msra.mxu0 %v534
    %1958 = vmatprep.subr.mxu0 %v543
    %1959 = vmatpush1.msra.mxu0 %v542
    %1960 = vmatprep.subr.mxu0 %v551
    %1961 = vmatpush1.msra.mxu0 %v550
    %1962 = vmatprep.subr.mxu0 %v559
    %1963 = vmatpush1.msra.mxu0 %v558
    %1964 = vmatprep.subr.mxu0 %v567
    %1965 = vmatpush1.msra.mxu0 %v566
    %1966 = vmatprep.subr.mxu0 %v575
    %1967 = vmatpush1.msra.mxu0 %v574
    %1968 = vmatprep.subr.mxu0 %v583
    %1969 = vmatpush1.msra.mxu0 %v582
    %1970 = vmatprep.subr.mxu0 %v591
    %1971 = vmatpush1.msra.mxu0 %v590
    %1972 = vmatprep.subr.mxu0 %v599
    %1973 = vmatpush1.msra.mxu0 %v598
    %1974 = vmatprep.subr.mxu0 %v607
    %1975 = vmatpush1.msra.mxu0 %v606
    %1976 = vmatprep.subr.mxu0 %v615
    %1977 = vmatpush1.msra.mxu0 %v614
    %1978 = vmatprep.subr.mxu0 %v623
    %1979 = vmatpush1.msra.mxu0 %v622
    %1980 = vmatprep.subr.mxu0 %v631
    %1981 = vmatpush1.msra.mxu0 %v630
    %1982 = vmatprep.subr.mxu0 %v639
    %1983 = vmatpush1.msra.mxu0 %v638
    %1984 = vmatprep.mubr.f32.mxu0 %v1706
    %1985 = vmatmul.mubr.f32.gmra.mrb[0].mxu0 %v1678
    %v1986 = vpop.f32.mrb[0].mxu0
    %v1987 = vadd.f32 0.0, %v1986
    %v1988 = vpop.f32.mrb[0].mxu0
    %v1989 = vadd.f32 0.0, %v1988
    %1990 = vdwg.mxu0
    %v1991 = vadd.f32 %v1774, %v249
    %v1992 = vadd.f32 %v1776, %v251
    %v1993 = vadd.f32 %v1845, %v362
    %v1994 = vadd.f32 %v1847, %v364
    %v1995 = vxor.u32 %v1991, 2147483648
    %v1996 = vxor.u32 %v1992, 2147483648
    %v1997 = vxor.u32 %v1993, 2147483648
    %v1998 = vmul.f32 %v1995, 1.442695
    %v1999 = vpow.pop %v1998
    %v2000 = vmul.f32 %v1996, 1.442695
    %v2001 = vpow.pop %v2000
    %v2002 = vmul.f32 %v1997, 1.442695
    %v2003 = vpow.pop %v2002
    %v2004 = vadd.f32 %v1999, 1.0
    %v2005 = vadd.f32 %v2001, 1.0
    %v2006 = vadd.f32 %v2003, 1.0
    %v2007 = vrcp.pop %v2004
    %v2008 = vmul.f32 1.0, %v2007
    %v2009 = vrcp.pop %v2005
    %v2010 = vmul.f32 1.0, %v2009
    %v2011 = vrcp.pop %v2006
    %v2012 = vmul.f32 1.0, %v2011
    %v2013 = vtanh.pop %v1994
    %v2014 = vmul.f32 %v2010, %v1676
    %v2015 = vmul.f32 %v2008, %v2013
    %v2016 = vadd.f32 %v2014, %v2015
    %v2017 = vtanh.pop %v2016
    %v2018 = vmul.f32 %v2012, %v2017
    %v2019 = vadd.f32 %v1916, %v982
    %v2020 = vadd.f32 %v1918, %v986
    %v2021 = vadd.f32 %v1987, %v990
    %v2022 = vadd.f32 %v1989, %v994
    %v2023 = vxor.u32 %v2019, 2147483648
    %v2024 = vxor.u32 %v2020, 2147483648
    %v2025 = vxor.u32 %v2021, 2147483648
    %v2026 = vmul.f32 %v2023, 1.442695
    %v2027 = vpow.pop %v2026
    %v2028 = vmul.f32 %v2024, 1.442695
    %v2029 = vpow.pop %v2028
    %v2030 = vmul.f32 %v2025, 1.442695
    %v2031 = vpow.pop %v2030
    %v2032 = vadd.f32 %v2027, 1.0
    %v2033 = vadd.f32 %v2029, 1.0
    %v2034 = vadd.f32 %v2031, 1.0
    %v2035 = vrcp.pop %v2032
    %v2036 = vmul.f32 1.0, %v2035
    %v2037 = vrcp.pop %v2033
    %v2038 = vmul.f32 1.0, %v2037
    %v2039 = vrcp.pop %v2034
    %v2040 = vmul.f32 1.0, %v2039
    %v2041 = vtanh.pop %v2022
    %v2042 = vmul.f32 %v2038, %v1704
    %v2043 = vmul.f32 %v2036, %v2041
    %v2044 = vadd.f32 %v2042, %v2043
    %v2045 = vtanh.pop %v2044
    %v2046 = vmul.f32 %v2040, %v2045
    %2047 = vmatprep.subr.mxu0 %v385
    %2048 = vmatpush1.msra.mxu0 %v384
    %2049 = vmatprep.subr.mxu0 %v393
    %2050 = vmatpush1.msra.mxu0 %v392
    %2051 = vmatprep.subr.mxu0 %v401
    %2052 = vmatpush1.msra.mxu0 %v400
    %2053 = vmatprep.subr.mxu0 %v409
    %2054 = vmatpush1.msra.mxu0 %v408
    %2055 = vmatprep.subr.mxu0 %v417
    %2056 = vmatpush1.msra.mxu0 %v416
    %2057 = vmatprep.subr.mxu0 %v425
    %2058 = vmatpush1.msra.mxu0 %v424
    %2059 = vmatprep.subr.mxu0 %v433
    %2060 = vmatpush1.msra.mxu0 %v432
    %2061 = vmatprep.subr.mxu0 %v441
    %2062 = vmatpush1.msra.mxu0 %v440
    %2063 = vmatprep.subr.mxu0 %v449
    %2064 = vmatpush1.msra.mxu0 %v448
    %2065 = vmatprep.subr.mxu0 %v457
    %2066 = vmatpush1.msra.mxu0 %v456
    %2067 = vmatprep.subr.mxu0 %v465
    %2068 = vmatpush1.msra.mxu0 %v464
    %2069 = vmatprep.subr.mxu0 %v473
    %2070 = vmatpush1.msra.mxu0 %v472
    %2071 = vmatprep.subr.mxu0 %v481
    %2072 = vmatpush1.msra.mxu0 %v480
    %2073 = vmatprep.subr.mxu0 %v489
    %2074 = vmatpush1.msra.mxu0 %v488
    %2075 = vmatprep.subr.mxu0 %v497
    %2076 = vmatpush1.msra.mxu0 %v496
    %2077 = vmatprep.subr.mxu0 %v505
    %2078 = vmatpush1.msra.mxu0 %v504
    %2079 = vmatprep.subr.mxu0 %v513
    %2080 = vmatpush1.msra.mxu0 %v512
    %2081 = vmatprep.subr.mxu0 %v521
    %2082 = vmatpush1.msra.mxu0 %v520
    %2083 = vmatprep.subr.mxu0 %v529
    %2084 = vmatpush1.msra.mxu0 %v528
    %2085 = vmatprep.subr.mxu0 %v537
    %2086 = vmatpush1.msra.mxu0 %v536
    %2087 = vmatprep.subr.mxu0 %v545
    %2088 = vmatpush1.msra.mxu0 %v544
    %2089 = vmatprep.subr.mxu0 %v553
    %2090 = vmatpush1.msra.mxu0 %v552
    %2091 = vmatprep.subr.mxu0 %v561
    %2092 = vmatpush1.msra.mxu0 %v560
    %2093 = vmatprep.subr.mxu0 %v569
    %2094 = vmatpush1.msra.mxu0 %v568
    %2095 = vmatprep.subr.mxu0 %v577
    %2096 = vmatpush1.msra.mxu0 %v576
    %2097 = vmatprep.subr.mxu0 %v585
    %2098 = vmatpush1.msra.mxu0 %v584
    %2099 = vmatprep.subr.mxu0 %v593
    %2100 = vmatpush1.msra.mxu0 %v592
    %2101 = vmatprep.subr.mxu0 %v601
    %2102 = vmatpush1.msra.mxu0 %v600
    %2103 = vmatprep.subr.mxu0 %v609
    %2104 = vmatpush1.msra.mxu0 %v608
    %2105 = vmatprep.subr.mxu0 %v617
    %2106 = vmatpush1.msra.mxu0 %v616
    %2107 = vmatprep.subr.mxu0 %v625
    %2108 = vmatpush1.msra.mxu0 %v624
    %2109 = vmatprep.subr.mxu0 %v633
    %2110 = vmatpush1.msra.mxu0 %v632
    %2111 = vmatprep.mubr.f32.mxu0 %v2046
    %2112 = vmatmul.mubr.f32.gmra.mrb[0].mxu0 %v2018
    %v2113 = vpop.f32.mrb[0].mxu0
    %v2114 = vadd.f32 0.0, %v2113
    %v2115 = vpop.f32.mrb[0].mxu0
    %v2116 = vadd.f32 0.0, %v2115
    %2117 = vdwg.mxu0
    %2118 = vmatprep.subr.mxu0 %v387
    %2119 = vmatpush1.msra.mxu0 %v386
    %2120 = vmatprep.subr.mxu0 %v395
    %2121 = vmatpush1.msra.mxu0 %v394
    %2122 = vmatprep.subr.mxu0 %v403
    %2123 = vmatpush1.msra.mxu0 %v402
    %2124 = vmatprep.subr.mxu0 %v411
    %2125 = vmatpush1.msra.mxu0 %v410
    %2126 = vmatprep.subr.mxu0 %v419
    %2127 = vmatpush1.msra.mxu0 %v418
    %2128 = vmatprep.subr.mxu0 %v427
    %2129 = vmatpush1.msra.mxu0 %v426
    %2130 = vmatprep.subr.mxu0 %v435
    %2131 = vmatpush1.msra.mxu0 %v434
    %2132 = vmatprep.subr.mxu0 %v443
    %2133 = vmatpush1.msra.mxu0 %v442
    %2134 = vmatprep.subr.mxu0 %v451
    %2135 = vmatpush1.msra.mxu0 %v450
    %2136 = vmatprep.subr.mxu0 %v459
    %2137 = vmatpush1.msra.mxu0 %v458
    %2138 = vmatprep.subr.mxu0 %v467
    %2139 = vmatpush1.msra.mxu0 %v466
    %2140 = vmatprep.subr.mxu0 %v475
    %2141 = vmatpush1.msra.mxu0 %v474
    %2142 = vmatprep.subr.mxu0 %v483
    %2143 = vmatpush1.msra.mxu0 %v482
    %2144 = vmatprep.subr.mxu0 %v491
    %2145 = vmatpush1.msra.mxu0 %v490
    %2146 = vmatprep.subr.mxu0 %v499
    %2147 = vmatpush1.msra.mxu0 %v498
    %2148 = vmatprep.subr.mxu0 %v507
    %2149 = vmatpush1.msra.mxu0 %v506
    %2150 = vmatprep.subr.mxu0 %v515
    %2151 = vmatpush1.msra.mxu0 %v514
    %2152 = vmatprep.subr.mxu0 %v523
    %2153 = vmatpush1.msra.mxu0 %v522
    %2154 = vmatprep.subr.mxu0 %v531
    %2155 = vmatpush1.msra.mxu0 %v530
    %2156 = vmatprep.subr.mxu0 %v539
    %2157 = vmatpush1.msra.mxu0 %v538
    %2158 = vmatprep.subr.mxu0 %v547
    %2159 = vmatpush1.msra.mxu0 %v546
    %2160 = vmatprep.subr.mxu0 %v555
    %2161 = vmatpush1.msra.mxu0 %v554
    %2162 = vmatprep.subr.mxu0 %v563
    %2163 = vmatpush1.msra.mxu0 %v562
    %2164 = vmatprep.subr.mxu0 %v571
    %2165 = vmatpush1.msra.mxu0 %v570
    %2166 = vmatprep.subr.mxu0 %v579
    %2167 = vmatpush1.msra.mxu0 %v578
    %2168 = vmatprep.subr.mxu0 %v587
    %2169 = vmatpush1.msra.mxu0 %v586
    %2170 = vmatprep.subr.mxu0 %v595
    %2171 = vmatpush1.msra.mxu0 %v594
    %2172 = vmatprep.subr.mxu0 %v603
    %2173 = vmatpush1.msra.mxu0 %v602
    %2174 = vmatprep.subr.mxu0 %v611
    %2175 = vmatpush1.msra.mxu0 %v610
    %2176 = vmatprep.subr.mxu0 %v619
    %2177 = vmatpush1.msra.mxu0 %v618
    %2178 = vmatprep.subr.mxu0 %v627
    %2179 = vmatpush1.msra.mxu0 %v626
    %2180 = vmatprep.subr.mxu0 %v635
    %2181 = vmatpush1.msra.mxu0 %v634
    %2182 = vmatprep.mubr.f32.mxu0 %v2046
    %2183 = vmatmul.mubr.f32.gmra.mrb[0].mxu0 %v2018
    %v2184 = vpop.f32.mrb[0].mxu0
    %v2185 = vadd.f32 0.0, %v2184
    %v2186 = vpop.f32.mrb[0].mxu0
    %v2187 = vadd.f32 0.0, %v2186
    %2188 = vdwg.mxu0
    %2189 = vmatprep.subr.mxu0 %v389
    %2190 = vmatpush1.msra.mxu0 %v388
    %2191 = vmatprep.subr.mxu0 %v397
    %2192 = vmatpush1.msra.mxu0 %v396
    %2193 = vmatprep.subr.mxu0 %v405
    %2194 = vmatpush1.msra.mxu0 %v404
    %2195 = vmatprep.subr.mxu0 %v413
    %2196 = vmatpush1.msra.mxu0 %v412
    %2197 = vmatprep.subr.mxu0 %v421
    %2198 = vmatpush1.msra.mxu0 %v420
    %2199 = vmatprep.subr.mxu0 %v429
    %2200 = vmatpush1.msra.mxu0 %v428
    %2201 = vmatprep.subr.mxu0 %v437
    %2202 = vmatpush1.msra.mxu0 %v436
    %2203 = vmatprep.subr.mxu0 %v445
    %2204 = vmatpush1.msra.mxu0 %v444
    %2205 = vmatprep.subr.mxu0 %v453
    %2206 = vmatpush1.msra.mxu0 %v452
    %2207 = vmatprep.subr.mxu0 %v461
    %2208 = vmatpush1.msra.mxu0 %v460
    %2209 = vmatprep.subr.mxu0 %v469
    %2210 = vmatpush1.msra.mxu0 %v468
    %2211 = vmatprep.subr.mxu0 %v477
    %2212 = vmatpush1.msra.mxu0 %v476
    %2213 = vmatprep.subr.mxu0 %v485
    %2214 = vmatpush1.msra.mxu0 %v484
    %2215 = vmatprep.subr.mxu0 %v493
    %2216 = vmatpush1.msra.mxu0 %v492
    %2217 = vmatprep.subr.mxu0 %v501
    %2218 = vmatpush1.msra.mxu0 %v500
    %2219 = vmatprep.subr.mxu0 %v509
    %2220 = vmatpush1.msra.mxu0 %v508
    %2221 = vmatprep.subr.mxu0 %v517
    %2222 = vmatpush1.msra.mxu0 %v516
    %2223 = vmatprep.subr.mxu0 %v525
    %2224 = vmatpush1.msra.mxu0 %v524
    %2225 = vmatprep.subr.mxu0 %v533
    %2226 = vmatpush1.msra.mxu0 %v532
    %2227 = vmatprep.subr.mxu0 %v541
    %2228 = vmatpush1.msra.mxu0 %v540
    %2229 = vmatprep.subr.mxu0 %v549
    %2230 = vmatpush1.msra.mxu0 %v548
    %2231 = vmatprep.subr.mxu0 %v557
    %2232 = vmatpush1.msra.mxu0 %v556
    %2233 = vmatprep.subr.mxu0 %v565
    %2234 = vmatpush1.msra.mxu0 %v564
    %2235 = vmatprep.subr.mxu0 %v573
    %2236 = vmatpush1.msra.mxu0 %v572
    %2237 = vmatprep.subr.mxu0 %v581
    %2238 = vmatpush1.msra.mxu0 %v580
    %2239 = vmatprep.subr.mxu0 %v589
    %2240 = vmatpush1.msra.mxu0 %v588
    %2241 = vmatprep.subr.mxu0 %v597
    %2242 = vmatpush1.msra.mxu0 %v596
    %2243 = vmatprep.subr.mxu0 %v605
    %2244 = vmatpush1.msra.mxu0 %v604
    %2245 = vmatprep.subr.mxu0 %v613
    %2246 = vmatpush1.msra.mxu0 %v612
    %2247 = vmatprep.subr.mxu0 %v621
    %2248 = vmatpush1.msra.mxu0 %v620
    %2249 = vmatprep.subr.mxu0 %v629
    %2250 = vmatpush1.msra.mxu0 %v628
    %2251 = vmatprep.subr.mxu0 %v637
    %2252 = vmatpush1.msra.mxu0 %v636
    %2253 = vmatprep.mubr.f32.mxu0 %v2046
    %2254 = vmatmul.mubr.f32.gmra.mrb[0].mxu0 %v2018
    %v2255 = vpop.f32.mrb[0].mxu0
    %v2256 = vadd.f32 0.0, %v2255
    %v2257 = vpop.f32.mrb[0].mxu0
    %v2258 = vadd.f32 0.0, %v2257
    %2259 = vdwg.mxu0
    %2260 = vmatprep.subr.mxu0 %v391
    %2261 = vmatpush1.msra.mxu0 %v390
    %2262 = vmatprep.subr.mxu0 %v399
    %2263 = vmatpush1.msra.mxu0 %v398
    %2264 = vmatprep.subr.mxu0 %v407
    %2265 = vmatpush1.msra.mxu0 %v406
    %2266 = vmatprep.subr.mxu0 %v415
    %2267 = vmatpush1.msra.mxu0 %v414
    %2268 = vmatprep.subr.mxu0 %v423
    %2269 = vmatpush1.msra.mxu0 %v422
    %2270 = vmatprep.subr.mxu0 %v431
    %2271 = vmatpush1.msra.mxu0 %v430
    %2272 = vmatprep.subr.mxu0 %v439
    %2273 = vmatpush1.msra.mxu0 %v438
    %2274 = vmatprep.subr.mxu0 %v447
    %2275 = vmatpush1.msra.mxu0 %v446
    %2276 = vmatprep.subr.mxu0 %v455
    %2277 = vmatpush1.msra.mxu0 %v454
    %2278 = vmatprep.subr.mxu0 %v463
    %2279 = vmatpush1.msra.mxu0 %v462
    %2280 = vmatprep.subr.mxu0 %v471
    %2281 = vmatpush1.msra.mxu0 %v470
    %2282 = vmatprep.subr.mxu0 %v479
    %2283 = vmatpush1.msra.mxu0 %v478
    %2284 = vmatprep.subr.mxu0 %v487
    %2285 = vmatpush1.msra.mxu0 %v486
    %2286 = vmatprep.subr.mxu0 %v495
    %2287 = vmatpush1.msra.mxu0 %v494
    %2288 = vmatprep.subr.mxu0 %v503
    %2289 = vmatpush1.msra.mxu0 %v502
    %2290 = vmatprep.subr.mxu0 %v511
    %2291 = vmatpush1.msra.mxu0 %v510
    %2292 = vmatprep.subr.mxu0 %v519
    %2293 = vmatpush1.msra.mxu0 %v518
    %2294 = vmatprep.subr.mxu0 %v527
    %2295 = vmatpush1.msra.mxu0 %v526
    %2296 = vmatprep.subr.mxu0 %v535
    %2297 = vmatpush1.msra.mxu0 %v534
    %2298 = vmatprep.subr.mxu0 %v543
    %2299 = vmatpush1.msra.mxu0 %v542
    %2300 = vmatprep.subr.mxu0 %v551
    %2301 = vmatpush1.msra.mxu0 %v550
    %2302 = vmatprep.subr.mxu0 %v559
    %2303 = vmatpush1.msra.mxu0 %v558
    %2304 = vmatprep.subr.mxu0 %v567
    %2305 = vmatpush1.msra.mxu0 %v566
    %2306 = vmatprep.subr.mxu0 %v575
    %2307 = vmatpush1.msra.mxu0 %v574
    %2308 = vmatprep.subr.mxu0 %v583
    %2309 = vmatpush1.msra.mxu0 %v582
    %2310 = vmatprep.subr.mxu0 %v591
    %2311 = vmatpush1.msra.mxu0 %v590
    %2312 = vmatprep.subr.mxu0 %v599
    %2313 = vmatpush1.msra.mxu0 %v598
    %2314 = vmatprep.subr.mxu0 %v607
    %2315 = vmatpush1.msra.mxu0 %v606
    %2316 = vmatprep.subr.mxu0 %v615
    %2317 = vmatpush1.msra.mxu0 %v614
    %2318 = vmatprep.subr.mxu0 %v623
    %2319 = vmatpush1.msra.mxu0 %v622
    %2320 = vmatprep.subr.mxu0 %v631
    %2321 = vmatpush1.msra.mxu0 %v630
    %2322 = vmatprep.subr.mxu0 %v639
    %2323 = vmatpush1.msra.mxu0 %v638
    %2324 = vmatprep.mubr.f32.mxu0 %v2046
    %2325 = vmatmul.mubr.f32.gmra.mrb[0].mxu0 %v2018
    %v2326 = vpop.f32.mrb[0].mxu0
    %v2327 = vadd.f32 0.0, %v2326
    %v2328 = vpop.f32.mrb[0].mxu0
    %v2329 = vadd.f32 0.0, %v2328
    %2330 = vdwg.mxu0
    %v2331 = vadd.f32 %v2114, %v255
    %v2332 = vadd.f32 %v2116, %v257
    %v2333 = vadd.f32 %v2185, %v368
    %v2334 = vadd.f32 %v2187, %v370
    %v2335 = vxor.u32 %v2331, 2147483648
    %v2336 = vxor.u32 %v2332, 2147483648
    %v2337 = vxor.u32 %v2333, 2147483648
    %v2338 = vmul.f32 %v2335, 1.442695
    %v2339 = vpow.pop %v2338
    %v2340 = vmul.f32 %v2336, 1.442695
    %v2341 = vpow.pop %v2340
    %v2342 = vmul.f32 %v2337, 1.442695
    %v2343 = vpow.pop %v2342
    %v2344 = vadd.f32 %v2339, 1.0
    %v2345 = vadd.f32 %v2341, 1.0
    %v2346 = vadd.f32 %v2343, 1.0
    %v2347 = vrcp.pop %v2344
    %v2348 = vmul.f32 1.0, %v2347
    %v2349 = vrcp.pop %v2345
    %v2350 = vmul.f32 1.0, %v2349
    %v2351 = vrcp.pop %v2346
    %v2352 = vmul.f32 1.0, %v2351
    %v2353 = vtanh.pop %v2334
    %v2354 = vmul.f32 %v2350, %v2016
    %v2355 = vmul.f32 %v2348, %v2353
    %v2356 = vadd.f32 %v2354, %v2355
    %v2357 = vtanh.pop %v2356
    %v2358 = vmul.f32 %v2352, %v2357
    %v2359 = vadd.f32 %v2256, %v982
    %v2360 = vadd.f32 %v2258, %v986
    %v2361 = vadd.f32 %v2327, %v990
    %v2362 = vadd.f32 %v2329, %v994
    %v2363 = vxor.u32 %v2359, 2147483648
    %v2364 = vxor.u32 %v2360, 2147483648
    %v2365 = vxor.u32 %v2361, 2147483648
    %v2366 = vmul.f32 %v2363, 1.442695
    %v2367 = vpow.pop %v2366
    %v2368 = vmul.f32 %v2364, 1.442695
    %v2369 = vpow.pop %v2368
    %v2370 = vmul.f32 %v2365, 1.442695
    %v2371 = vpow.pop %v2370
    %v2372 = vadd.f32 %v2367, 1.0
    %v2373 = vadd.f32 %v2369, 1.0
    %v2374 = vadd.f32 %v2371, 1.0
    %v2375 = vrcp.pop %v2372
    %v2376 = vmul.f32 1.0, %v2375
    %v2377 = vrcp.pop %v2373
    %v2378 = vmul.f32 1.0, %v2377
    %v2379 = vrcp.pop %v2374
    %v2380 = vmul.f32 1.0, %v2379
    %v2381 = vtanh.pop %v2362
    %v2382 = vmul.f32 %v2378, %v2044
    %v2383 = vmul.f32 %v2376, %v2381
    %v2384 = vadd.f32 %v2382, %v2383
    %v2385 = vtanh.pop %v2384
    %v2386 = vmul.f32 %v2380, %v2385
    %2387 = vmatprep.subr.mxu0 %v385
    %2388 = vmatpush1.msra.mxu0 %v384
    %2389 = vmatprep.subr.mxu0 %v393
    %2390 = vmatpush1.msra.mxu0 %v392
    %2391 = vmatprep.subr.mxu0 %v401
    %2392 = vmatpush1.msra.mxu0 %v400
    %2393 = vmatprep.subr.mxu0 %v409
    %2394 = vmatpush1.msra.mxu0 %v408
    %2395 = vmatprep.subr.mxu0 %v417
    %2396 = vmatpush1.msra.mxu0 %v416
    %2397 = vmatprep.subr.mxu0 %v425
    %2398 = vmatpush1.msra.mxu0 %v424
    %2399 = vmatprep.subr.mxu0 %v433
    %2400 = vmatpush1.msra.mxu0 %v432
    %2401 = vmatprep.subr.mxu0 %v441
    %2402 = vmatpush1.msra.mxu0 %v440
    %2403 = vmatprep.subr.mxu0 %v449
    %2404 = vmatpush1.msra.mxu0 %v448
    %2405 = vmatprep.subr.mxu0 %v457
    %2406 = vmatpush1.msra.mxu0 %v456
    %2407 = vmatprep.subr.mxu0 %v465
    %2408 = vmatpush1.msra.mxu0 %v464
    %2409 = vmatprep.subr.mxu0 %v473
    %2410 = vmatpush1.msra.mxu0 %v472
    %2411 = vmatprep.subr.mxu0 %v481
    %2412 = vmatpush1.msra.mxu0 %v480
    %2413 = vmatprep.subr.mxu0 %v489
    %2414 = vmatpush1.msra.mxu0 %v488
    %2415 = vmatprep.subr.mxu0 %v497
    %2416 = vmatpush1.msra.mxu0 %v496
    %2417 = vmatprep.subr.mxu0 %v505
    %2418 = vmatpush1.msra.mxu0 %v504
    %2419 = vmatprep.subr.mxu0 %v513
    %2420 = vmatpush1.msra.mxu0 %v512
    %2421 = vmatprep.subr.mxu0 %v521
    %2422 = vmatpush1.msra.mxu0 %v520
    %2423 = vmatprep.subr.mxu0 %v529
    %2424 = vmatpush1.msra.mxu0 %v528
    %2425 = vmatprep.subr.mxu0 %v537
    %2426 = vmatpush1.msra.mxu0 %v536
    %2427 = vmatprep.subr.mxu0 %v545
    %2428 = vmatpush1.msra.mxu0 %v544
    %2429 = vmatprep.subr.mxu0 %v553
    %2430 = vmatpush1.msra.mxu0 %v552
    %2431 = vmatprep.subr.mxu0 %v561
    %2432 = vmatpush1.msra.mxu0 %v560
    %2433 = vmatprep.subr.mxu0 %v569
    %2434 = vmatpush1.msra.mxu0 %v568
    %2435 = vmatprep.subr.mxu0 %v577
    %2436 = vmatpush1.msra.mxu0 %v576
    %2437 = vmatprep.subr.mxu0 %v585
    %2438 = vmatpush1.msra.mxu0 %v584
    %2439 = vmatprep.subr.mxu0 %v593
    %2440 = vmatpush1.msra.mxu0 %v592
    %2441 = vmatprep.subr.mxu0 %v601
    %2442 = vmatpush1.msra.mxu0 %v600
    %2443 = vmatprep.subr.mxu0 %v609
    %2444 = vmatpush1.msra.mxu0 %v608
    %2445 = vmatprep.subr.mxu0 %v617
    %2446 = vmatpush1.msra.mxu0 %v616
    %2447 = vmatprep.subr.mxu0 %v625
    %2448 = vmatpush1.msra.mxu0 %v624
    %2449 = vmatprep.subr.mxu0 %v633
    %2450 = vmatpush1.msra.mxu0 %v632
    %2451 = vmatprep.mubr.f32.mxu0 %v2386
    %2452 = vmatmul.mubr.f32.gmra.mrb[0].mxu0 %v2358
    %v2453 = vpop.f32.mrb[0].mxu0
    %v2454 = vadd.f32 0.0, %v2453
    %v2455 = vpop.f32.mrb[0].mxu0
    %v2456 = vadd.f32 0.0, %v2455
    %2457 = vdwg.mxu0
    %2458 = vmatprep.subr.mxu0 %v387
    %2459 = vmatpush1.msra.mxu0 %v386
    %2460 = vmatprep.subr.mxu0 %v395
    %2461 = vmatpush1.msra.mxu0 %v394
    %2462 = vmatprep.subr.mxu0 %v403
    %2463 = vmatpush1.msra.mxu0 %v402
    %2464 = vmatprep.subr.mxu0 %v411
    %2465 = vmatpush1.msra.mxu0 %v410
    %2466 = vmatprep.subr.mxu0 %v419
    %2467 = vmatpush1.msra.mxu0 %v418
    %2468 = vmatprep.subr.mxu0 %v427
    %2469 = vmatpush1.msra.mxu0 %v426
    %2470 = vmatprep.subr.mxu0 %v435
    %2471 = vmatpush1.msra.mxu0 %v434
    %2472 = vmatprep.subr.mxu0 %v443
    %2473 = vmatpush1.msra.mxu0 %v442
    %2474 = vmatprep.subr.mxu0 %v451
    %2475 = vmatpush1.msra.mxu0 %v450
    %2476 = vmatprep.subr.mxu0 %v459
    %2477 = vmatpush1.msra.mxu0 %v458
    %2478 = vmatprep.subr.mxu0 %v467
    %2479 = vmatpush1.msra.mxu0 %v466
    %2480 = vmatprep.subr.mxu0 %v475
    %2481 = vmatpush1.msra.mxu0 %v474
    %2482 = vmatprep.subr.mxu0 %v483
    %2483 = vmatpush1.msra.mxu0 %v482
    %2484 = vmatprep.subr.mxu0 %v491
    %2485 = vmatpush1.msra.mxu0 %v490
    %2486 = vmatprep.subr.mxu0 %v499
    %2487 = vmatpush1.msra.mxu0 %v498
    %2488 = vmatprep.subr.mxu0 %v507
    %2489 = vmatpush1.msra.mxu0 %v506
    %2490 = vmatprep.subr.mxu0 %v515
    %2491 = vmatpush1.msra.mxu0 %v514
    %2492 = vmatprep.subr.mxu0 %v523
    %2493 = vmatpush1.msra.mxu0 %v522
    %2494 = vmatprep.subr.mxu0 %v531
    %2495 = vmatpush1.msra.mxu0 %v530
    %2496 = vmatprep.subr.mxu0 %v539
    %2497 = vmatpush1.msra.mxu0 %v538
    %2498 = vmatprep.subr.mxu0 %v547
    %2499 = vmatpush1.msra.mxu0 %v546
    %2500 = vmatprep.subr.mxu0 %v555
    %2501 = vmatpush1.msra.mxu0 %v554
    %2502 = vmatprep.subr.mxu0 %v563
    %2503 = vmatpush1.msra.mxu0 %v562
    %2504 = vmatprep.subr.mxu0 %v571
    %2505 = vmatpush1.msra.mxu0 %v570
    %2506 = vmatprep.subr.mxu0 %v579
    %2507 = vmatpush1.msra.mxu0 %v578
    %2508 = vmatprep.subr.mxu0 %v587
    %2509 = vmatpush1.msra.mxu0 %v586
    %2510 = vmatprep.subr.mxu0 %v595
    %2511 = vmatpush1.msra.mxu0 %v594
    %2512 = vmatprep.subr.mxu0 %v603
    %2513 = vmatpush1.msra.mxu0 %v602
    %2514 = vmatprep.subr.mxu0 %v611
    %2515 = vmatpush1.msra.mxu0 %v610
    %2516 = vmatprep.subr.mxu0 %v619
    %2517 = vmatpush1.msra.mxu0 %v618
    %2518 = vmatprep.subr.mxu0 %v627
    %2519 = vmatpush1.msra.mxu0 %v626
    %2520 = vmatprep.subr.mxu0 %v635
    %2521 = vmatpush1.msra.mxu0 %v634
    %2522 = vmatprep.mubr.f32.mxu0 %v2386
    %2523 = vmatmul.mubr.f32.gmra.mrb[0].mxu0 %v2358
    %v2524 = vpop.f32.mrb[0].mxu0
    %v2525 = vadd.f32 0.0, %v2524
    %v2526 = vpop.f32.mrb[0].mxu0
    %v2527 = vadd.f32 0.0, %v2526
    %2528 = vdwg.mxu0
    %2529 = vmatprep.subr.mxu0 %v389
    %2530 = vmatpush1.msra.mxu0 %v388
    %2531 = vmatprep.subr.mxu0 %v397
    %2532 = vmatpush1.msra.mxu0 %v396
    %2533 = vmatprep.subr.mxu0 %v405
    %2534 = vmatpush1.msra.mxu0 %v404
    %2535 = vmatprep.subr.mxu0 %v413
    %2536 = vmatpush1.msra.mxu0 %v412
    %2537 = vmatprep.subr.mxu0 %v421
    %2538 = vmatpush1.msra.mxu0 %v420
    %2539 = vmatprep.subr.mxu0 %v429
    %2540 = vmatpush1.msra.mxu0 %v428
    %2541 = vmatprep.subr.mxu0 %v437
    %2542 = vmatpush1.msra.mxu0 %v436
    %2543 = vmatprep.subr.mxu0 %v445
    %2544 = vmatpush1.msra.mxu0 %v444
    %2545 = vmatprep.subr.mxu0 %v453
    %2546 = vmatpush1.msra.mxu0 %v452
    %2547 = vmatprep.subr.mxu0 %v461
    %2548 = vmatpush1.msra.mxu0 %v460
    %2549 = vmatprep.subr.mxu0 %v469
    %2550 = vmatpush1.msra.mxu0 %v468
    %2551 = vmatprep.subr.mxu0 %v477
    %2552 = vmatpush1.msra.mxu0 %v476
    %2553 = vmatprep.subr.mxu0 %v485
    %2554 = vmatpush1.msra.mxu0 %v484
    %2555 = vmatprep.subr.mxu0 %v493
    %2556 = vmatpush1.msra.mxu0 %v492
    %2557 = vmatprep.subr.mxu0 %v501
    %2558 = vmatpush1.msra.mxu0 %v500
    %2559 = vmatprep.subr.mxu0 %v509
    %2560 = vmatpush1.msra.mxu0 %v508
    %2561 = vmatprep.subr.mxu0 %v517
    %2562 = vmatpush1.msra.mxu0 %v516
    %2563 = vmatprep.subr.mxu0 %v525
    %2564 = vmatpush1.msra.mxu0 %v524
    %2565 = vmatprep.subr.mxu0 %v533
    %2566 = vmatpush1.msra.mxu0 %v532
    %2567 = vmatprep.subr.mxu0 %v541
    %2568 = vmatpush1.msra.mxu0 %v540
    %2569 = vmatprep.subr.mxu0 %v549
    %2570 = vmatpush1.msra.mxu0 %v548
    %2571 = vmatprep.subr.mxu0 %v557
    %2572 = vmatpush1.msra.mxu0 %v556
    %2573 = vmatprep.subr.mxu0 %v565
    %2574 = vmatpush1.msra.mxu0 %v564
    %2575 = vmatprep.subr.mxu0 %v573
    %2576 = vmatpush1.msra.mxu0 %v572
    %2577 = vmatprep.subr.mxu0 %v581
    %2578 = vmatpush1.msra.mxu0 %v580
    %2579 = vmatprep.subr.mxu0 %v589
    %2580 = vmatpush1.msra.mxu0 %v588
    %2581 = vmatprep.subr.mxu0 %v597
    %2582 = vmatpush1.msra.mxu0 %v596
    %2583 = vmatprep.subr.mxu0 %v605
    %2584 = vmatpush1.msra.mxu0 %v604
    %2585 = vmatprep.subr.mxu0 %v613
    %2586 = vmatpush1.msra.mxu0 %v612
    %2587 = vmatprep.subr.mxu0 %v621
    %2588 = vmatpush1.msra.mxu0 %v620
    %2589 = vmatprep.subr.mxu0 %v629
    %2590 = vmatpush1.msra.mxu0 %v628
    %2591 = vmatprep.subr.mxu0 %v637
    %2592 = vmatpush1.msra.mxu0 %v636
    %2593 = vmatprep.mubr.f32.mxu0 %v2386
    %2594 = vmatmul.mubr.f32.gmra.mrb[0].mxu0 %v2358
    %v2595 = vpop.f32.mrb[0].mxu0
    %v2596 = vadd.f32 0.0, %v2595
    %v2597 = vpop.f32.mrb[0].mxu0
    %v2598 = vadd.f32 0.0, %v2597
    %2599 = vdwg.mxu0
    %2600 = vmatprep.subr.mxu0 %v391
    %2601 = vmatpush1.msra.mxu0 %v390
    %2602 = vmatprep.subr.mxu0 %v399
    %2603 = vmatpush1.msra.mxu0 %v398
    %2604 = vmatprep.subr.mxu0 %v407
    %2605 = vmatpush1.msra.mxu0 %v406
    %2606 = vmatprep.subr.mxu0 %v415
    %2607 = vmatpush1.msra.mxu0 %v414
    %2608 = vmatprep.subr.mxu0 %v423
    %2609 = vmatpush1.msra.mxu0 %v422
    %2610 = vmatprep.subr.mxu0 %v431
    %2611 = vmatpush1.msra.mxu0 %v430
    %2612 = vmatprep.subr.mxu0 %v439
    %2613 = vmatpush1.msra.mxu0 %v438
    %2614 = vmatprep.subr.mxu0 %v447
    %2615 = vmatpush1.msra.mxu0 %v446
    %2616 = vmatprep.subr.mxu0 %v455
    %2617 = vmatpush1.msra.mxu0 %v454
    %2618 = vmatprep.subr.mxu0 %v463
    %2619 = vmatpush1.msra.mxu0 %v462
    %2620 = vmatprep.subr.mxu0 %v471
    %2621 = vmatpush1.msra.mxu0 %v470
    %2622 = vmatprep.subr.mxu0 %v479
    %2623 = vmatpush1.msra.mxu0 %v478
    %2624 = vmatprep.subr.mxu0 %v487
    %2625 = vmatpush1.msra.mxu0 %v486
    %2626 = vmatprep.subr.mxu0 %v495
    %2627 = vmatpush1.msra.mxu0 %v494
    %2628 = vmatprep.subr.mxu0 %v503
    %2629 = vmatpush1.msra.mxu0 %v502
    %2630 = vmatprep.subr.mxu0 %v511
    %2631 = vmatpush1.msra.mxu0 %v510
    %2632 = vmatprep.subr.mxu0 %v519
    %2633 = vmatpush1.msra.mxu0 %v518
    %2634 = vmatprep.subr.mxu0 %v527
    %2635 = vmatpush1.msra.mxu0 %v526
    %2636 = vmatprep.subr.mxu0 %v535
    %2637 = vmatpush1.msra.mxu0 %v534
    %2638 = vmatprep.subr.mxu0 %v543
    %2639 = vmatpush1.msra.mxu0 %v542
    %2640 = vmatprep.subr.mxu0 %v551
    %2641 = vmatpush1.msra.mxu0 %v550
    %2642 = vmatprep.subr.mxu0 %v559
    %2643 = vmatpush1.msra.mxu0 %v558
    %2644 = vmatprep.subr.mxu0 %v567
    %2645 = vmatpush1.msra.mxu0 %v566
    %2646 = vmatprep.subr.mxu0 %v575
    %2647 = vmatpush1.msra.mxu0 %v574
    %2648 = vmatprep.subr.mxu0 %v583
    %2649 = vmatpush1.msra.mxu0 %v582
    %2650 = vmatprep.subr.mxu0 %v591
    %2651 = vmatpush1.msra.mxu0 %v590
    %2652 = vmatprep.subr.mxu0 %v599
    %2653 = vmatpush1.msra.mxu0 %v598
    %2654 = vmatprep.subr.mxu0 %v607
    %2655 = vmatpush1.msra.mxu0 %v606
    %2656 = vmatprep.subr.mxu0 %v615
    %2657 = vmatpush1.msra.mxu0 %v614
    %2658 = vmatprep.subr.mxu0 %v623
    %2659 = vmatpush1.msra.mxu0 %v622
    %2660 = vmatprep.subr.mxu0 %v631
    %2661 = vmatpush1.msra.mxu0 %v630
    %2662 = vmatprep.subr.mxu0 %v639
    %2663 = vmatpush1.msra.mxu0 %v638
    %2664 = vmatprep.mubr.f32.mxu0 %v2386
    %2665 = vmatmul.mubr.f32.gmra.mrb[0].mxu0 %v2358
    %v2666 = vpop.f32.mrb[0].mxu0
    %v2667 = vadd.f32 0.0, %v2666
    %v2668 = vpop.f32.mrb[0].mxu0
    %v2669 = vadd.f32 0.0, %v2668
    %2670 = vdwg.mxu0
    %v2671 = vadd.f32 %v2454, %v261
    %v2672 = vadd.f32 %v2456, %v263
    %v2673 = vadd.f32 %v2525, %v374
    %v2674 = vadd.f32 %v2527, %v376
    %v2675 = vxor.u32 %v2671, 2147483648
    %v2676 = vxor.u32 %v2672, 2147483648
    %v2677 = vxor.u32 %v2673, 2147483648
    %v2678 = vmul.f32 %v2675, 1.442695
    %v2679 = vpow.pop %v2678
    %v2680 = vmul.f32 %v2676, 1.442695
    %v2681 = vpow.pop %v2680
    %v2682 = vmul.f32 %v2677, 1.442695
    %v2683 = vpow.pop %v2682
    %v2684 = vadd.f32 %v2679, 1.0
    %v2685 = vadd.f32 %v2681, 1.0
    %v2686 = vadd.f32 %v2683, 1.0
    %v2687 = vrcp.pop %v2684
    %v2688 = vmul.f32 1.0, %v2687
    %v2689 = vrcp.pop %v2685
    %v2690 = vmul.f32 1.0, %v2689
    %v2691 = vrcp.pop %v2686
    %v2692 = vmul.f32 1.0, %v2691
    %v2693 = vtanh.pop %v2674
    %v2694 = vmul.f32 %v2690, %v2356
    %v2695 = vmul.f32 %v2688, %v2693
    %v2696 = vadd.f32 %v2694, %v2695
    %v2697 = vtanh.pop %v2696
    %v2698 = vmul.f32 %v2692, %v2697
    %v2699 = vadd.f32 %v2596, %v982
    %v2700 = vadd.f32 %v2598, %v986
    %v2701 = vadd.f32 %v2667, %v990
    %v2702 = vadd.f32 %v2669, %v994
    %v2703 = vxor.u32 %v2699, 2147483648
    %v2704 = vxor.u32 %v2700, 2147483648
    %v2705 = vxor.u32 %v2701, 2147483648
    %v2706 = vmul.f32 %v2703, 1.442695
    %v2707 = vpow.pop %v2706
    %v2708 = vmul.f32 %v2704, 1.442695
    %v2709 = vpow.pop %v2708
    %v2710 = vmul.f32 %v2705, 1.442695
    %v2711 = vpow.pop %v2710
    %v2712 = vadd.f32 %v2707, 1.0
    %v2713 = vadd.f32 %v2709, 1.0
    %v2714 = vadd.f32 %v2711, 1.0
    %v2715 = vrcp.pop %v2712
    %v2716 = vmul.f32 1.0, %v2715
    %v2717 = vrcp.pop %v2713
    %v2718 = vmul.f32 1.0, %v2717
    %v2719 = vrcp.pop %v2714
    %v2720 = vmul.f32 1.0, %v2719
    %v2721 = vtanh.pop %v2702
    %v2722 = vmul.f32 %v2718, %v2384
    %v2723 = vmul.f32 %v2716, %v2721
    %v2724 = vadd.f32 %v2722, %v2723
    %v2725 = vtanh.pop %v2724
    %v2726 = vmul.f32 %v2720, %v2725
    %2727 = vmatprep.subr.mxu0 %v385
    %2728 = vmatpush1.msra.mxu0 %v384
    %2729 = vmatprep.subr.mxu0 %v393
    %2730 = vmatpush1.msra.mxu0 %v392
    %2731 = vmatprep.subr.mxu0 %v401
    %2732 = vmatpush1.msra.mxu0 %v400
    %2733 = vmatprep.subr.mxu0 %v409
    %2734 = vmatpush1.msra.mxu0 %v408
    %2735 = vmatprep.subr.mxu0 %v417
    %2736 = vmatpush1.msra.mxu0 %v416
    %2737 = vmatprep.subr.mxu0 %v425
    %2738 = vmatpush1.msra.mxu0 %v424
    %2739 = vmatprep.subr.mxu0 %v433
    %2740 = vmatpush1.msra.mxu0 %v432
    %2741 = vmatprep.subr.mxu0 %v441
    %2742 = vmatpush1.msra.mxu0 %v440
    %2743 = vmatprep.subr.mxu0 %v449
    %2744 = vmatpush1.msra.mxu0 %v448
    %2745 = vmatprep.subr.mxu0 %v457
    %2746 = vmatpush1.msra.mxu0 %v456
    %2747 = vmatprep.subr.mxu0 %v465
    %2748 = vmatpush1.msra.mxu0 %v464
    %2749 = vmatprep.subr.mxu0 %v473
    %2750 = vmatpush1.msra.mxu0 %v472
    %2751 = vmatprep.subr.mxu0 %v481
    %2752 = vmatpush1.msra.mxu0 %v480
    %2753 = vmatprep.subr.mxu0 %v489
    %2754 = vmatpush1.msra.mxu0 %v488
    %2755 = vmatprep.subr.mxu0 %v497
    %2756 = vmatpush1.msra.mxu0 %v496
    %2757 = vmatprep.subr.mxu0 %v505
    %2758 = vmatpush1.msra.mxu0 %v504
    %2759 = vmatprep.subr.mxu0 %v513
    %2760 = vmatpush1.msra.mxu0 %v512
    %2761 = vmatprep.subr.mxu0 %v521
    %2762 = vmatpush1.msra.mxu0 %v520
    %2763 = vmatprep.subr.mxu0 %v529
    %2764 = vmatpush1.msra.mxu0 %v528
    %2765 = vmatprep.subr.mxu0 %v537
    %2766 = vmatpush1.msra.mxu0 %v536
    %2767 = vmatprep.subr.mxu0 %v545
    %2768 = vmatpush1.msra.mxu0 %v544
    %2769 = vmatprep.subr.mxu0 %v553
    %2770 = vmatpush1.msra.mxu0 %v552
    %2771 = vmatprep.subr.mxu0 %v561
    %2772 = vmatpush1.msra.mxu0 %v560
    %2773 = vmatprep.subr.mxu0 %v569
    %2774 = vmatpush1.msra.mxu0 %v568
    %2775 = vmatprep.subr.mxu0 %v577
    %2776 = vmatpush1.msra.mxu0 %v576
    %2777 = vmatprep.subr.mxu0 %v585
    %2778 = vmatpush1.msra.mxu0 %v584
    %2779 = vmatprep.subr.mxu0 %v593
    %2780 = vmatpush1.msra.mxu0 %v592
    %2781 = vmatprep.subr.mxu0 %v601
    %2782 = vmatpush1.msra.mxu0 %v600
    %2783 = vmatprep.subr.mxu0 %v609
    %2784 = vmatpush1.msra.mxu0 %v608
    %2785 = vmatprep.subr.mxu0 %v617
    %2786 = vmatpush1.msra.mxu0 %v616
    %2787 = vmatprep.subr.mxu0 %v625
    %2788 = vmatpush1.msra.mxu0 %v624
    %2789 = vmatprep.subr.mxu0 %v633
    %2790 = vmatpush1.msra.mxu0 %v632
    %2791 = vmatprep.mubr.f32.mxu0 %v2726
    %2792 = vmatmul.mubr.f32.gmra.mrb[0].mxu0 %v2698
    %v2793 = vpop.f32.mrb[0].mxu0
    %v2794 = vadd.f32 0.0, %v2793
    %v2795 = vpop.f32.mrb[0].mxu0
    %v2796 = vadd.f32 0.0, %v2795
    %2797 = vdwg.mxu0
    %2798 = vmatprep.subr.mxu0 %v387
    %2799 = vmatpush1.msra.mxu0 %v386
    %2800 = vmatprep.subr.mxu0 %v395
    %2801 = vmatpush1.msra.mxu0 %v394
    %2802 = vmatprep.subr.mxu0 %v403
    %2803 = vmatpush1.msra.mxu0 %v402
    %2804 = vmatprep.subr.mxu0 %v411
    %2805 = vmatpush1.msra.mxu0 %v410
    %2806 = vmatprep.subr.mxu0 %v419
    %2807 = vmatpush1.msra.mxu0 %v418
    %2808 = vmatprep.subr.mxu0 %v427
    %2809 = vmatpush1.msra.mxu0 %v426
    %2810 = vmatprep.subr.mxu0 %v435
    %2811 = vmatpush1.msra.mxu0 %v434
    %2812 = vmatprep.subr.mxu0 %v443
    %2813 = vmatpush1.msra.mxu0 %v442
    %2814 = vmatprep.subr.mxu0 %v451
    %2815 = vmatpush1.msra.mxu0 %v450
    %2816 = vmatprep.subr.mxu0 %v459
    %2817 = vmatpush1.msra.mxu0 %v458
    %2818 = vmatprep.subr.mxu0 %v467
    %2819 = vmatpush1.msra.mxu0 %v466
    %2820 = vmatprep.subr.mxu0 %v475
    %2821 = vmatpush1.msra.mxu0 %v474
    %2822 = vmatprep.subr.mxu0 %v483
    %2823 = vmatpush1.msra.mxu0 %v482
    %2824 = vmatprep.subr.mxu0 %v491
    %2825 = vmatpush1.msra.mxu0 %v490
    %2826 = vmatprep.subr.mxu0 %v499
    %2827 = vmatpush1.msra.mxu0 %v498
    %2828 = vmatprep.subr.mxu0 %v507
    %2829 = vmatpush1.msra.mxu0 %v506
    %2830 = vmatprep.subr.mxu0 %v515
    %2831 = vmatpush1.msra.mxu0 %v514
    %2832 = vmatprep.subr.mxu0 %v523
    %2833 = vmatpush1.msra.mxu0 %v522
    %2834 = vmatprep.subr.mxu0 %v531
    %2835 = vmatpush1.msra.mxu0 %v530
    %2836 = vmatprep.subr.mxu0 %v539
    %2837 = vmatpush1.msra.mxu0 %v538
    %2838 = vmatprep.subr.mxu0 %v547
    %2839 = vmatpush1.msra.mxu0 %v546
    %2840 = vmatprep.subr.mxu0 %v555
    %2841 = vmatpush1.msra.mxu0 %v554
    %2842 = vmatprep.subr.mxu0 %v563
    %2843 = vmatpush1.msra.mxu0 %v562
    %2844 = vmatprep.subr.mxu0 %v571
    %2845 = vmatpush1.msra.mxu0 %v570
    %2846 = vmatprep.subr.mxu0 %v579
    %2847 = vmatpush1.msra.mxu0 %v578
    %2848 = vmatprep.subr.mxu0 %v587
    %2849 = vmatpush1.msra.mxu0 %v586
    %2850 = vmatprep.subr.mxu0 %v595
    %2851 = vmatpush1.msra.mxu0 %v594
    %2852 = vmatprep.subr.mxu0 %v603
    %2853 = vmatpush1.msra.mxu0 %v602
    %2854 = vmatprep.subr.mxu0 %v611
    %2855 = vmatpush1.msra.mxu0 %v610
    %2856 = vmatprep.subr.mxu0 %v619
    %2857 = vmatpush1.msra.mxu0 %v618
    %2858 = vmatprep.subr.mxu0 %v627
    %2859 = vmatpush1.msra.mxu0 %v626
    %2860 = vmatprep.subr.mxu0 %v635
    %2861 = vmatpush1.msra.mxu0 %v634
    %2862 = vmatprep.mubr.f32.mxu0 %v2726
    %2863 = vmatmul.mubr.f32.gmra.mrb[0].mxu0 %v2698
    %v2864 = vpop.f32.mrb[0].mxu0
    %v2865 = vadd.f32 0.0, %v2864
    %v2866 = vpop.f32.mrb[0].mxu0
    %v2867 = vadd.f32 0.0, %v2866
    %2868 = vdwg.mxu0
    %2869 = vmatprep.subr.mxu0 %v389
    %2870 = vmatpush1.msra.mxu0 %v388
    %2871 = vmatprep.subr.mxu0 %v397
    %2872 = vmatpush1.msra.mxu0 %v396
    %2873 = vmatprep.subr.mxu0 %v405
    %2874 = vmatpush1.msra.mxu0 %v404
    %2875 = vmatprep.subr.mxu0 %v413
    %2876 = vmatpush1.msra.mxu0 %v412
    %2877 = vmatprep.subr.mxu0 %v421
    %2878 = vmatpush1.msra.mxu0 %v420
    %2879 = vmatprep.subr.mxu0 %v429
    %2880 = vmatpush1.msra.mxu0 %v428
    %2881 = vmatprep.subr.mxu0 %v437
    %2882 = vmatpush1.msra.mxu0 %v436
    %2883 = vmatprep.subr.mxu0 %v445
    %2884 = vmatpush1.msra.mxu0 %v444
    %2885 = vmatprep.subr.mxu0 %v453
    %2886 = vmatpush1.msra.mxu0 %v452
    %2887 = vmatprep.subr.mxu0 %v461
    %2888 = vmatpush1.msra.mxu0 %v460
    %2889 = vmatprep.subr.mxu0 %v469
    %2890 = vmatpush1.msra.mxu0 %v468
    %2891 = vmatprep.subr.mxu0 %v477
    %2892 = vmatpush1.msra.mxu0 %v476
    %2893 = vmatprep.subr.mxu0 %v485
    %2894 = vmatpush1.msra.mxu0 %v484
    %2895 = vmatprep.subr.mxu0 %v493
    %2896 = vmatpush1.msra.mxu0 %v492
    %2897 = vmatprep.subr.mxu0 %v501
    %2898 = vmatpush1.msra.mxu0 %v500
    %2899 = vmatprep.subr.mxu0 %v509
    %2900 = vmatpush1.msra.mxu0 %v508
    %2901 = vmatprep.subr.mxu0 %v517
    %2902 = vmatpush1.msra.mxu0 %v516
    %2903 = vmatprep.subr.mxu0 %v525
    %2904 = vmatpush1.msra.mxu0 %v524
    %2905 = vmatprep.subr.mxu0 %v533
    %2906 = vmatpush1.msra.mxu0 %v532
    %2907 = vmatprep.subr.mxu0 %v541
    %2908 = vmatpush1.msra.mxu0 %v540
    %2909 = vmatprep.subr.mxu0 %v549
    %2910 = vmatpush1.msra.mxu0 %v548
    %2911 = vmatprep.subr.mxu0 %v557
    %2912 = vmatpush1.msra.mxu0 %v556
    %2913 = vmatprep.subr.mxu0 %v565
    %2914 = vmatpush1.msra.mxu0 %v564
    %2915 = vmatprep.subr.mxu0 %v573
    %2916 = vmatpush1.msra.mxu0 %v572
    %2917 = vmatprep.subr.mxu0 %v581
    %2918 = vmatpush1.msra.mxu0 %v580
    %2919 = vmatprep.subr.mxu0 %v589
    %2920 = vmatpush1.msra.mxu0 %v588
    %2921 = vmatprep.subr.mxu0 %v597
    %2922 = vmatpush1.msra.mxu0 %v596
    %2923 = vmatprep.subr.mxu0 %v605
    %2924 = vmatpush1.msra.mxu0 %v604
    %2925 = vmatprep.subr.mxu0 %v613
    %2926 = vmatpush1.msra.mxu0 %v612
    %2927 = vmatprep.subr.mxu0 %v621
    %2928 = vmatpush1.msra.mxu0 %v620
    %2929 = vmatprep.subr.mxu0 %v629
    %2930 = vmatpush1.msra.mxu0 %v628
    %2931 = vmatprep.subr.mxu0 %v637
    %2932 = vmatpush1.msra.mxu0 %v636
    %2933 = vmatprep.mubr.f32.mxu0 %v2726
    %2934 = vmatmul.mubr.f32.gmra.mrb[0].mxu0 %v2698
    %v2935 = vpop.f32.mrb[0].mxu0
    %v2936 = vadd.f32 0.0, %v2935
    %v2937 = vpop.f32.mrb[0].mxu0
    %v2938 = vadd.f32 0.0, %v2937
    %2939 = vdwg.mxu0
    %2940 = vmatprep.subr.mxu0 %v391
    %2941 = vmatpush1.msra.mxu0 %v390
    %2942 = vmatprep.subr.mxu0 %v399
    %2943 = vmatpush1.msra.mxu0 %v398
    %2944 = vmatprep.subr.mxu0 %v407
    %2945 = vmatpush1.msra.mxu0 %v406
    %2946 = vmatprep.subr.mxu0 %v415
    %2947 = vmatpush1.msra.mxu0 %v414
    %2948 = vmatprep.subr.mxu0 %v423
    %2949 = vmatpush1.msra.mxu0 %v422
    %2950 = vmatprep.subr.mxu0 %v431
    %2951 = vmatpush1.msra.mxu0 %v430
    %2952 = vmatprep.subr.mxu0 %v439
    %2953 = vmatpush1.msra.mxu0 %v438
    %2954 = vmatprep.subr.mxu0 %v447
    %2955 = vmatpush1.msra.mxu0 %v446
    %2956 = vmatprep.subr.mxu0 %v455
    %2957 = vmatpush1.msra.mxu0 %v454
    %2958 = vmatprep.subr.mxu0 %v463
    %2959 = vmatpush1.msra.mxu0 %v462
    %2960 = vmatprep.subr.mxu0 %v471
    %2961 = vmatpush1.msra.mxu0 %v470
    %2962 = vmatprep.subr.mxu0 %v479
    %2963 = vmatpush1.msra.mxu0 %v478
    %2964 = vmatprep.subr.mxu0 %v487
    %2965 = vmatpush1.msra.mxu0 %v486
    %2966 = vmatprep.subr.mxu0 %v495
    %2967 = vmatpush1.msra.mxu0 %v494
    %2968 = vmatprep.subr.mxu0 %v503
    %2969 = vmatpush1.msra.mxu0 %v502
    %2970 = vmatprep.subr.mxu0 %v511
    %2971 = vmatpush1.msra.mxu0 %v510
    %2972 = vmatprep.subr.mxu0 %v519
    %2973 = vmatpush1.msra.mxu0 %v518
    %2974 = vmatprep.subr.mxu0 %v527
    %2975 = vmatpush1.msra.mxu0 %v526
    %2976 = vmatprep.subr.mxu0 %v535
    %2977 = vmatpush1.msra.mxu0 %v534
    %2978 = vmatprep.subr.mxu0 %v543
    %2979 = vmatpush1.msra.mxu0 %v542
    %2980 = vmatprep.subr.mxu0 %v551
    %2981 = vmatpush1.msra.mxu0 %v550
    %2982 = vmatprep.subr.mxu0 %v559
    %2983 = vmatpush1.msra.mxu0 %v558
    %2984 = vmatprep.subr.mxu0 %v567
    %2985 = vmatpush1.msra.mxu0 %v566
    %2986 = vmatprep.subr.mxu0 %v575
    %2987 = vmatpush1.msra.mxu0 %v574
    %2988 = vmatprep.subr.mxu0 %v583
    %2989 = vmatpush1.msra.mxu0 %v582
    %2990 = vmatprep.subr.mxu0 %v591
    %2991 = vmatpush1.msra.mxu0 %v590
    %2992 = vmatprep.subr.mxu0 %v599
    %2993 = vmatpush1.msra.mxu0 %v598
    %2994 = vmatprep.subr.mxu0 %v607
    %2995 = vmatpush1.msra.mxu0 %v606
    %2996 = vmatprep.subr.mxu0 %v615
    %2997 = vmatpush1.msra.mxu0 %v614
    %2998 = vmatprep.subr.mxu0 %v623
    %2999 = vmatpush1.msra.mxu0 %v622
    %3000 = vmatprep.subr.mxu0 %v631
    %3001 = vmatpush1.msra.mxu0 %v630
    %3002 = vmatprep.subr.mxu0 %v639
    %3003 = vmatpush1.msra.mxu0 %v638
    %3004 = vmatprep.mubr.f32.mxu0 %v2726
    %3005 = vmatmul.mubr.f32.gmra.mrb[0].mxu0 %v2698
    %v3006 = vpop.f32.mrb[0].mxu0
    %v3007 = vadd.f32 0.0, %v3006
    %v3008 = vpop.f32.mrb[0].mxu0
    %v3009 = vadd.f32 0.0, %v3008
    %3010 = vdwg.mxu0
    %v3011 = vadd.f32 %v2794, %v267
    %v3012 = vadd.f32 %v2796, %v269
    %v3013 = vadd.f32 %v2865, %v380
    %v3014 = vadd.f32 %v2867, %v382
    %v3015 = vxor.u32 %v3011, 2147483648
    %v3016 = vxor.u32 %v3012, 2147483648
    %v3017 = vxor.u32 %v3013, 2147483648
    %v3018 = vmul.f32 %v3015, 1.442695
    %v3019 = vpow.pop %v3018
    %v3020 = vmul.f32 %v3016, 1.442695
    %v3021 = vpow.pop %v3020
    %v3022 = vmul.f32 %v3017, 1.442695
    %v3023 = vpow.pop %v3022
    %v3024 = vadd.f32 %v3019, 1.0
    %v3025 = vadd.f32 %v3021, 1.0
    %v3026 = vadd.f32 %v3023, 1.0
    %v3027 = vrcp.pop %v3024
    %v3028 = vmul.f32 1.0, %v3027
    %v3029 = vrcp.pop %v3025
    %v3030 = vmul.f32 1.0, %v3029
    %v3031 = vrcp.pop %v3026
    %v3032 = vmul.f32 1.0, %v3031
    %v3033 = vtanh.pop %v3014
    %v3034 = vmul.f32 %v3030, %v2696
    %v3035 = vmul.f32 %v3028, %v3033
    %v3036 = vadd.f32 %v3034, %v3035
    %v3037 = vtanh.pop %v3036
    %v3038 = vmul.f32 %v3032, %v3037
    %v3039 = vadd.f32 %v2936, %v982
    %v3040 = vadd.f32 %v2938, %v986
    %v3041 = vadd.f32 %v3007, %v990
    %v3042 = vadd.f32 %v3009, %v994
    %v3043 = vxor.u32 %v3039, 2147483648
    %v3044 = vxor.u32 %v3040, 2147483648
    %v3045 = vxor.u32 %v3041, 2147483648
    %v3046 = vmul.f32 %v3043, 1.442695
    %v3047 = vpow.pop %v3046
    %v3048 = vmul.f32 %v3044, 1.442695
    %v3049 = vpow.pop %v3048
    %v3050 = vmul.f32 %v3045, 1.442695
    %v3051 = vpow.pop %v3050
    %v3052 = vadd.f32 %v3047, 1.0
    %v3053 = vadd.f32 %v3049, 1.0
    %v3054 = vadd.f32 %v3051, 1.0
    %v3055 = vrcp.pop %v3052
    %v3056 = vmul.f32 1.0, %v3055
    %v3057 = vrcp.pop %v3053
    %v3058 = vmul.f32 1.0, %v3057
    %v3059 = vrcp.pop %v3054
    %v3060 = vmul.f32 1.0, %v3059
    %v3061 = vtanh.pop %v3042
    %v3062 = vmul.f32 %v3058, %v2724
    %v3063 = vmul.f32 %v3056, %v3061
    %v3064 = vadd.f32 %v3062, %v3063
    %v3065 = vtanh.pop %v3064
    %v3066 = vmul.f32 %v3060, %v3065
    %3067 = vmatprep.subr.mxu0 %v389
    %3068 = vmatpush1.msra.mxu0 %v388
    %3069 = vmatprep.subr.mxu0 %v397
    %3070 = vmatpush1.msra.mxu0 %v396
    %3071 = vmatprep.subr.mxu0 %v405
    %3072 = vmatpush1.msra.mxu0 %v404
    %3073 = vmatprep.subr.mxu0 %v413
    %3074 = vmatpush1.msra.mxu0 %v412
    %3075 = vmatprep.subr.mxu0 %v421
    %3076 = vmatpush1.msra.mxu0 %v420
    %3077 = vmatprep.subr.mxu0 %v429
    %3078 = vmatpush1.msra.mxu0 %v428
    %3079 = vmatprep.subr.mxu0 %v437
    %3080 = vmatpush1.msra.mxu0 %v436
    %3081 = vmatprep.subr.mxu0 %v445
    %3082 = vmatpush1.msra.mxu0 %v444
    %3083 = vmatprep.subr.mxu0 %v453
    %3084 = vmatpush1.msra.mxu0 %v452
    %3085 = vmatprep.subr.mxu0 %v461
    %3086 = vmatpush1.msra.mxu0 %v460
    %3087 = vmatprep.subr.mxu0 %v469
    %3088 = vmatpush1.msra.mxu0 %v468
    %3089 = vmatprep.subr.mxu0 %v477
    %3090 = vmatpush1.msra.mxu0 %v476
    %3091 = vmatprep.subr.mxu0 %v485
    %3092 = vmatpush1.msra.mxu0 %v484
    %3093 = vmatprep.subr.mxu0 %v493
    %3094 = vmatpush1.msra.mxu0 %v492
    %3095 = vmatprep.subr.mxu0 %v501
    %3096 = vmatpush1.msra.mxu0 %v500
    %3097 = vmatprep.subr.mxu0 %v509
    %3098 = vmatpush1.msra.mxu0 %v508
    %3099 = vmatprep.subr.mxu0 %v517
    %3100 = vmatpush1.msra.mxu0 %v516
    %3101 = vmatprep.subr.mxu0 %v525
    %3102 = vmatpush1.msra.mxu0 %v524
    %3103 = vmatprep.subr.mxu0 %v533
    %3104 = vmatpush1.msra.mxu0 %v532
    %3105 = vmatprep.subr.mxu0 %v541
    %3106 = vmatpush1.msra.mxu0 %v540
    %3107 = vmatprep.subr.mxu0 %v549
    %3108 = vmatpush1.msra.mxu0 %v548
    %3109 = vmatprep.subr.mxu0 %v557
    %3110 = vmatpush1.msra.mxu0 %v556
    %3111 = vmatprep.subr.mxu0 %v565
    %3112 = vmatpush1.msra.mxu0 %v564
    %3113 = vmatprep.subr.mxu0 %v573
    %3114 = vmatpush1.msra.mxu0 %v572
    %3115 = vmatprep.subr.mxu0 %v581
    %3116 = vmatpush1.msra.mxu0 %v580
    %3117 = vmatprep.subr.mxu0 %v589
    %3118 = vmatpush1.msra.mxu0 %v588
    %3119 = vmatprep.subr.mxu0 %v597
    %3120 = vmatpush1.msra.mxu0 %v596
    %3121 = vmatprep.subr.mxu0 %v605
    %3122 = vmatpush1.msra.mxu0 %v604
    %3123 = vmatprep.subr.mxu0 %v613
    %3124 = vmatpush1.msra.mxu0 %v612
    %3125 = vmatprep.subr.mxu0 %v621
    %3126 = vmatpush1.msra.mxu0 %v620
    %3127 = vmatprep.subr.mxu0 %v629
    %3128 = vmatpush1.msra.mxu0 %v628
    %3129 = vmatprep.subr.mxu0 %v637
    %3130 = vmatpush1.msra.mxu0 %v636
    %3131 = vmatprep.mubr.f32.mxu0 %v3066
    %3132 = vmatmul.mubr.f32.gmra.mrb[0].mxu0 %v3038
    %v3133 = vpop.f32.mrb[0].mxu0
    %v3134 = vadd.f32 0.0, %v3133
    %v3135 = vpop.f32.mrb[0].mxu0
    %v3136 = vadd.f32 0.0, %v3135
    %3137 = vdwg.mxu0
    %3138 = vmatprep.subr.mxu0 %v391
    %3139 = vmatpush1.msra.mxu0 %v390
    %3140 = vmatprep.subr.mxu0 %v399
    %3141 = vmatpush1.msra.mxu0 %v398
    %3142 = vmatprep.subr.mxu0 %v407
    %3143 = vmatpush1.msra.mxu0 %v406
    %3144 = vmatprep.subr.mxu0 %v415
    %3145 = vmatpush1.msra.mxu0 %v414
    %3146 = vmatprep.subr.mxu0 %v423
    %3147 = vmatpush1.msra.mxu0 %v422
    %3148 = vmatprep.subr.mxu0 %v431
    %3149 = vmatpush1.msra.mxu0 %v430
    %3150 = vmatprep.subr.mxu0 %v439
    %3151 = vmatpush1.msra.mxu0 %v438
    %3152 = vmatprep.subr.mxu0 %v447
    %3153 = vmatpush1.msra.mxu0 %v446
    %3154 = vmatprep.subr.mxu0 %v455
    %3155 = vmatpush1.msra.mxu0 %v454
    %3156 = vmatprep.subr.mxu0 %v463
    %3157 = vmatpush1.msra.mxu0 %v462
    %3158 = vmatprep.subr.mxu0 %v471
    %3159 = vmatpush1.msra.mxu0 %v470
    %3160 = vmatprep.subr.mxu0 %v479
    %3161 = vmatpush1.msra.mxu0 %v478
    %3162 = vmatprep.subr.mxu0 %v487
    %3163 = vmatpush1.msra.mxu0 %v486
    %3164 = vmatprep.subr.mxu0 %v495
    %3165 = vmatpush1.msra.mxu0 %v494
    %3166 = vmatprep.subr.mxu0 %v503
    %3167 = vmatpush1.msra.mxu0 %v502
    %3168 = vmatprep.subr.mxu0 %v511
    %3169 = vmatpush1.msra.mxu0 %v510
    %3170 = vmatprep.subr.mxu0 %v519
    %3171 = vmatpush1.msra.mxu0 %v518
    %3172 = vmatprep.subr.mxu0 %v527
    %3173 = vmatpush1.msra.mxu0 %v526
    %3174 = vmatprep.subr.mxu0 %v535
    %3175 = vmatpush1.msra.mxu0 %v534
    %3176 = vmatprep.subr.mxu0 %v543
    %3177 = vmatpush1.msra.mxu0 %v542
    %3178 = vmatprep.subr.mxu0 %v551
    %3179 = vmatpush1.msra.mxu0 %v550
    %3180 = vmatprep.subr.mxu0 %v559
    %3181 = vmatpush1.msra.mxu0 %v558
    %3182 = vmatprep.subr.mxu0 %v567
    %3183 = vmatpush1.msra.mxu0 %v566
    %3184 = vmatprep.subr.mxu0 %v575
    %3185 = vmatpush1.msra.mxu0 %v574
    %3186 = vmatprep.subr.mxu0 %v583
    %3187 = vmatpush1.msra.mxu0 %v582
    %3188 = vmatprep.subr.mxu0 %v591
    %3189 = vmatpush1.msra.mxu0 %v590
    %3190 = vmatprep.subr.mxu0 %v599
    %3191 = vmatpush1.msra.mxu0 %v598
    %3192 = vmatprep.subr.mxu0 %v607
    %3193 = vmatpush1.msra.mxu0 %v606
    %3194 = vmatprep.subr.mxu0 %v615
    %3195 = vmatpush1.msra.mxu0 %v614
    %3196 = vmatprep.subr.mxu0 %v623
    %3197 = vmatpush1.msra.mxu0 %v622
    %3198 = vmatprep.subr.mxu0 %v631
    %3199 = vmatpush1.msra.mxu0 %v630
    %3200 = vmatprep.subr.mxu0 %v639
    %3201 = vmatpush1.msra.mxu0 %v638
    %3202 = vmatprep.mubr.f32.mxu0 %v3066
    %3203 = vmatmul.mubr.f32.gmra.mrb[0].mxu0 %v3038
    %v3204 = vpop.f32.mrb[0].mxu0
    %v3205 = vadd.f32 0.0, %v3204
    %v3206 = vpop.f32.mrb[0].mxu0
    %v3207 = vadd.f32 0.0, %v3206
    %3208 = vdwg.mxu0
    %v3209 = vadd.f32 %v3134, %v982
    %v3210 = vadd.f32 %v3136, %v986
    %v3211 = vadd.f32 %v3205, %v990
    %v3212 = vadd.f32 %v3207, %v994
    %v3213 = vxor.u32 %v3209, 2147483648
    %v3214 = vxor.u32 %v3210, 2147483648
    %v3215 = vxor.u32 %v3211, 2147483648
    %v3216 = vmul.f32 %v3213, 1.442695
    %v3217 = vpow.pop %v3216
    %v3218 = vmul.f32 %v3214, 1.442695
    %v3219 = vpow.pop %v3218
    %v3220 = vmul.f32 %v3215, 1.442695
    %v3221 = vpow.pop %v3220
    %v3222 = vadd.f32 %v3217, 1.0
    %v3223 = vadd.f32 %v3219, 1.0
    %v3224 = vadd.f32 %v3221, 1.0
    %v3225 = vrcp.pop %v3222
    %v3226 = vmul.f32 1.0, %v3225
    %v3227 = vrcp.pop %v3223
    %v3228 = vmul.f32 1.0, %v3227
    %v3229 = vrcp.pop %v3224
    %v3230 = vmul.f32 1.0, %v3229
    %v3231 = vtanh.pop %v3212
    %v3232 = vmul.f32 %v3228, %v3064
    %v3233 = vmul.f32 %v3226, %v3231
    %v3234 = vadd.f32 %v3232, %v3233
    %v3235 = vtanh.pop %v3234
    %v3236 = vmul.f32 %v3230, %v3235
    %v3237 = vld [vmem:[#allocation6] sm:$0xff]
    %v3238 = vld [vmem:[#allocation6 + $0x8] sm:$0xff]
    %v3239 = vld [vmem:[#allocation6 + $0x10] sm:$0xff]
    %v3240 = vld [vmem:[#allocation6 + $0x18] sm:$0xff]
    %v3241 = vld [vmem:[#allocation6 + $0x20] sm:$0xff]
    %v3242 = vld [vmem:[#allocation6 + $0x28] sm:$0xff]
    %v3243 = vld [vmem:[#allocation6 + $0x30] sm:$0xff]
    %v3244 = vld [vmem:[#allocation6 + $0x38] sm:$0xff]
    %v3245 = vld [vmem:[#allocation6 + $0x40] sm:$0xff]
    %v3246 = vld [vmem:[#allocation6 + $0x48] sm:$0xff]
    %v3247 = vld [vmem:[#allocation6 + $0x50] sm:$0xff]
    %v3248 = vld [vmem:[#allocation6 + $0x58] sm:$0xff]
    %v3249 = vld [vmem:[#allocation6 + $0x60] sm:$0xff]
    %v3250 = vld [vmem:[#allocation6 + $0x68] sm:$0xff]
    %v3251 = vld [vmem:[#allocation6 + $0x70] sm:$0xff]
    %v3252 = vld [vmem:[#allocation6 + $0x78] sm:$0xff]
    %v3253 = vld [vmem:[%s5] sm:$0x1]
    %v3255 = vlaneseq
    %v3256 = vshrl.u32 %v3255, 7
    %v3257 = vsub.s32 0, %v3256
    %v3258 = vrot.slane %v3253, %v3257
    %3260 = vmatprep.subr.mxu0 0.0
    %3261 = vmatpush1.msra.mxu0 %v3237
    %3262 = vmatprep.subr.mxu0 0.0
    %3263 = vmatpush1.msra.mxu0 %v3238
    %3264 = vmatprep.subr.mxu0 0.0
    %3265 = vmatpush1.msra.mxu0 %v3239
    %3266 = vmatprep.subr.mxu0 0.0
    %3267 = vmatpush1.msra.mxu0 %v3240
    %3268 = vmatprep.subr.mxu0 0.0
    %3269 = vmatpush1.msra.mxu0 %v3241
    %3270 = vmatprep.subr.mxu0 0.0
    %3271 = vmatpush1.msra.mxu0 %v3242
    %3272 = vmatprep.subr.mxu0 0.0
    %3273 = vmatpush1.msra.mxu0 %v3243
    %3274 = vmatprep.subr.mxu0 0.0
    %3275 = vmatpush1.msra.mxu0 %v3244
    %3276 = vmatprep.subr.mxu0 0.0
    %3277 = vmatpush1.msra.mxu0 %v3245
    %3278 = vmatprep.subr.mxu0 0.0
    %3279 = vmatpush1.msra.mxu0 %v3246
    %3280 = vmatprep.subr.mxu0 0.0
    %3281 = vmatpush1.msra.mxu0 %v3247
    %3282 = vmatprep.subr.mxu0 0.0
    %3283 = vmatpush1.msra.mxu0 %v3248
    %3284 = vmatprep.subr.mxu0 0.0
    %3285 = vmatpush1.msra.mxu0 %v3249
    %3286 = vmatprep.subr.mxu0 0.0
    %3287 = vmatpush1.msra.mxu0 %v3250
    %3288 = vmatprep.subr.mxu0 0.0
    %3289 = vmatpush1.msra.mxu0 %v3251
    %3290 = vmatprep.subr.mxu0 0.0
    %3291 = vmatpush1.msra.mxu0 %v3252
    %3292 = vmatprep.subr.mxu0 0.0
    %3293 = vmatpush1.msra.mxu0 0.0
    %3294 = vmatprep.subr.mxu0 0.0
    %3295 = vmatpush1.msra.mxu0 0.0
    %3296 = vmatprep.subr.mxu0 0.0
    %3297 = vmatpush1.msra.mxu0 0.0
    %3298 = vmatprep.subr.mxu0 0.0
    %3299 = vmatpush1.msra.mxu0 0.0
    %3300 = vmatprep.subr.mxu0 0.0
    %3301 = vmatpush1.msra.mxu0 0.0
    %3302 = vmatprep.subr.mxu0 0.0
    %3303 = vmatpush1.msra.mxu0 0.0
    %3304 = vmatprep.subr.mxu0 0.0
    %3305 = vmatpush1.msra.mxu0 0.0
    %3306 = vmatprep.subr.mxu0 0.0
    %3307 = vmatpush1.msra.mxu0 0.0
    %3308 = vmatprep.subr.mxu0 0.0
    %3309 = vmatpush1.msra.mxu0 0.0
    %3310 = vmatprep.subr.mxu0 0.0
    %3311 = vmatpush1.msra.mxu0 0.0
    %3312 = vmatprep.subr.mxu0 0.0
    %3313 = vmatpush1.msra.mxu0 0.0
    %3314 = vmatprep.subr.mxu0 0.0
    %3315 = vmatpush1.msra.mxu0 0.0
    %3316 = vmatprep.subr.mxu0 0.0
    %3317 = vmatpush1.msra.mxu0 0.0
    %3318 = vmatprep.subr.mxu0 0.0
    %3319 = vmatpush1.msra.mxu0 0.0
    %3320 = vmatprep.subr.mxu0 0.0
    %3321 = vmatpush1.msra.mxu0 0.0
    %3322 = vmatprep.subr.mxu0 0.0
    %3323 = vmatpush1.msra.mxu0 0.0
    %3324 = vmatprep.mubr.f32.mxu0 0.0
    %3325 = vmatmul.mubr.f32.gmra.mrb[0].mxu0 %v3236
    %v3326 = vpop.f32.mrb[0].mxu0
    %v3327 = vadd.f32 %v3258, %v3326
    %v3328 = vpop.f32.mrb[0].mxu0
    %3329 = vdwg.mxu0
    %3330 = vst [vmem:[%s6] sm:$0xff] %v3327
    // Predicated region
    $region38: #{recurrent_actor_prob_forward.1} parent=1 // pred_check
      _
    $region39: #{recurrent_actor_prob_forward.1} parent=1 // pred_check_branch
      %3332 = sbr.rel (0) target = $region41
    $region40: #{recurrent_actor_prob_forward.1} parent=1 // pred_region
      _
    $region41: #{recurrent_actor_prob_forward.1} parent=1 // pred_fallthru
      _
    // Predicated region
    $region42: #{recurrent_actor_prob_forward.1} parent=1 // pred_check
      _
    $region43: #{recurrent_actor_prob_forward.1} parent=1 // pred_check_branch
      %3334 = sbr.rel (0) target = $region45
    $region44: #{recurrent_actor_prob_forward.1} parent=1 // pred_region
      _
    $region45: #{recurrent_actor_prob_forward.1} parent=1 // pred_fallthru
      _
    %3335 = vsyncpa [#allocation3], 1
    %3336 = vsyncpa [#allocation5], 1

</llo_original>
